<compile_context>
chip_gen: v6e
topology: v6e:2x2x1
jax: 0.10.0
libtpu: 0.0.40
codegen_flags: <defaults>
</compile_context>

<pallas_src>
import functools
import numpy as np
import jax
import jax.numpy as jnp
from jax.experimental import pallas as pl
from jax.experimental.pallas import tpu as pltpu


_PARAM_ORDER = ["wq", "bq", "wk", "bk", "wv", "bv", "wfc", "bfc",
                "g1", "be1", "w1", "bw1", "w2", "bw2", "g2", "be2"]
_MATMUL_PARAMS = {"wq", "wk", "wv", "wfc", "w1", "w2"}


# ----------------------------------------------------------------------------
# Fused Pallas kernel: all encoder layers + final mean pooling
# ----------------------------------------------------------------------------
def fused_encoder_kernel(x_ref,
                         wq_ref, bq_ref, wk_ref, bk_ref, wv_ref, bv_ref,
                         wfc_ref, bfc_ref, g1_ref, be1_ref,
                         w1_ref, bw1_ref, w2_ref, bw2_ref, g2_ref, be2_ref,
                         out_ref, act_ref,
                         *, n_head, n_layers, compute_dtype, approx_recip, eps=1e-5):
    l = pl.program_id(1)

    # Load the input tile into the persistent activation scratch on the first layer.
    @pl.when(l == 0)
    def _():
        act_ref[...] = x_ref[...].astype(jnp.float32)

    x = act_ref[...]                               # (Bt, S, D) fp32
    Bt, S, D = x.shape
    dk = D // n_head
    cd = compute_dtype

    xc = x.reshape(Bt * S, D).astype(cd)

    # --- Multi-head self attention ------------------------------------------------
    # QKV projections: MXU matmuls in compute_dtype with f32 accumulation.
    # 1/temperature was folded into wq/bq by the wrapper; q/k/v are cast to the compute
    # dtype once here so only the half-width copies stay live through the head loop.
    q = (jnp.dot(xc, wq_ref[0], preferred_element_type=jnp.float32)
         + bq_ref[0]).astype(cd).reshape(Bt, S, D)
    k = (jnp.dot(xc, wk_ref[0], preferred_element_type=jnp.float32)
         + bk_ref[0]).astype(cd).reshape(Bt, S, D)
    v = (jnp.dot(xc, wv_ref[0], preferred_element_type=jnp.float32)
         + bv_ref[0]).astype(cd).reshape(Bt, S, D)

    # Per-head attention.  Head contexts are gathered into one lane-concatenated
    # (Bt*S, D) buffer so the fc projection is a single full-contraction (K = D)
    # MXU matmul (instead of n_head K=dk matmuls + VPU accumulation passes).
    ctx_heads = []
    for h in range(n_head):                        # static unroll over heads
        sl = slice(h * dk, (h + 1) * dk)
        qh = q[:, :, sl]
        kh = k[:, :, sl]
        vh = v[:, :, sl]
        scores = jnp.einsum("bqd,bkd->bqk", qh, kh,
                            preferred_element_type=jnp.float32)      # (Bt, S, S) f32
        scores = scores - jnp.max(scores, axis=-1, keepdims=True)    # softmax(dim=2)
        p = jnp.exp(scores)
        p = p * pl.reciprocal(jnp.sum(p, axis=-1, keepdims=True), approx=approx_recip)
        ctx_heads.append(
            jnp.einsum("bqk,bkd->bqd", p.astype(cd), vh,
                       preferred_element_type=jnp.float32).astype(cd))   # (Bt, S, dk)
    ctx = jnp.concatenate(ctx_heads, axis=-1).reshape(Bt * S, D)          # (Bt*S, D) cd

    o = jnp.dot(ctx, wfc_ref[0],
                preferred_element_type=jnp.float32).reshape(Bt, S, D)
    o = o + bfc_ref[0] + x                         # fc bias + residual (f32)
    mu = jnp.mean(o, axis=-1, keepdims=True)
    var = jnp.mean((o - mu) ** 2, axis=-1, keepdims=True)
    o = (o - mu) * jax.lax.rsqrt(var + eps) * g1_ref[0] + be1_ref[0]

    # --- Position-wise FFN (Conv1d k=1 == per-token linear) ------------------------
    o2 = o.reshape(Bt * S, D)
    h1 = jnp.dot(o2.astype(cd), w1_ref[0], preferred_element_type=jnp.float32) + bw1_ref[0]
    h1 = jnp.maximum(h1, 0.0)
    f = jnp.dot(h1.astype(cd), w2_ref[0], preferred_element_type=jnp.float32) + bw2_ref[0]
    f = f.reshape(Bt, S, D) + o                    # residual (f32)
    mu2 = jnp.mean(f, axis=-1, keepdims=True)
    var2 = jnp.mean((f - mu2) ** 2, axis=-1, keepdims=True)
    y = (f - mu2) * jax.lax.rsqrt(var2 + eps) * g2_ref[0] + be2_ref[0]

    act_ref[...] = y                               # carry activations to the next layer

    # Fused epilogue: mean over the sequence dimension after the last layer.
    @pl.when(l == n_layers - 1)
    def _():
        out_ref[...] = jnp.mean(y, axis=1).astype(out_ref.dtype)


# ----------------------------------------------------------------------------
# Generation-aware tiling / VMEM configuration
# ----------------------------------------------------------------------------
def _tpu_config():
    """(vmem_limit_bytes, target_rows, num_tensorcores) for the local TPU generation."""
    vmem_budget, target_rows, num_tc = 48 * 1024 * 1024, 256, 1   # conservative default
    try:
        kind = jax.devices()[0].device_kind.lower()
    except Exception:
        kind = ""
    if "v5 lite" in kind or "v5e" in kind or "v5lite" in kind:
        vmem_budget, target_rows, num_tc = 96 * 1024 * 1024, 256, 1   # 128 MiB physical
    elif "v6" in kind or "trillium" in kind:
        vmem_budget, target_rows, num_tc = 96 * 1024 * 1024, 512, 1   # 128 MiB physical
    elif "v7" in kind:
        vmem_budget, target_rows, num_tc = 44 * 1024 * 1024, 256, 2   # 64 MiB / TC, 2 TCs
    return vmem_budget, target_rows, num_tc


def _vmem_estimate(bt, S, D, d_inner, per_layer_weight_bytes, cbytes):
    """Rough per-grid-step VMEM footprint in bytes for a batch tile of bt."""
    rows = bt * S
    b = 0
    b += 2 * bt * S * D * 4            # double-buffered input tile (f32)
    b += bt * S * D * 4                # persistent activation scratch (f32)
    b += 2 * bt * D * 4                # double-buffered output tile
    b += 3 * rows * D * cbytes         # q, k, v in compute dtype
    b += rows * D * cbytes             # concatenated head contexts
    b += 2 * bt * S * S * 4            # per-head scores / probs (f32)
    b += 3 * bt * S * D * 4            # residual / LayerNorm temporaries (f32)
    b += rows * d_inner * 4            # FFN hidden (f32)
    b += 2 * per_layer_weight_bytes    # double-buffered per-layer weights
    return b


def _pick_batch_tile(B, S, D, d_inner, per_layer_weight_bytes, cbytes,
                     target_rows, vmem_budget, num_tc):
    """Pick bt | B with bt % 8 == 0 (f32 sublane for the (bt, D) output block) or bt == B."""
    cands = sorted(set([d for d in range(8, B + 1, 8) if B % d == 0] + [B]))

    def fits(c):
        return _vmem_estimate(c, S, D, d_inner, per_layer_weight_bytes, cbytes) \
            <= 0.85 * vmem_budget

    fitting = [c for c in cands if fits(c)]
    if not fitting:
        fitting = [cands[0]]                       # smallest legal tile; must still run
    # Prefer the smallest tile that reaches the per-generation M target (amortizes the
    # weight push and the ~0.35 us per-grid-step overhead); otherwise the largest fitting
    # tile (fewer batch tiles -> less weight re-streaming from HBM).
    good = [c for c in fitting if c * S >= target_rows]
    bt = good[0] if good else fitting[-1]
    # v7x megacore: the "parallel" batch axis is the only cross-TC sharding; make sure at
    # least 2 batch tiles exist when a legal smaller tile allows it.
    if num_tc >= 2 and B // bt < 2:
        smaller = [c for c in fitting if B // c >= 2]
        if smaller:
            bt = smaller[-1]
    return bt


# ----------------------------------------------------------------------------
# Wrapper
# ----------------------------------------------------------------------------
def trans_encoder_forward(src_seq, layer_params, *, seq_len, d_model, n_head,
                          compute_dtype=jnp.bfloat16):
    x = src_seq.reshape(-1, seq_len, d_model)
    B, S, D = x.shape
    n_layers = len(layer_params)
    d_inner = layer_params[0]["w1"].shape[1]
    inv_temp = float(1.0 / np.power(d_model, 0.5))

    # Stack per-layer parameters along a leading layer axis; fold 1/temperature into the
    # Q projection once here; cast matmul weights to the MXU compute dtype (biases /
    # LayerNorm params stay f32).
    stacked = []
    for name in _PARAM_ORDER:
        w = jnp.stack([p[name] for p in layer_params], axis=0)
        if name in ("wq", "bq"):
            w = w * inv_temp
        if name in _MATMUL_PARAMS:
            w = w.astype(compute_dtype)
        stacked.append(w)

    per_layer_weight_bytes = sum(
        int(np.prod(w.shape[1:])) * w.dtype.itemsize for w in stacked)
    cbytes = jnp.dtype(compute_dtype).itemsize

    vmem_budget, target_rows, num_tc = _tpu_config()
    bt = _pick_batch_tile(B, S, D, d_inner, per_layer_weight_bytes, cbytes,
                          target_rows, vmem_budget, num_tc)
    assert B % bt == 0

    # Layer axis MUST be the innermost (fastest-varying) grid dim: the activation scratch
    # is reset at l == 0 and carried across layers for a fixed batch tile.
    grid = (B // bt, n_layers)

    in_specs = [pl.BlockSpec((bt, S, D), lambda b, l: (b, 0, 0))]
    for w in stacked:
        nd = w.ndim
        in_specs.append(
            pl.BlockSpec((1,) + w.shape[1:],
                         lambda b, l, _nd=nd: (l,) + (0,) * (_nd - 1)))

    kernel = functools.partial(
        fused_encoder_kernel, n_head=n_head, n_layers=n_layers,
        compute_dtype=compute_dtype,
        approx_recip=(compute_dtype != jnp.float32))

    return pl.pallas_call(
        kernel,
        out_shape=jax.ShapeDtypeStruct((B, D), jnp.float32),
        grid=grid,
        in_specs=in_specs,
        out_specs=pl.BlockSpec((bt, D), lambda b, l: (b, 0)),
        scratch_shapes=[pltpu.VMEM((bt, S, D), jnp.float32)],
        compiler_params=pltpu.CompilerParams(
            dimension_semantics=("parallel", "arbitrary"),
            vmem_limit_bytes=int(vmem_budget)),
    )(x, *stacked)


# ----------------------------------------------------------------------------
# Deterministic parameter construction (mirrors the PyTorch __init__ shapes)
# ----------------------------------------------------------------------------
def init_params(key, n_layers, d_model, d_inner, n_head):
    d_k = d_model // n_head
    layers = []
    for _ in range(n_layers):
        keys = jax.random.split(key, 10)
        key = keys[-1]
        std_qkv = np.sqrt(2.0 / (d_model + d_k))
        std_fc = np.sqrt(2.0 / (d_model + d_model))   # xavier normal
        p = {
            # stored already transposed: y = x @ W + b
            "wq": jax.random.normal(keys[0], (d_model, d_model), jnp.float32) * std_qkv,
            "bq": jax.random.normal(keys[1], (1, d_model), jnp.float32) * 0.02,
            "wk": jax.random.normal(keys[2], (d_model, d_model), jnp.float32) * std_qkv,
            "bk": jax.random.normal(keys[3], (1, d_model), jnp.float32) * 0.02,
            "wv": jax.random.normal(keys[4], (d_model, d_model), jnp.float32) * std_qkv,
            "bv": jax.random.normal(keys[5], (1, d_model), jnp.float32) * 0.02,
            "wfc": jax.random.normal(keys[6], (d_model, d_model), jnp.float32) * std_fc,
            "bfc": jnp.zeros((1, d_model), jnp.float32),
            "g1": jnp.ones((1, d_model), jnp.float32),
            "be1": jnp.zeros((1, d_model), jnp.float32),
            # Conv1d(d_model, d_inner, 1) weight (d_inner, d_model, 1) -> (d_model, d_inner)
            "w1": jax.random.normal(keys[7], (d_model, d_inner), jnp.float32) * np.sqrt(1.0 / d_model),
            "bw1": jnp.zeros((1, d_inner), jnp.float32),
            "w2": jax.random.normal(keys[8], (d_inner, d_model), jnp.float32) * np.sqrt(1.0 / d_inner),
            "bw2": jnp.zeros((1, d_model), jnp.float32),
            "g2": jnp.ones((1, d_model), jnp.float32),
            "be2": jnp.zeros((1, d_model), jnp.float32),
        }
        layers.append(p)
    return layers


# ----------------------------------------------------------------------------
# Pure-JAX reference (same math as the PyTorch module, eval mode, f32)
# ----------------------------------------------------------------------------
def ref_forward(src_seq, layer_params, *, seq_len, d_model, n_head, eps=1e-5):
    x = src_seq.reshape(-1, seq_len, d_model)
    temperature = np.power(d_model, 0.5)
    dk = d_model // n_head

    def ln(z, g, b):
        mu = jnp.mean(z, axis=-1, keepdims=True)
        var = jnp.mean((z - mu) ** 2, axis=-1, keepdims=True)
        return (z - mu) * jax.lax.rsqrt(var + eps) * g + b

    for p in layer_params:
        B, S, D = x.shape
        q = x @ p["wq"] + p["bq"]
        k = x @ p["wk"] + p["bk"]
        v = x @ p["wv"] + p["bv"]
        qh = q.reshape(B, S, n_head, dk).transpose(0, 2, 1, 3)
        kh = k.reshape(B, S, n_head, dk).transpose(0, 2, 1, 3)
        vh = v.reshape(B, S, n_head, dk).transpose(0, 2, 1, 3)
        s = jnp.einsum("bhqd,bhkd->bhqk", qh, kh) / temperature
        a = jax.nn.softmax(s, axis=-1)
        o = jnp.einsum("bhqk,bhkd->bhqd", a, vh).transpose(0, 2, 1, 3).reshape(B, S, D)
        o = o @ p["wfc"] + p["bfc"]
        o = ln(o + x, p["g1"], p["be1"])
        h = jnp.maximum(o @ p["w1"] + p["bw1"], 0.0)
        f = h @ p["w2"] + p["bw2"]
        x = ln(f + o, p["g2"], p["be2"])
    return x.mean(axis=1)


# ----------------------------------------------------------------------------
if __name__ == "__main__":
    # Small config consistent with TransEncoder(n_layers, n_head, seq_len, d_model, d_inner)
    n_layers, n_head, seq_len, d_model, d_inner = 2, 4, 8, 32, 64
    batch = 2

    key = jax.random.PRNGKey(0)
    k_in, k_par = jax.random.split(key)
    src_seq = jax.random.normal(k_in, (batch, seq_len, d_model), jnp.float32)
    params = init_params(k_par, n_layers, d_model, d_inner, n_head)

    ref = ref_forward(src_seq, params, seq_len=seq_len, d_model=d_model, n_head=n_head)

    # Tight correctness check: same fused kernel with f32 MXU operands (exact reciprocal).
    out_f32 = trans_encoder_forward(src_seq, params, seq_len=seq_len, d_model=d_model,
                                    n_head=n_head, compute_dtype=jnp.float32)
    out_f32 = jax.block_until_ready(out_f32)
    assert out_f32.shape == (batch, d_model)
    np.testing.assert_allclose(np.asarray(out_f32), np.asarray(ref), rtol=1e-4, atol=1e-4)

    # Performance configuration: bf16 MXU operands, f32 accumulation / softmax / LayerNorm.
    out_bf16 = trans_encoder_forward(src_seq, params, seq_len=seq_len, d_model=d_model,
                                     n_head=n_head, compute_dtype=jnp.bfloat16)
    out_bf16 = jax.block_until_ready(out_bf16)
    assert out_bf16.shape == (batch, d_model)
    np.testing.assert_allclose(np.asarray(out_bf16), np.asarray(ref), rtol=5e-2, atol=5e-2)

    print("KERNEL_OK")
</pallas_src>

<mosaic_0001>
module attributes {stable_mosaic.version = 11 : i64} {
  func.func @fused_encoder_kernel(%arg0: i32, %arg1: i32, %arg2: memref<2x8x32xf32, #tpu.memory_space<vmem>>, %arg3: memref<1x32x32xf32, #tpu.memory_space<vmem>>, %arg4: memref<1x1x32xf32, #tpu.memory_space<vmem>>, %arg5: memref<1x32x32xf32, #tpu.memory_space<vmem>>, %arg6: memref<1x1x32xf32, #tpu.memory_space<vmem>>, %arg7: memref<1x32x32xf32, #tpu.memory_space<vmem>>, %arg8: memref<1x1x32xf32, #tpu.memory_space<vmem>>, %arg9: memref<1x32x32xf32, #tpu.memory_space<vmem>>, %arg10: memref<1x1x32xf32, #tpu.memory_space<vmem>>, %arg11: memref<1x1x32xf32, #tpu.memory_space<vmem>>, %arg12: memref<1x1x32xf32, #tpu.memory_space<vmem>>, %arg13: memref<1x32x64xf32, #tpu.memory_space<vmem>>, %arg14: memref<1x1x64xf32, #tpu.memory_space<vmem>>, %arg15: memref<1x64x32xf32, #tpu.memory_space<vmem>>, %arg16: memref<1x1x32xf32, #tpu.memory_space<vmem>>, %arg17: memref<1x1x32xf32, #tpu.memory_space<vmem>>, %arg18: memref<1x1x32xf32, #tpu.memory_space<vmem>>, %arg19: memref<2x32xf32, #tpu.memory_space<vmem>>, %arg20: memref<2x8x32xf32, #tpu.memory_space<vmem>>) attributes {dimension_semantics = [#tpu.dimension_semantics<parallel>, #tpu.dimension_semantics<arbitrary>], iteration_bounds = array<i64: 1, 2>, scalar_prefetch = 0 : i64, scratch_operands = 1 : i64, tpu.core_type = #tpu.core_type<tc>, window_params = [{transform_indices = @transform_0, window_bounds = array<i64: 2, 8, 32>}, {transform_indices = @transform_1, window_bounds = array<i64: 1, 32, 32>}, {transform_indices = @transform_2, window_bounds = array<i64: 1, 1, 32>}, {transform_indices = @transform_3, window_bounds = array<i64: 1, 32, 32>}, {transform_indices = @transform_4, window_bounds = array<i64: 1, 1, 32>}, {transform_indices = @transform_5, window_bounds = array<i64: 1, 32, 32>}, {transform_indices = @transform_6, window_bounds = array<i64: 1, 1, 32>}, {transform_indices = @transform_7, window_bounds = array<i64: 1, 32, 32>}, {transform_indices = @transform_8, window_bounds = array<i64: 1, 1, 32>}, {transform_indices = @transform_9, window_bounds = array<i64: 1, 1, 32>}, {transform_indices = @transform_10, window_bounds = array<i64: 1, 1, 32>}, {transform_indices = @transform_11, window_bounds = array<i64: 1, 32, 64>}, {transform_indices = @transform_12, window_bounds = array<i64: 1, 1, 64>}, {transform_indices = @transform_13, window_bounds = array<i64: 1, 64, 32>}, {transform_indices = @transform_14, window_bounds = array<i64: 1, 1, 32>}, {transform_indices = @transform_15, window_bounds = array<i64: 1, 1, 32>}, {transform_indices = @transform_16, window_bounds = array<i64: 1, 1, 32>}, {transform_indices = @transform_17, window_bounds = array<i64: 2, 32>}]} {
    %c0_i32 = arith.constant 0 : i32
    %0 = arith.cmpi eq, %arg1, %c0_i32 : i32
    %1 = arith.extui %0 : i1 to i32
    %c0_i32_0 = arith.constant 0 : i32
    %2 = arith.cmpi ne, %1, %c0_i32_0 : i32
    scf.if %2 {
      %c0_87 = arith.constant 0 : index
      %c0_88 = arith.constant 0 : index
      %c0_89 = arith.constant 0 : index
      %180 = vector.load %arg2[%c0_87, %c0_88, %c0_89] : memref<2x8x32xf32, #tpu.memory_space<vmem>>, vector<2x8x32xf32>
      %c0_90 = arith.constant 0 : index
      %c0_91 = arith.constant 0 : index
      %c0_92 = arith.constant 0 : index
      %181 = vector.load %arg20[%c0_90, %c0_91, %c0_92] : memref<2x8x32xf32, #tpu.memory_space<vmem>>, vector<2x8x32xf32>
      tpu.vector_store %arg20[%c0_90, %c0_91, %c0_92], %180 {strides = array<i32>} : memref<2x8x32xf32, #tpu.memory_space<vmem>>, vector<2x8x32xf32>,
    } else {
    }
    %c0 = arith.constant 0 : index
    %c0_1 = arith.constant 0 : index
    %c0_2 = arith.constant 0 : index
    %3 = vector.load %arg20[%c0, %c0_1, %c0_2] : memref<2x8x32xf32, #tpu.memory_space<vmem>>, vector<2x8x32xf32>
    %4 = vector.shape_cast %3 : vector<2x8x32xf32> to vector<16x32xf32>
    %c0_3 = arith.constant 0 : index
    %c0_4 = arith.constant 0 : index
    %c0_5 = arith.constant 0 : index
    %5 = vector.load %arg3[%c0_3, %c0_4, %c0_5] : memref<1x32x32xf32, #tpu.memory_space<vmem>>, vector<1x32x32xf32>
    %6 = vector.shape_cast %5 : vector<1x32x32xf32> to vector<32x32xf32>
    %cst = arith.constant dense<0.000000e+00> : vector<16x32xf32>
    %7 = tpu.matmul %4, %6, %cst {dimension_numbers = #tpu.dot_dimension_numbers<[1], [0], [0], [1], [0, 0, 1, 1], [], []>} : vector<16x32xf32>, vector<32x32xf32>, vector<16x32xf32> -> vector<16x32xf32>
    %c0_6 = arith.constant 0 : index
    %c0_7 = arith.constant 0 : index
    %c0_8 = arith.constant 0 : index
    %8 = vector.load %arg4[%c0_6, %c0_7, %c0_8] : memref<1x1x32xf32, #tpu.memory_space<vmem>>, vector<1x1x32xf32>
    %9 = vector.shape_cast %8 : vector<1x1x32xf32> to vector<1x32xf32>
    %10 = vector.broadcast %9 : vector<1x32xf32> to vector<16x32xf32>
    %11 = arith.addf %7, %10 : vector<16x32xf32>
    %12 = vector.shape_cast %11 : vector<16x32xf32> to vector<2x8x32xf32>
    %c0_9 = arith.constant 0 : index
    %c0_10 = arith.constant 0 : index
    %c0_11 = arith.constant 0 : index
    %13 = vector.load %arg5[%c0_9, %c0_10, %c0_11] : memref<1x32x32xf32, #tpu.memory_space<vmem>>, vector<1x32x32xf32>
    %14 = vector.shape_cast %13 : vector<1x32x32xf32> to vector<32x32xf32>
    %cst_12 = arith.constant dense<0.000000e+00> : vector<16x32xf32>
    %15 = tpu.matmul %4, %14, %cst_12 {dimension_numbers = #tpu.dot_dimension_numbers<[1], [0], [0], [1], [0, 0, 1, 1], [], []>} : vector<16x32xf32>, vector<32x32xf32>, vector<16x32xf32> -> vector<16x32xf32>
    %c0_13 = arith.constant 0 : index
    %c0_14 = arith.constant 0 : index
    %c0_15 = arith.constant 0 : index
    %16 = vector.load %arg6[%c0_13, %c0_14, %c0_15] : memref<1x1x32xf32, #tpu.memory_space<vmem>>, vector<1x1x32xf32>
    %17 = vector.shape_cast %16 : vector<1x1x32xf32> to vector<1x32xf32>
    %18 = vector.broadcast %17 : vector<1x32xf32> to vector<16x32xf32>
    %19 = arith.addf %15, %18 : vector<16x32xf32>
    %20 = vector.shape_cast %19 : vector<16x32xf32> to vector<2x8x32xf32>
    %c0_16 = arith.constant 0 : index
    %c0_17 = arith.constant 0 : index
    %c0_18 = arith.constant 0 : index
    %21 = vector.load %arg7[%c0_16, %c0_17, %c0_18] : memref<1x32x32xf32, #tpu.memory_space<vmem>>, vector<1x32x32xf32>
    %22 = vector.shape_cast %21 : vector<1x32x32xf32> to vector<32x32xf32>
    %cst_19 = arith.constant dense<0.000000e+00> : vector<16x32xf32>
    %23 = tpu.matmul %4, %22, %cst_19 {dimension_numbers = #tpu.dot_dimension_numbers<[1], [0], [0], [1], [0, 0, 1, 1], [], []>} : vector<16x32xf32>, vector<32x32xf32>, vector<16x32xf32> -> vector<16x32xf32>
    %c0_20 = arith.constant 0 : index
    %c0_21 = arith.constant 0 : index
    %c0_22 = arith.constant 0 : index
    %24 = vector.load %arg8[%c0_20, %c0_21, %c0_22] : memref<1x1x32xf32, #tpu.memory_space<vmem>>, vector<1x1x32xf32>
    %25 = vector.shape_cast %24 : vector<1x1x32xf32> to vector<1x32xf32>
    %26 = vector.broadcast %25 : vector<1x32xf32> to vector<16x32xf32>
    %27 = arith.addf %23, %26 : vector<16x32xf32>
    %28 = vector.shape_cast %27 : vector<16x32xf32> to vector<2x8x32xf32>
    %29 = vector.extract_strided_slice %12 {offsets = [0, 0, 0], sizes = [2, 8, 8], strides = [1, 1, 1]} : vector<2x8x32xf32> to vector<2x8x8xf32>
    %30 = vector.extract_strided_slice %20 {offsets = [0, 0, 0], sizes = [2, 8, 8], strides = [1, 1, 1]} : vector<2x8x32xf32> to vector<2x8x8xf32>
    %31 = vector.extract_strided_slice %28 {offsets = [0, 0, 0], sizes = [2, 8, 8], strides = [1, 1, 1]} : vector<2x8x32xf32> to vector<2x8x8xf32>
    "tpu.trace_start"() <{level = 10 : i32, message = "bqd,bkd->bqk"}> : () -> ()
    %cst_23 = arith.constant dense<0.000000e+00> : vector<2x8x8xf32>
    %32 = tpu.matmul %29, %30, %cst_23 {dimension_numbers = #tpu.dot_dimension_numbers<[2], [2], [1], [1], [0, 0, 0, 1, 1, 1], [0], [0]>} : vector<2x8x8xf32>, vector<2x8x8xf32>, vector<2x8x8xf32> -> vector<2x8x8xf32>
    "tpu.trace_stop"() : () -> ()
    %cst_24 = arith.constant dense<0xFF800000> : vector<2x8xf32>
    %33 = vector.multi_reduction <maximumf>, %32, %cst_24 [2] : vector<2x8x8xf32> to vector<2x8xf32>
    %34 = vector.shape_cast %33 : vector<2x8xf32> to vector<2x8x1xf32>
    %35 = vector.broadcast %34 : vector<2x8x1xf32> to vector<2x8x8xf32>
    %36 = arith.subf %32, %35 : vector<2x8x8xf32>
    %37 = math.exp %36 : vector<2x8x8xf32>
    %cst_25 = arith.constant dense<0.000000e+00> : vector<2x8xf32>
    %38 = vector.multi_reduction <add>, %37, %cst_25 [2] : vector<2x8x8xf32> to vector<2x8xf32>
    %39 = vector.shape_cast %38 : vector<2x8xf32> to vector<2x8x1xf32>
    %40 = tpu.reciprocal %39 : vector<2x8x1xf32> -> vector<2x8x1xf32>
    %41 = vector.broadcast %40 : vector<2x8x1xf32> to vector<2x8x8xf32>
    %42 = arith.mulf %37, %41 : vector<2x8x8xf32>
    "tpu.trace_start"() <{level = 10 : i32, message = "bqk,bkd->bqd"}> : () -> ()
    %cst_26 = arith.constant dense<0.000000e+00> : vector<2x8x8xf32>
    %43 = tpu.matmul %42, %31, %cst_26 {dimension_numbers = #tpu.dot_dimension_numbers<[2], [1], [1], [2], [0, 0, 0, 1, 1, 2], [0], [0]>} : vector<2x8x8xf32>, vector<2x8x8xf32>, vector<2x8x8xf32> -> vector<2x8x8xf32>
    "tpu.trace_stop"() : () -> ()
    %44 = vector.extract_strided_slice %12 {offsets = [0, 0, 8], sizes = [2, 8, 8], strides = [1, 1, 1]} : vector<2x8x32xf32> to vector<2x8x8xf32>
    %45 = vector.extract_strided_slice %20 {offsets = [0, 0, 8], sizes = [2, 8, 8], strides = [1, 1, 1]} : vector<2x8x32xf32> to vector<2x8x8xf32>
    %46 = vector.extract_strided_slice %28 {offsets = [0, 0, 8], sizes = [2, 8, 8], strides = [1, 1, 1]} : vector<2x8x32xf32> to vector<2x8x8xf32>
    "tpu.trace_start"() <{level = 10 : i32, message = "bqd,bkd->bqk"}> : () -> ()
    %cst_27 = arith.constant dense<0.000000e+00> : vector<2x8x8xf32>
    %47 = tpu.matmul %44, %45, %cst_27 {dimension_numbers = #tpu.dot_dimension_numbers<[2], [2], [1], [1], [0, 0, 0, 1, 1, 1], [0], [0]>} : vector<2x8x8xf32>, vector<2x8x8xf32>, vector<2x8x8xf32> -> vector<2x8x8xf32>
    "tpu.trace_stop"() : () -> ()
    %cst_28 = arith.constant dense<0xFF800000> : vector<2x8xf32>
    %48 = vector.multi_reduction <maximumf>, %47, %cst_28 [2] : vector<2x8x8xf32> to vector<2x8xf32>
    %49 = vector.shape_cast %48 : vector<2x8xf32> to vector<2x8x1xf32>
    %50 = vector.broadcast %49 : vector<2x8x1xf32> to vector<2x8x8xf32>
    %51 = arith.subf %47, %50 : vector<2x8x8xf32>
    %52 = math.exp %51 : vector<2x8x8xf32>
    %cst_29 = arith.constant dense<0.000000e+00> : vector<2x8xf32>
    %53 = vector.multi_reduction <add>, %52, %cst_29 [2] : vector<2x8x8xf32> to vector<2x8xf32>
    %54 = vector.shape_cast %53 : vector<2x8xf32> to vector<2x8x1xf32>
    %55 = tpu.reciprocal %54 : vector<2x8x1xf32> -> vector<2x8x1xf32>
    %56 = vector.broadcast %55 : vector<2x8x1xf32> to vector<2x8x8xf32>
    %57 = arith.mulf %52, %56 : vector<2x8x8xf32>
    "tpu.trace_start"() <{level = 10 : i32, message = "bqk,bkd->bqd"}> : () -> ()
    %cst_30 = arith.constant dense<0.000000e+00> : vector<2x8x8xf32>
    %58 = tpu.matmul %57, %46, %cst_30 {dimension_numbers = #tpu.dot_dimension_numbers<[2], [1], [1], [2], [0, 0, 0, 1, 1, 2], [0], [0]>} : vector<2x8x8xf32>, vector<2x8x8xf32>, vector<2x8x8xf32> -> vector<2x8x8xf32>
    "tpu.trace_stop"() : () -> ()
    %59 = vector.extract_strided_slice %12 {offsets = [0, 0, 16], sizes = [2, 8, 8], strides = [1, 1, 1]} : vector<2x8x32xf32> to vector<2x8x8xf32>
    %60 = vector.extract_strided_slice %20 {offsets = [0, 0, 16], sizes = [2, 8, 8], strides = [1, 1, 1]} : vector<2x8x32xf32> to vector<2x8x8xf32>
    %61 = vector.extract_strided_slice %28 {offsets = [0, 0, 16], sizes = [2, 8, 8], strides = [1, 1, 1]} : vector<2x8x32xf32> to vector<2x8x8xf32>
    "tpu.trace_start"() <{level = 10 : i32, message = "bqd,bkd->bqk"}> : () -> ()
    %cst_31 = arith.constant dense<0.000000e+00> : vector<2x8x8xf32>
    %62 = tpu.matmul %59, %60, %cst_31 {dimension_numbers = #tpu.dot_dimension_numbers<[2], [2], [1], [1], [0, 0, 0, 1, 1, 1], [0], [0]>} : vector<2x8x8xf32>, vector<2x8x8xf32>, vector<2x8x8xf32> -> vector<2x8x8xf32>
    "tpu.trace_stop"() : () -> ()
    %cst_32 = arith.constant dense<0xFF800000> : vector<2x8xf32>
    %63 = vector.multi_reduction <maximumf>, %62, %cst_32 [2] : vector<2x8x8xf32> to vector<2x8xf32>
    %64 = vector.shape_cast %63 : vector<2x8xf32> to vector<2x8x1xf32>
    %65 = vector.broadcast %64 : vector<2x8x1xf32> to vector<2x8x8xf32>
    %66 = arith.subf %62, %65 : vector<2x8x8xf32>
    %67 = math.exp %66 : vector<2x8x8xf32>
    %cst_33 = arith.constant dense<0.000000e+00> : vector<2x8xf32>
    %68 = vector.multi_reduction <add>, %67, %cst_33 [2] : vector<2x8x8xf32> to vector<2x8xf32>
    %69 = vector.shape_cast %68 : vector<2x8xf32> to vector<2x8x1xf32>
    %70 = tpu.reciprocal %69 : vector<2x8x1xf32> -> vector<2x8x1xf32>
    %71 = vector.broadcast %70 : vector<2x8x1xf32> to vector<2x8x8xf32>
    %72 = arith.mulf %67, %71 : vector<2x8x8xf32>
    "tpu.trace_start"() <{level = 10 : i32, message = "bqk,bkd->bqd"}> : () -> ()
    %cst_34 = arith.constant dense<0.000000e+00> : vector<2x8x8xf32>
    %73 = tpu.matmul %72, %61, %cst_34 {dimension_numbers = #tpu.dot_dimension_numbers<[2], [1], [1], [2], [0, 0, 0, 1, 1, 2], [0], [0]>} : vector<2x8x8xf32>, vector<2x8x8xf32>, vector<2x8x8xf32> -> vector<2x8x8xf32>
    "tpu.trace_stop"() : () -> ()
    %74 = vector.extract_strided_slice %12 {offsets = [0, 0, 24], sizes = [2, 8, 8], strides = [1, 1, 1]} : vector<2x8x32xf32> to vector<2x8x8xf32>
    %75 = vector.extract_strided_slice %20 {offsets = [0, 0, 24], sizes = [2, 8, 8], strides = [1, 1, 1]} : vector<2x8x32xf32> to vector<2x8x8xf32>
    %76 = vector.extract_strided_slice %28 {offsets = [0, 0, 24], sizes = [2, 8, 8], strides = [1, 1, 1]} : vector<2x8x32xf32> to vector<2x8x8xf32>
    "tpu.trace_start"() <{level = 10 : i32, message = "bqd,bkd->bqk"}> : () -> ()
    %cst_35 = arith.constant dense<0.000000e+00> : vector<2x8x8xf32>
    %77 = tpu.matmul %74, %75, %cst_35 {dimension_numbers = #tpu.dot_dimension_numbers<[2], [2], [1], [1], [0, 0, 0, 1, 1, 1], [0], [0]>} : vector<2x8x8xf32>, vector<2x8x8xf32>, vector<2x8x8xf32> -> vector<2x8x8xf32>
    "tpu.trace_stop"() : () -> ()
    %cst_36 = arith.constant dense<0xFF800000> : vector<2x8xf32>
    %78 = vector.multi_reduction <maximumf>, %77, %cst_36 [2] : vector<2x8x8xf32> to vector<2x8xf32>
    %79 = vector.shape_cast %78 : vector<2x8xf32> to vector<2x8x1xf32>
    %80 = vector.broadcast %79 : vector<2x8x1xf32> to vector<2x8x8xf32>
    %81 = arith.subf %77, %80 : vector<2x8x8xf32>
    %82 = math.exp %81 : vector<2x8x8xf32>
    %cst_37 = arith.constant dense<0.000000e+00> : vector<2x8xf32>
    %83 = vector.multi_reduction <add>, %82, %cst_37 [2] : vector<2x8x8xf32> to vector<2x8xf32>
    %84 = vector.shape_cast %83 : vector<2x8xf32> to vector<2x8x1xf32>
    %85 = tpu.reciprocal %84 : vector<2x8x1xf32> -> vector<2x8x1xf32>
    %86 = vector.broadcast %85 : vector<2x8x1xf32> to vector<2x8x8xf32>
    %87 = arith.mulf %82, %86 : vector<2x8x8xf32>
    "tpu.trace_start"() <{level = 10 : i32, message = "bqk,bkd->bqd"}> : () -> ()
    %cst_38 = arith.constant dense<0.000000e+00> : vector<2x8x8xf32>
    %88 = tpu.matmul %87, %76, %cst_38 {dimension_numbers = #tpu.dot_dimension_numbers<[2], [1], [1], [2], [0, 0, 0, 1, 1, 2], [0], [0]>} : vector<2x8x8xf32>, vector<2x8x8xf32>, vector<2x8x8xf32> -> vector<2x8x8xf32>
    "tpu.trace_stop"() : () -> ()
    %89 = tpu.concatenate %43, %58, %73, %88 in 2 : vector<2x8x8xf32>, vector<2x8x8xf32>, vector<2x8x8xf32>, vector<2x8x8xf32> -> vector<2x8x32xf32>
    %90 = vector.shape_cast %89 : vector<2x8x32xf32> to vector<16x32xf32>
    %c0_39 = arith.constant 0 : index
    %c0_40 = arith.constant 0 : index
    %c0_41 = arith.constant 0 : index
    %91 = vector.load %arg9[%c0_39, %c0_40, %c0_41] : memref<1x32x32xf32, #tpu.memory_space<vmem>>, vector<1x32x32xf32>
    %92 = vector.shape_cast %91 : vector<1x32x32xf32> to vector<32x32xf32>
    %cst_42 = arith.constant dense<0.000000e+00> : vector<16x32xf32>
    %93 = tpu.matmul %90, %92, %cst_42 {dimension_numbers = #tpu.dot_dimension_numbers<[1], [0], [0], [1], [0, 0, 1, 1], [], []>} : vector<16x32xf32>, vector<32x32xf32>, vector<16x32xf32> -> vector<16x32xf32>
    %94 = vector.shape_cast %93 : vector<16x32xf32> to vector<2x8x32xf32>
    %c0_43 = arith.constant 0 : index
    %c0_44 = arith.constant 0 : index
    %c0_45 = arith.constant 0 : index
    %95 = vector.load %arg10[%c0_43, %c0_44, %c0_45] : memref<1x1x32xf32, #tpu.memory_space<vmem>>, vector<1x1x32xf32>
    %96 = vector.shape_cast %95 : vector<1x1x32xf32> to vector<1x32xf32>
    %97 = vector.shape_cast %96 : vector<1x32xf32> to vector<1x1x32xf32>
    %98 = vector.broadcast %97 : vector<1x1x32xf32> to vector<2x8x32xf32>
    %99 = arith.addf %94, %98 : vector<2x8x32xf32>
    %100 = arith.addf %99, %3 : vector<2x8x32xf32>
    %cst_46 = arith.constant dense<0.000000e+00> : vector<2x8xf32>
    %101 = vector.multi_reduction <add>, %100, %cst_46 [2] : vector<2x8x32xf32> to vector<2x8xf32>
    %102 = vector.shape_cast %101 : vector<2x8xf32> to vector<2x8x1xf32>
    %cst_47 = arith.constant 3.200000e+01 : f32
    %103 = vector.broadcast %cst_47 : f32 to vector<2x8x1xf32>
    %104 = arith.divf %102, %103 : vector<2x8x1xf32>
    %105 = vector.broadcast %104 : vector<2x8x1xf32> to vector<2x8x32xf32>
    %106 = arith.subf %100, %105 : vector<2x8x32xf32>
    %107 = arith.mulf %106, %106 : vector<2x8x32xf32>
    %cst_48 = arith.constant dense<0.000000e+00> : vector<2x8xf32>
    %108 = vector.multi_reduction <add>, %107, %cst_48 [2] : vector<2x8x32xf32> to vector<2x8xf32>
    %109 = vector.shape_cast %108 : vector<2x8xf32> to vector<2x8x1xf32>
    %cst_49 = arith.constant 3.200000e+01 : f32
    %110 = vector.broadcast %cst_49 : f32 to vector<2x8x1xf32>
    %111 = arith.divf %109, %110 : vector<2x8x1xf32>
    %112 = vector.broadcast %104 : vector<2x8x1xf32> to vector<2x8x32xf32>
    %113 = arith.subf %100, %112 : vector<2x8x32xf32>
    %cst_50 = arith.constant 9.99999974E-6 : f32
    %114 = vector.broadcast %cst_50 : f32 to vector<2x8x1xf32>
    %115 = arith.addf %111, %114 : vector<2x8x1xf32>
    %116 = math.rsqrt %115 : vector<2x8x1xf32>
    %117 = vector.broadcast %116 : vector<2x8x1xf32> to vector<2x8x32xf32>
    %118 = arith.mulf %113, %117 : vector<2x8x32xf32>
    %c0_51 = arith.constant 0 : index
    %c0_52 = arith.constant 0 : index
    %c0_53 = arith.constant 0 : index
    %119 = vector.load %arg11[%c0_51, %c0_52, %c0_53] : memref<1x1x32xf32, #tpu.memory_space<vmem>>, vector<1x1x32xf32>
    %120 = vector.shape_cast %119 : vector<1x1x32xf32> to vector<1x32xf32>
    %121 = vector.shape_cast %120 : vector<1x32xf32> to vector<1x1x32xf32>
    %122 = vector.broadcast %121 : vector<1x1x32xf32> to vector<2x8x32xf32>
    %123 = arith.mulf %118, %122 : vector<2x8x32xf32>
    %c0_54 = arith.constant 0 : index
    %c0_55 = arith.constant 0 : index
    %c0_56 = arith.constant 0 : index
    %124 = vector.load %arg12[%c0_54, %c0_55, %c0_56] : memref<1x1x32xf32, #tpu.memory_space<vmem>>, vector<1x1x32xf32>
    %125 = vector.shape_cast %124 : vector<1x1x32xf32> to vector<1x32xf32>
    %126 = vector.shape_cast %125 : vector<1x32xf32> to vector<1x1x32xf32>
    %127 = vector.broadcast %126 : vector<1x1x32xf32> to vector<2x8x32xf32>
    %128 = arith.addf %123, %127 : vector<2x8x32xf32>
    %129 = vector.shape_cast %128 : vector<2x8x32xf32> to vector<16x32xf32>
    %c0_57 = arith.constant 0 : index
    %c0_58 = arith.constant 0 : index
    %c0_59 = arith.constant 0 : index
    %130 = vector.load %arg13[%c0_57, %c0_58, %c0_59] : memref<1x32x64xf32, #tpu.memory_space<vmem>>, vector<1x32x64xf32>
    %131 = vector.shape_cast %130 : vector<1x32x64xf32> to vector<32x64xf32>
    %cst_60 = arith.constant dense<0.000000e+00> : vector<16x64xf32>
    %132 = tpu.matmul %129, %131, %cst_60 {dimension_numbers = #tpu.dot_dimension_numbers<[1], [0], [0], [1], [0, 0, 1, 1], [], []>} : vector<16x32xf32>, vector<32x64xf32>, vector<16x64xf32> -> vector<16x64xf32>
    %c0_61 = arith.constant 0 : index
    %c0_62 = arith.constant 0 : index
    %c0_63 = arith.constant 0 : index
    %133 = vector.load %arg14[%c0_61, %c0_62, %c0_63] : memref<1x1x64xf32, #tpu.memory_space<vmem>>, vector<1x1x64xf32>
    %134 = vector.shape_cast %133 : vector<1x1x64xf32> to vector<1x64xf32>
    %135 = vector.broadcast %134 : vector<1x64xf32> to vector<16x64xf32>
    %136 = arith.addf %132, %135 : vector<16x64xf32>
    %cst_64 = arith.constant 0.000000e+00 : f32
    %137 = vector.broadcast %cst_64 : f32 to vector<16x64xf32>
    %138 = arith.maximumf %136, %137 : vector<16x64xf32>
    %c0_65 = arith.constant 0 : index
    %c0_66 = arith.constant 0 : index
    %c0_67 = arith.constant 0 : index
    %139 = vector.load %arg15[%c0_65, %c0_66, %c0_67] : memref<1x64x32xf32, #tpu.memory_space<vmem>>, vector<1x64x32xf32>
    %140 = vector.shape_cast %139 : vector<1x64x32xf32> to vector<64x32xf32>
    %cst_68 = arith.constant dense<0.000000e+00> : vector<16x32xf32>
    %141 = tpu.matmul %138, %140, %cst_68 {dimension_numbers = #tpu.dot_dimension_numbers<[1], [0], [0], [1], [0, 0, 1, 1], [], []>} : vector<16x64xf32>, vector<64x32xf32>, vector<16x32xf32> -> vector<16x32xf32>
    %c0_69 = arith.constant 0 : index
    %c0_70 = arith.constant 0 : index
    %c0_71 = arith.constant 0 : index
    %142 = vector.load %arg16[%c0_69, %c0_70, %c0_71] : memref<1x1x32xf32, #tpu.memory_space<vmem>>, vector<1x1x32xf32>
    %143 = vector.shape_cast %142 : vector<1x1x32xf32> to vector<1x32xf32>
    %144 = vector.broadcast %143 : vector<1x32xf32> to vector<16x32xf32>
    %145 = arith.addf %141, %144 : vector<16x32xf32>
    %146 = vector.shape_cast %145 : vector<16x32xf32> to vector<2x8x32xf32>
    %147 = arith.addf %146, %128 : vector<2x8x32xf32>
    %cst_72 = arith.constant dense<0.000000e+00> : vector<2x8xf32>
    %148 = vector.multi_reduction <add>, %147, %cst_72 [2] : vector<2x8x32xf32> to vector<2x8xf32>
    %149 = vector.shape_cast %148 : vector<2x8xf32> to vector<2x8x1xf32>
    %cst_73 = arith.constant 3.200000e+01 : f32
    %150 = vector.broadcast %cst_73 : f32 to vector<2x8x1xf32>
    %151 = arith.divf %149, %150 : vector<2x8x1xf32>
    %152 = vector.broadcast %151 : vector<2x8x1xf32> to vector<2x8x32xf32>
    %153 = arith.subf %147, %152 : vector<2x8x32xf32>
    %154 = arith.mulf %153, %153 : vector<2x8x32xf32>
    %cst_74 = arith.constant dense<0.000000e+00> : vector<2x8xf32>
    %155 = vector.multi_reduction <add>, %154, %cst_74 [2] : vector<2x8x32xf32> to vector<2x8xf32>
    %156 = vector.shape_cast %155 : vector<2x8xf32> to vector<2x8x1xf32>
    %cst_75 = arith.constant 3.200000e+01 : f32
    %157 = vector.broadcast %cst_75 : f32 to vector<2x8x1xf32>
    %158 = arith.divf %156, %157 : vector<2x8x1xf32>
    %159 = vector.broadcast %151 : vector<2x8x1xf32> to vector<2x8x32xf32>
    %160 = arith.subf %147, %159 : vector<2x8x32xf32>
    %cst_76 = arith.constant 9.99999974E-6 : f32
    %161 = vector.broadcast %cst_76 : f32 to vector<2x8x1xf32>
    %162 = arith.addf %158, %161 : vector<2x8x1xf32>
    %163 = math.rsqrt %162 : vector<2x8x1xf32>
    %164 = vector.broadcast %163 : vector<2x8x1xf32> to vector<2x8x32xf32>
    %165 = arith.mulf %160, %164 : vector<2x8x32xf32>
    %c0_77 = arith.constant 0 : index
    %c0_78 = arith.constant 0 : index
    %c0_79 = arith.constant 0 : index
    %166 = vector.load %arg17[%c0_77, %c0_78, %c0_79] : memref<1x1x32xf32, #tpu.memory_space<vmem>>, vector<1x1x32xf32>
    %167 = vector.shape_cast %166 : vector<1x1x32xf32> to vector<1x32xf32>
    %168 = vector.shape_cast %167 : vector<1x32xf32> to vector<1x1x32xf32>
    %169 = vector.broadcast %168 : vector<1x1x32xf32> to vector<2x8x32xf32>
    %170 = arith.mulf %165, %169 : vector<2x8x32xf32>
    %c0_80 = arith.constant 0 : index
    %c0_81 = arith.constant 0 : index
    %c0_82 = arith.constant 0 : index
    %171 = vector.load %arg18[%c0_80, %c0_81, %c0_82] : memref<1x1x32xf32, #tpu.memory_space<vmem>>, vector<1x1x32xf32>
    %172 = vector.shape_cast %171 : vector<1x1x32xf32> to vector<1x32xf32>
    %173 = vector.shape_cast %172 : vector<1x32xf32> to vector<1x1x32xf32>
    %174 = vector.broadcast %173 : vector<1x1x32xf32> to vector<2x8x32xf32>
    %175 = arith.addf %170, %174 : vector<2x8x32xf32>
    %c0_83 = arith.constant 0 : index
    %c0_84 = arith.constant 0 : index
    %c0_85 = arith.constant 0 : index
    %176 = vector.load %arg20[%c0_83, %c0_84, %c0_85] : memref<2x8x32xf32, #tpu.memory_space<vmem>>, vector<2x8x32xf32>
    tpu.vector_store %arg20[%c0_83, %c0_84, %c0_85], %175 {strides = array<i32>} : memref<2x8x32xf32, #tpu.memory_space<vmem>>, vector<2x8x32xf32>,
    %c1_i32 = arith.constant 1 : i32
    %177 = arith.cmpi eq, %arg1, %c1_i32 : i32
    %178 = arith.extui %177 : i1 to i32
    %c0_i32_86 = arith.constant 0 : i32
    %179 = arith.cmpi ne, %178, %c0_i32_86 : i32
    scf.if %179 {
      %cst_87 = arith.constant dense<0.000000e+00> : vector<2x32xf32>
      %180 = vector.multi_reduction <add>, %175, %cst_87 [1] : vector<2x8x32xf32> to vector<2x32xf32>
      %cst_88 = arith.constant 8.000000e+00 : f32
      %181 = vector.broadcast %cst_88 : f32 to vector<2x32xf32>
      %182 = arith.divf %180, %181 : vector<2x32xf32>
      %c0_89 = arith.constant 0 : index
      %c0_90 = arith.constant 0 : index
      %183 = vector.load %arg19[%c0_89, %c0_90] : memref<2x32xf32, #tpu.memory_space<vmem>>, vector<2x32xf32>
      tpu.vector_store %arg19[%c0_89, %c0_90], %182 {strides = array<i32>} : memref<2x32xf32, #tpu.memory_space<vmem>>, vector<2x32xf32>,
    } else {
    }
    return
  }
  func.func @transform_0(%arg0: i32, %arg1: i32) -> (i32, i32, i32) {
    %c0_i32 = arith.constant 0 : i32
    %c0_i32_0 = arith.constant 0 : i32
    %c0_i32_1 = arith.constant 0 : i32
    return %arg0, %c0_i32, %c0_i32_0 : i32, i32, i32
  }
  func.func @transform_1(%arg0: i32, %arg1: i32) -> (i32, i32, i32) {
    %c0_i32 = arith.constant 0 : i32
    %c0_i32_0 = arith.constant 0 : i32
    %c0_i32_1 = arith.constant 0 : i32
    return %arg1, %c0_i32, %c0_i32_0 : i32, i32, i32
  }
  func.func @transform_2(%arg0: i32, %arg1: i32) -> (i32, i32, i32) {
    %c0_i32 = arith.constant 0 : i32
    %c0_i32_0 = arith.constant 0 : i32
    %c0_i32_1 = arith.constant 0 : i32
    return %arg1, %c0_i32, %c0_i32_0 : i32, i32, i32
  }
  func.func @transform_3(%arg0: i32, %arg1: i32) -> (i32, i32, i32) {
    %c0_i32 = arith.constant 0 : i32
    %c0_i32_0 = arith.constant 0 : i32
    %c0_i32_1 = arith.constant 0 : i32
    return %arg1, %c0_i32, %c0_i32_0 : i32, i32, i32
  }
  func.func @transform_4(%arg0: i32, %arg1: i32) -> (i32, i32, i32) {
    %c0_i32 = arith.constant 0 : i32
    %c0_i32_0 = arith.constant 0 : i32
    %c0_i32_1 = arith.constant 0 : i32
    return %arg1, %c0_i32, %c0_i32_0 : i32, i32, i32
  }
  func.func @transform_5(%arg0: i32, %arg1: i32) -> (i32, i32, i32) {
    %c0_i32 = arith.constant 0 : i32
    %c0_i32_0 = arith.constant 0 : i32
    %c0_i32_1 = arith.constant 0 : i32
    return %arg1, %c0_i32, %c0_i32_0 : i32, i32, i32
  }
  func.func @transform_6(%arg0: i32, %arg1: i32) -> (i32, i32, i32) {
    %c0_i32 = arith.constant 0 : i32
    %c0_i32_0 = arith.constant 0 : i32
    %c0_i32_1 = arith.constant 0 : i32
    return %arg1, %c0_i32, %c0_i32_0 : i32, i32, i32
  }
  func.func @transform_7(%arg0: i32, %arg1: i32) -> (i32, i32, i32) {
    %c0_i32 = arith.constant 0 : i32
    %c0_i32_0 = arith.constant 0 : i32
    %c0_i32_1 = arith.constant 0 : i32
    return %arg1, %c0_i32, %c0_i32_0 : i32, i32, i32
  }
  func.func @transform_8(%arg0: i32, %arg1: i32) -> (i32, i32, i32) {
    %c0_i32 = arith.constant 0 : i32
    %c0_i32_0 = arith.constant 0 : i32
    %c0_i32_1 = arith.constant 0 : i32
    return %arg1, %c0_i32, %c0_i32_0 : i32, i32, i32
  }
  func.func @transform_9(%arg0: i32, %arg1: i32) -> (i32, i32, i32) {
    %c0_i32 = arith.constant 0 : i32
    %c0_i32_0 = arith.constant 0 : i32
    %c0_i32_1 = arith.constant 0 : i32
    return %arg1, %c0_i32, %c0_i32_0 : i32, i32, i32
  }
  func.func @transform_10(%arg0: i32, %arg1: i32) -> (i32, i32, i32) {
    %c0_i32 = arith.constant 0 : i32
    %c0_i32_0 = arith.constant 0 : i32
    %c0_i32_1 = arith.constant 0 : i32
    return %arg1, %c0_i32, %c0_i32_0 : i32, i32, i32
  }
  func.func @transform_11(%arg0: i32, %arg1: i32) -> (i32, i32, i32) {
    %c0_i32 = arith.constant 0 : i32
    %c0_i32_0 = arith.constant 0 : i32
    %c0_i32_1 = arith.constant 0 : i32
    return %arg1, %c0_i32, %c0_i32_0 : i32, i32, i32
  }
  func.func @transform_12(%arg0: i32, %arg1: i32) -> (i32, i32, i32) {
    %c0_i32 = arith.constant 0 : i32
    %c0_i32_0 = arith.constant 0 : i32
    %c0_i32_1 = arith.constant 0 : i32
    return %arg1, %c0_i32, %c0_i32_0 : i32, i32, i32
  }
  func.func @transform_13(%arg0: i32, %arg1: i32) -> (i32, i32, i32) {
    %c0_i32 = arith.constant 0 : i32
    %c0_i32_0 = arith.constant 0 : i32
    %c0_i32_1 = arith.constant 0 : i32
    return %arg1, %c0_i32, %c0_i32_0 : i32, i32, i32
  }
  func.func @transform_14(%arg0: i32, %arg1: i32) -> (i32, i32, i32) {
    %c0_i32 = arith.constant 0 : i32
    %c0_i32_0 = arith.constant 0 : i32
    %c0_i32_1 = arith.constant 0 : i32
    return %arg1, %c0_i32, %c0_i32_0 : i32, i32, i32
  }
  func.func @transform_15(%arg0: i32, %arg1: i32) -> (i32, i32, i32) {
    %c0_i32 = arith.constant 0 : i32
    %c0_i32_0 = arith.constant 0 : i32
    %c0_i32_1 = arith.constant 0 : i32
    return %arg1, %c0_i32, %c0_i32_0 : i32, i32, i32
  }
  func.func @transform_16(%arg0: i32, %arg1: i32) -> (i32, i32, i32) {
    %c0_i32 = arith.constant 0 : i32
    %c0_i32_0 = arith.constant 0 : i32
    %c0_i32_1 = arith.constant 0 : i32
    return %arg1, %c0_i32, %c0_i32_0 : i32, i32, i32
  }
  func.func @transform_17(%arg0: i32, %arg1: i32) -> (i32, i32) {
    %c0_i32 = arith.constant 0 : i32
    %c0_i32_0 = arith.constant 0 : i32
    return %arg0, %c0_i32 : i32, i32
  }
}

</mosaic_0001>

<llo_original>
// kernel: tpu_custom_call.1
$region0: #{tpu_custom_call.1}
  #allocation0 [shape = 'u32[]', space=smem, size = 0x4, offset = 0x4, fixed_abs, tag = 'smem constant byte address 0x4 - core index']
  #allocation1 [shape = 'u32[144,128]{1,0:T(1,128)}', space=vmem, size = 0x12000, scoped, tag = 'internal scratch']
  #allocation2 [shape = 'f32[2,8,32]{2,1,0:T(8,128)}', space=vmem, size = 0x2000, scoped, tag = 'scratch operand']
  %s0 = inlined_call_operand.hbm [shape: f32[2,8,32], index: 0, kind: input, shape index: {}]
  %s1 = inlined_call_operand.vmem [shape: f32[2,32,32], index: 1, kind: input, shape index: {}]
  %s2 = inlined_call_operand.vmem [shape: f32[2,1,32], index: 2, kind: input, shape index: {}]
  %s3 = inlined_call_operand.vmem [shape: f32[2,32,32], index: 3, kind: input, shape index: {}]
  %s4 = inlined_call_operand.vmem [shape: f32[2,1,32], index: 4, kind: input, shape index: {}]
  %s5 = inlined_call_operand.vmem [shape: f32[2,32,32], index: 5, kind: input, shape index: {}]
  %s6 = inlined_call_operand.vmem [shape: f32[2,1,32], index: 6, kind: input, shape index: {}]
  %s7 = inlined_call_operand.hbm [shape: f32[2,32,32], index: 7, kind: input, shape index: {}]
  %s8 = inlined_call_operand.vmem [shape: f32[2,1,32], index: 8, kind: input, shape index: {}]
  %s9 = inlined_call_operand.vmem [shape: f32[2,1,32], index: 9, kind: input, shape index: {}]
  %s10 = inlined_call_operand.vmem [shape: f32[2,1,32], index: 10, kind: input, shape index: {}]
  %s11 = inlined_call_operand.hbm [shape: f32[2,32,64], index: 11, kind: input, shape index: {}]
  %s12 = inlined_call_operand.vmem [shape: f32[2,1,64], index: 12, kind: input, shape index: {}]
  %s13 = inlined_call_operand.vmem [shape: f32[2,64,32], index: 13, kind: input, shape index: {}]
  %s14 = inlined_call_operand.vmem [shape: f32[2,1,32], index: 14, kind: input, shape index: {}]
  %s15 = inlined_call_operand.vmem [shape: f32[2,1,32], index: 15, kind: input, shape index: {}]
  %s16 = inlined_call_operand.vmem [shape: f32[2,1,32], index: 16, kind: input, shape index: {}]
  %s17 = inlined_call_operand.hbm [shape: f32[2,32], index: 17, kind: output, shape index: {}]
  %s18 = sld [smem:[#allocation0]]
  $region121: #{tpu_custom_call.1} parent=0
    _
  %s20 = ssub.s32 1, %s18
  %s21 = scalar_select 0, %s20, %s18
  $region1: #{tpu_custom_call.1} parent=0
    #allocation3 [shape = 'u8[8192]{0}', space=vmem, size = 0x2000, scoped, tag = 'input window, operand 0, single buffered']
    #allocation4 [shape = 's32[2]{0}', space=sflag, size = 0x8, scoped, tag = 'scoped memory for tpu_custom_call.1']
    #allocation5 [shape = 's32[2]{0}', space=sflag, size = 0x8, scoped, tag = 'scoped memory for tpu_custom_call.1']
    #allocation6 [shape = 'u8[32768]{0}', space=vmem, size = 0x8000, scoped, tag = 'input window, operand 7']
    #allocation7 [shape = 's32[2]{0}', space=sflag, size = 0x8, scoped, tag = 'scoped memory for tpu_custom_call.1']
    #allocation8 [shape = 'u8[32768]{0}', space=vmem, size = 0x8000, scoped, tag = 'input window, operand 11']
    #allocation9 [shape = 'u8[1024]{0}', space=vmem, size = 0x400, scoped, tag = 'output window, operand 0, single buffered']
    %22 = vsyncpa [#allocation4], 0
    %23 = vsyncpa [#allocation7], 0
    %s24 = scalar_lea.sflag [#allocation7], 1
    %25 = vsyncpa %s24, 0
    %26 = vsyncpa [#allocation5], 0
    loop: start=0, step=1, limit=4
    $region2: #{tpu_custom_call.1} parent=1 // loop_pre_header
      _
    $region3: #{tpu_custom_call.1} parent=1 // loop_header
      %s28 = sphi 0, %s32
      %p29 = scmp.ge.s32.totalorder %s28, 4
      %s35 = sphi 0, %s47
      %s36 = sphi 0, %s43
      %s37 = sphi 0, %s35
      %s38 = sphi 0, %s36
      %s39 = sphi 0, %s37
      %s40 = sphi 0, %s38
      %s50 = sphi 0, %s52
      %s53 = sphi 0, %s50
      %s54 = sphi 0, %s53
      %s70 = sphi 0, %s54
      %s76 = sphi 0, %s78
      %s79 = sphi 0, %s76
      %s80 = sphi 0, %s79
      %s96 = sphi 0, %s80
      %s102 = sphi 0, %s104
      %s105 = sphi 0, %s102
      %s106 = sphi 0, %s105
      %s122 = sphi 0, %s106
      %s128 = sphi 0, %s130
      %s131 = sphi 0, %s128
      %s132 = sphi 0, %s131
      %s148 = sphi 0, %s132
      %s154 = sphi 0, %s156
      %s157 = sphi 0, %s154
      %s158 = sphi 0, %s157
      %s174 = sphi 0, %s158
      %s180 = sphi 0, %s182
      %s183 = sphi 0, %s180
      %s184 = sphi 0, %s183
      %s200 = sphi 0, %s184
      %s206 = sphi 0, %s208
      %s209 = sphi 0, %s206
      %s210 = sphi 0, %s209
      %s226 = sphi 0, %s210
      %s232 = sphi 0, %s234
      %s235 = sphi 0, %s232
      %s236 = sphi 0, %s235
      %s252 = sphi 0, %s236
      %s258 = sphi 0, %s260
      %s261 = sphi 0, %s258
      %s262 = sphi 0, %s261
      %s278 = sphi 0, %s262
      %s284 = sphi 0, %s286
      %s287 = sphi 0, %s284
      %s288 = sphi 0, %s287
      %s304 = sphi 0, %s288
      %s310 = sphi 0, %s312
      %s313 = sphi 0, %s310
      %s314 = sphi 0, %s313
      %s330 = sphi 0, %s314
      %s336 = sphi 0, %s338
      %s339 = sphi 0, %s336
      %s340 = sphi 0, %s339
      %s356 = sphi 0, %s340
      %s362 = sphi 0, %s364
      %s365 = sphi 0, %s362
      %s366 = sphi 0, %s365
      %s382 = sphi 0, %s366
      %s388 = sphi 0, %s390
      %s391 = sphi 0, %s388
      %s392 = sphi 0, %s391
      %s408 = sphi 0, %s392
      %s414 = sphi 0, %s416
      %s417 = sphi 0, %s414
      %s418 = sphi 0, %s417
      %s434 = sphi 0, %s418
      %s440 = sphi 0, %s442
      %s443 = sphi 0, %s440
      %s444 = sphi 0, %s443
      %s460 = sphi 0, %s444
      %s466 = sphi 0, %s468
      %s469 = sphi 0, %s466
      %s470 = sphi 0, %s469
      %s486 = sphi 0, %s470
      %s492 = sphi 0, %s494
      %s495 = sphi 0, %s492
      %s496 = sphi 0, %s495
      %s512 = sphi 0, %s496
    $region4: #{tpu_custom_call.1} parent=1 // loop_header_branch
      %31 = sbr.rel (%p29) target = $region8
    $region5: #{tpu_custom_call.1} parent=1 // loop_body
      %s33 = ssub.s32 %s28, 1
      %s34 = ssub.s32 %s28, 2
      %s41 = sadd.s32 1, %s36
      %p42 = scmp.ge.s32.totalorder %s41, 2
      %s43 = scalar_select %p42, 0, %s41
      %s44 = sadd.s32 1, %s35
      %s45 = scalar_select %p42, %s44, %s35
      %p46 = scmp.ge.s32.totalorder %s45, 1
      %s47 = scalar_select %p46, 0, %s45
      %s48 = ssub.s32 %s35, %s47
      %p49 = scmp.eq.s32.totalorder %s48, 0
      %s51 = sadd.s32 %s50, 1
      %s52 = scalar_select %p49, %s50, %s51
      %p55 = pneg %p49
      %p56 = scmp.eq.s32.totalorder %s28, 1
      %p57 = por %p55, %p56
      %p58 = scmp.ne.s32.totalorder %s50, %s53
      %p59 = scmp.eq.s32.totalorder %s28, 0
      %p60 = por %p58, %p59
      %p61 = scmp.ne.s32.totalorder %s50, %s53
      %p62 = scmp.eq.s32.totalorder %s33, 1
      %p63 = por %p61, %p62
      %p64 = scmp.ne.s32.totalorder %s53, %s54
      %p65 = scmp.eq.s32.totalorder %s33, 0
      %p66 = por %p64, %p65
      %p67 = scmp.ne.s32.totalorder %s53, %s54
      %p68 = scmp.eq.s32.totalorder %s34, 1
      %p69 = por %p67, %p68
      %p71 = scmp.ne.s32.totalorder %s54, %s70
      %p72 = scmp.eq.s32.totalorder %s34, 0
      %p73 = por %p71, %p72
      %s74 = ssub.s32 %s36, %s43
      %p75 = scmp.eq.s32.totalorder %s74, 0
      %s77 = sadd.s32 %s76, 1
      %s78 = scalar_select %p75, %s76, %s77
      %p81 = pneg %p75
      %p82 = scmp.eq.s32.totalorder %s28, 1
      %p83 = por %p81, %p82
      %p84 = scmp.ne.s32.totalorder %s76, %s79
      %p85 = scmp.eq.s32.totalorder %s28, 0
      %p86 = por %p84, %p85
      %p87 = scmp.ne.s32.totalorder %s76, %s79
      %p88 = scmp.eq.s32.totalorder %s33, 1
      %p89 = por %p87, %p88
      %p90 = scmp.ne.s32.totalorder %s79, %s80
      %p91 = scmp.eq.s32.totalorder %s33, 0
      %p92 = por %p90, %p91
      %p93 = scmp.ne.s32.totalorder %s79, %s80
      %p94 = scmp.eq.s32.totalorder %s34, 1
      %p95 = por %p93, %p94
      %p97 = scmp.ne.s32.totalorder %s80, %s96
      %p98 = scmp.eq.s32.totalorder %s34, 0
      %p99 = por %p97, %p98
      %s100 = ssub.s32 %s36, %s43
      %p101 = scmp.eq.s32.totalorder %s100, 0
      %s103 = sadd.s32 %s102, 1
      %s104 = scalar_select %p101, %s102, %s103
      %p107 = pneg %p101
      %p108 = scmp.eq.s32.totalorder %s28, 1
      %p109 = por %p107, %p108
      %p110 = scmp.ne.s32.totalorder %s102, %s105
      %p111 = scmp.eq.s32.totalorder %s28, 0
      %p112 = por %p110, %p111
      %p113 = scmp.ne.s32.totalorder %s102, %s105
      %p114 = scmp.eq.s32.totalorder %s33, 1
      %p115 = por %p113, %p114
      %p116 = scmp.ne.s32.totalorder %s105, %s106
      %p117 = scmp.eq.s32.totalorder %s33, 0
      %p118 = por %p116, %p117
      %p119 = scmp.ne.s32.totalorder %s105, %s106
      %p120 = scmp.eq.s32.totalorder %s34, 1
      %p121 = por %p119, %p120
      %p123 = scmp.ne.s32.totalorder %s106, %s122
      %p124 = scmp.eq.s32.totalorder %s34, 0
      %p125 = por %p123, %p124
      %s126 = ssub.s32 %s36, %s43
      %p127 = scmp.eq.s32.totalorder %s126, 0
      %s129 = sadd.s32 %s128, 1
      %s130 = scalar_select %p127, %s128, %s129
      %p133 = pneg %p127
      %p134 = scmp.eq.s32.totalorder %s28, 1
      %p135 = por %p133, %p134
      %p136 = scmp.ne.s32.totalorder %s128, %s131
      %p137 = scmp.eq.s32.totalorder %s28, 0
      %p138 = por %p136, %p137
      %p139 = scmp.ne.s32.totalorder %s128, %s131
      %p140 = scmp.eq.s32.totalorder %s33, 1
      %p141 = por %p139, %p140
      %p142 = scmp.ne.s32.totalorder %s131, %s132
      %p143 = scmp.eq.s32.totalorder %s33, 0
      %p144 = por %p142, %p143
      %p145 = scmp.ne.s32.totalorder %s131, %s132
      %p146 = scmp.eq.s32.totalorder %s34, 1
      %p147 = por %p145, %p146
      %p149 = scmp.ne.s32.totalorder %s132, %s148
      %p150 = scmp.eq.s32.totalorder %s34, 0
      %p151 = por %p149, %p150
      %s152 = ssub.s32 %s36, %s43
      %p153 = scmp.eq.s32.totalorder %s152, 0
      %s155 = sadd.s32 %s154, 1
      %s156 = scalar_select %p153, %s154, %s155
      %p159 = pneg %p153
      %p160 = scmp.eq.s32.totalorder %s28, 1
      %p161 = por %p159, %p160
      %p162 = scmp.ne.s32.totalorder %s154, %s157
      %p163 = scmp.eq.s32.totalorder %s28, 0
      %p164 = por %p162, %p163
      %p165 = scmp.ne.s32.totalorder %s154, %s157
      %p166 = scmp.eq.s32.totalorder %s33, 1
      %p167 = por %p165, %p166
      %p168 = scmp.ne.s32.totalorder %s157, %s158
      %p169 = scmp.eq.s32.totalorder %s33, 0
      %p170 = por %p168, %p169
      %p171 = scmp.ne.s32.totalorder %s157, %s158
      %p172 = scmp.eq.s32.totalorder %s34, 1
      %p173 = por %p171, %p172
      %p175 = scmp.ne.s32.totalorder %s158, %s174
      %p176 = scmp.eq.s32.totalorder %s34, 0
      %p177 = por %p175, %p176
      %s178 = ssub.s32 %s36, %s43
      %p179 = scmp.eq.s32.totalorder %s178, 0
      %s181 = sadd.s32 %s180, 1
      %s182 = scalar_select %p179, %s180, %s181
      %p185 = pneg %p179
      %p186 = scmp.eq.s32.totalorder %s28, 1
      %p187 = por %p185, %p186
      %p188 = scmp.ne.s32.totalorder %s180, %s183
      %p189 = scmp.eq.s32.totalorder %s28, 0
      %p190 = por %p188, %p189
      %p191 = scmp.ne.s32.totalorder %s180, %s183
      %p192 = scmp.eq.s32.totalorder %s33, 1
      %p193 = por %p191, %p192
      %p194 = scmp.ne.s32.totalorder %s183, %s184
      %p195 = scmp.eq.s32.totalorder %s33, 0
      %p196 = por %p194, %p195
      %p197 = scmp.ne.s32.totalorder %s183, %s184
      %p198 = scmp.eq.s32.totalorder %s34, 1
      %p199 = por %p197, %p198
      %p201 = scmp.ne.s32.totalorder %s184, %s200
      %p202 = scmp.eq.s32.totalorder %s34, 0
      %p203 = por %p201, %p202
      %s204 = ssub.s32 %s36, %s43
      %p205 = scmp.eq.s32.totalorder %s204, 0
      %s207 = sadd.s32 %s206, 1
      %s208 = scalar_select %p205, %s206, %s207
      %p211 = pneg %p205
      %p212 = scmp.eq.s32.totalorder %s28, 1
      %p213 = por %p211, %p212
      %p214 = scmp.ne.s32.totalorder %s206, %s209
      %p215 = scmp.eq.s32.totalorder %s28, 0
      %p216 = por %p214, %p215
      %p217 = scmp.ne.s32.totalorder %s206, %s209
      %p218 = scmp.eq.s32.totalorder %s33, 1
      %p219 = por %p217, %p218
      %p220 = scmp.ne.s32.totalorder %s209, %s210
      %p221 = scmp.eq.s32.totalorder %s33, 0
      %p222 = por %p220, %p221
      %p223 = scmp.ne.s32.totalorder %s209, %s210
      %p224 = scmp.eq.s32.totalorder %s34, 1
      %p225 = por %p223, %p224
      %p227 = scmp.ne.s32.totalorder %s210, %s226
      %p228 = scmp.eq.s32.totalorder %s34, 0
      %p229 = por %p227, %p228
      %s230 = ssub.s32 %s36, %s43
      %p231 = scmp.eq.s32.totalorder %s230, 0
      %s233 = sadd.s32 %s232, 1
      %s234 = scalar_select %p231, %s232, %s233
      %p237 = pneg %p231
      %p238 = scmp.eq.s32.totalorder %s28, 1
      %p239 = por %p237, %p238
      %p240 = scmp.ne.s32.totalorder %s232, %s235
      %p241 = scmp.eq.s32.totalorder %s28, 0
      %p242 = por %p240, %p241
      %p243 = scmp.ne.s32.totalorder %s232, %s235
      %p244 = scmp.eq.s32.totalorder %s33, 1
      %p245 = por %p243, %p244
      %p246 = scmp.ne.s32.totalorder %s235, %s236
      %p247 = scmp.eq.s32.totalorder %s33, 0
      %p248 = por %p246, %p247
      %p249 = scmp.ne.s32.totalorder %s235, %s236
      %p250 = scmp.eq.s32.totalorder %s34, 1
      %p251 = por %p249, %p250
      %p253 = scmp.ne.s32.totalorder %s236, %s252
      %p254 = scmp.eq.s32.totalorder %s34, 0
      %p255 = por %p253, %p254
      %s256 = ssub.s32 %s36, %s43
      %p257 = scmp.eq.s32.totalorder %s256, 0
      %s259 = sadd.s32 %s258, 1
      %s260 = scalar_select %p257, %s258, %s259
      %p263 = pneg %p257
      %p264 = scmp.eq.s32.totalorder %s28, 1
      %p265 = por %p263, %p264
      %p266 = scmp.ne.s32.totalorder %s258, %s261
      %p267 = scmp.eq.s32.totalorder %s28, 0
      %p268 = por %p266, %p267
      %p269 = scmp.ne.s32.totalorder %s258, %s261
      %p270 = scmp.eq.s32.totalorder %s33, 1
      %p271 = por %p269, %p270
      %p272 = scmp.ne.s32.totalorder %s261, %s262
      %p273 = scmp.eq.s32.totalorder %s33, 0
      %p274 = por %p272, %p273
      %p275 = scmp.ne.s32.totalorder %s261, %s262
      %p276 = scmp.eq.s32.totalorder %s34, 1
      %p277 = por %p275, %p276
      %p279 = scmp.ne.s32.totalorder %s262, %s278
      %p280 = scmp.eq.s32.totalorder %s34, 0
      %p281 = por %p279, %p280
      %s282 = ssub.s32 %s36, %s43
      %p283 = scmp.eq.s32.totalorder %s282, 0
      %s285 = sadd.s32 %s284, 1
      %s286 = scalar_select %p283, %s284, %s285
      %p289 = pneg %p283
      %p290 = scmp.eq.s32.totalorder %s28, 1
      %p291 = por %p289, %p290
      %p292 = scmp.ne.s32.totalorder %s284, %s287
      %p293 = scmp.eq.s32.totalorder %s28, 0
      %p294 = por %p292, %p293
      %p295 = scmp.ne.s32.totalorder %s284, %s287
      %p296 = scmp.eq.s32.totalorder %s33, 1
      %p297 = por %p295, %p296
      %p298 = scmp.ne.s32.totalorder %s287, %s288
      %p299 = scmp.eq.s32.totalorder %s33, 0
      %p300 = por %p298, %p299
      %p301 = scmp.ne.s32.totalorder %s287, %s288
      %p302 = scmp.eq.s32.totalorder %s34, 1
      %p303 = por %p301, %p302
      %p305 = scmp.ne.s32.totalorder %s288, %s304
      %p306 = scmp.eq.s32.totalorder %s34, 0
      %p307 = por %p305, %p306
      %s308 = ssub.s32 %s36, %s43
      %p309 = scmp.eq.s32.totalorder %s308, 0
      %s311 = sadd.s32 %s310, 1
      %s312 = scalar_select %p309, %s310, %s311
      %p315 = pneg %p309
      %p316 = scmp.eq.s32.totalorder %s28, 1
      %p317 = por %p315, %p316
      %p318 = scmp.ne.s32.totalorder %s310, %s313
      %p319 = scmp.eq.s32.totalorder %s28, 0
      %p320 = por %p318, %p319
      %p321 = scmp.ne.s32.totalorder %s310, %s313
      %p322 = scmp.eq.s32.totalorder %s33, 1
      %p323 = por %p321, %p322
      %p324 = scmp.ne.s32.totalorder %s313, %s314
      %p325 = scmp.eq.s32.totalorder %s33, 0
      %p326 = por %p324, %p325
      %p327 = scmp.ne.s32.totalorder %s313, %s314
      %p328 = scmp.eq.s32.totalorder %s34, 1
      %p329 = por %p327, %p328
      %p331 = scmp.ne.s32.totalorder %s314, %s330
      %p332 = scmp.eq.s32.totalorder %s34, 0
      %p333 = por %p331, %p332
      %s334 = ssub.s32 %s36, %s43
      %p335 = scmp.eq.s32.totalorder %s334, 0
      %s337 = sadd.s32 %s336, 1
      %s338 = scalar_select %p335, %s336, %s337
      %p341 = pneg %p335
      %p342 = scmp.eq.s32.totalorder %s28, 1
      %p343 = por %p341, %p342
      %p344 = scmp.ne.s32.totalorder %s336, %s339
      %p345 = scmp.eq.s32.totalorder %s28, 0
      %p346 = por %p344, %p345
      %p347 = scmp.ne.s32.totalorder %s336, %s339
      %p348 = scmp.eq.s32.totalorder %s33, 1
      %p349 = por %p347, %p348
      %p350 = scmp.ne.s32.totalorder %s339, %s340
      %p351 = scmp.eq.s32.totalorder %s33, 0
      %p352 = por %p350, %p351
      %p353 = scmp.ne.s32.totalorder %s339, %s340
      %p354 = scmp.eq.s32.totalorder %s34, 1
      %p355 = por %p353, %p354
      %p357 = scmp.ne.s32.totalorder %s340, %s356
      %p358 = scmp.eq.s32.totalorder %s34, 0
      %p359 = por %p357, %p358
      %s360 = ssub.s32 %s36, %s43
      %p361 = scmp.eq.s32.totalorder %s360, 0
      %s363 = sadd.s32 %s362, 1
      %s364 = scalar_select %p361, %s362, %s363
      %p367 = pneg %p361
      %p368 = scmp.eq.s32.totalorder %s28, 1
      %p369 = por %p367, %p368
      %p370 = scmp.ne.s32.totalorder %s362, %s365
      %p371 = scmp.eq.s32.totalorder %s28, 0
      %p372 = por %p370, %p371
      %p373 = scmp.ne.s32.totalorder %s362, %s365
      %p374 = scmp.eq.s32.totalorder %s33, 1
      %p375 = por %p373, %p374
      %p376 = scmp.ne.s32.totalorder %s365, %s366
      %p377 = scmp.eq.s32.totalorder %s33, 0
      %p378 = por %p376, %p377
      %p379 = scmp.ne.s32.totalorder %s365, %s366
      %p380 = scmp.eq.s32.totalorder %s34, 1
      %p381 = por %p379, %p380
      %p383 = scmp.ne.s32.totalorder %s366, %s382
      %p384 = scmp.eq.s32.totalorder %s34, 0
      %p385 = por %p383, %p384
      %s386 = ssub.s32 %s36, %s43
      %p387 = scmp.eq.s32.totalorder %s386, 0
      %s389 = sadd.s32 %s388, 1
      %s390 = scalar_select %p387, %s388, %s389
      %p393 = pneg %p387
      %p394 = scmp.eq.s32.totalorder %s28, 1
      %p395 = por %p393, %p394
      %p396 = scmp.ne.s32.totalorder %s388, %s391
      %p397 = scmp.eq.s32.totalorder %s28, 0
      %p398 = por %p396, %p397
      %p399 = scmp.ne.s32.totalorder %s388, %s391
      %p400 = scmp.eq.s32.totalorder %s33, 1
      %p401 = por %p399, %p400
      %p402 = scmp.ne.s32.totalorder %s391, %s392
      %p403 = scmp.eq.s32.totalorder %s33, 0
      %p404 = por %p402, %p403
      %p405 = scmp.ne.s32.totalorder %s391, %s392
      %p406 = scmp.eq.s32.totalorder %s34, 1
      %p407 = por %p405, %p406
      %p409 = scmp.ne.s32.totalorder %s392, %s408
      %p410 = scmp.eq.s32.totalorder %s34, 0
      %p411 = por %p409, %p410
      %s412 = ssub.s32 %s36, %s43
      %p413 = scmp.eq.s32.totalorder %s412, 0
      %s415 = sadd.s32 %s414, 1
      %s416 = scalar_select %p413, %s414, %s415
      %p419 = pneg %p413
      %p420 = scmp.eq.s32.totalorder %s28, 1
      %p421 = por %p419, %p420
      %p422 = scmp.ne.s32.totalorder %s414, %s417
      %p423 = scmp.eq.s32.totalorder %s28, 0
      %p424 = por %p422, %p423
      %p425 = scmp.ne.s32.totalorder %s414, %s417
      %p426 = scmp.eq.s32.totalorder %s33, 1
      %p427 = por %p425, %p426
      %p428 = scmp.ne.s32.totalorder %s417, %s418
      %p429 = scmp.eq.s32.totalorder %s33, 0
      %p430 = por %p428, %p429
      %p431 = scmp.ne.s32.totalorder %s417, %s418
      %p432 = scmp.eq.s32.totalorder %s34, 1
      %p433 = por %p431, %p432
      %p435 = scmp.ne.s32.totalorder %s418, %s434
      %p436 = scmp.eq.s32.totalorder %s34, 0
      %p437 = por %p435, %p436
      %s438 = ssub.s32 %s36, %s43
      %p439 = scmp.eq.s32.totalorder %s438, 0
      %s441 = sadd.s32 %s440, 1
      %s442 = scalar_select %p439, %s440, %s441
      %p445 = pneg %p439
      %p446 = scmp.eq.s32.totalorder %s28, 1
      %p447 = por %p445, %p446
      %p448 = scmp.ne.s32.totalorder %s440, %s443
      %p449 = scmp.eq.s32.totalorder %s28, 0
      %p450 = por %p448, %p449
      %p451 = scmp.ne.s32.totalorder %s440, %s443
      %p452 = scmp.eq.s32.totalorder %s33, 1
      %p453 = por %p451, %p452
      %p454 = scmp.ne.s32.totalorder %s443, %s444
      %p455 = scmp.eq.s32.totalorder %s33, 0
      %p456 = por %p454, %p455
      %p457 = scmp.ne.s32.totalorder %s443, %s444
      %p458 = scmp.eq.s32.totalorder %s34, 1
      %p459 = por %p457, %p458
      %p461 = scmp.ne.s32.totalorder %s444, %s460
      %p462 = scmp.eq.s32.totalorder %s34, 0
      %p463 = por %p461, %p462
      %s464 = ssub.s32 %s36, %s43
      %p465 = scmp.eq.s32.totalorder %s464, 0
      %s467 = sadd.s32 %s466, 1
      %s468 = scalar_select %p465, %s466, %s467
      %p471 = pneg %p465
      %p472 = scmp.eq.s32.totalorder %s28, 1
      %p473 = por %p471, %p472
      %p474 = scmp.ne.s32.totalorder %s466, %s469
      %p475 = scmp.eq.s32.totalorder %s28, 0
      %p476 = por %p474, %p475
      %p477 = scmp.ne.s32.totalorder %s466, %s469
      %p478 = scmp.eq.s32.totalorder %s33, 1
      %p479 = por %p477, %p478
      %p480 = scmp.ne.s32.totalorder %s469, %s470
      %p481 = scmp.eq.s32.totalorder %s33, 0
      %p482 = por %p480, %p481
      %p483 = scmp.ne.s32.totalorder %s469, %s470
      %p484 = scmp.eq.s32.totalorder %s34, 1
      %p485 = por %p483, %p484
      %p487 = scmp.ne.s32.totalorder %s470, %s486
      %p488 = scmp.eq.s32.totalorder %s34, 0
      %p489 = por %p487, %p488
      %s490 = ssub.s32 %s35, %s47
      %p491 = scmp.eq.s32.totalorder %s490, 0
      %s493 = sadd.s32 %s492, 1
      %s494 = scalar_select %p491, %s492, %s493
      %p497 = pneg %p491
      %p498 = scmp.eq.s32.totalorder %s28, 1
      %p499 = por %p497, %p498
      %p500 = scmp.ne.s32.totalorder %s492, %s495
      %p501 = scmp.eq.s32.totalorder %s28, 0
      %p502 = por %p500, %p501
      %p503 = scmp.ne.s32.totalorder %s492, %s495
      %p504 = scmp.eq.s32.totalorder %s33, 1
      %p505 = por %p503, %p504
      %p506 = scmp.ne.s32.totalorder %s495, %s496
      %p507 = scmp.eq.s32.totalorder %s33, 0
      %p508 = por %p506, %p507
      %p509 = scmp.ne.s32.totalorder %s495, %s496
      %p510 = scmp.eq.s32.totalorder %s34, 1
      %p511 = por %p509, %p510
      %p513 = scmp.ne.s32.totalorder %s496, %s512
      %p514 = scmp.eq.s32.totalorder %s34, 0
      %p515 = por %p513, %p514
      %p516 = scmp.le.s32.totalorder 1, %s28
      %p517 = scmp.lt.s32.totalorder %s28, 3
      %p518 = pnand %p516, %p517
      %p519 = pneg %p518
      // Predicated region
      $region9: #{tpu_custom_call.1} parent=5 // pred_check
        _
      $region10: #{tpu_custom_call.1} parent=5 // pred_check_branch
        %521 = sbr.rel (%p518) target = $region12
      $region11: #{tpu_custom_call.1} parent=5 // pred_region
        %s522 = ssub.s32 %s28, 1
        // Predicated region
        $region13: #{tpu_custom_call.1} parent=11 // pred_check
          %p523 = pneg %p66
        $region14: #{tpu_custom_call.1} parent=11 // pred_check_branch
          %525 = sbr.rel (%p523) target = $region16
        $region15: #{tpu_custom_call.1} parent=11 // pred_region
          %s526 = smul.u32 2, %s37
          %s528 = ssub.s32 256, 256
          %529 = vsyncadd [#allocation4], %s528
          %s530 = smul.addr %s526, 128
          %s531 = scalar_lea.hbm %s0, %s530
          %s532 = sshll.u32 [#allocation3], 4
          %s533 = int_to_ptr.vmem [resolvable:$true] %s532
          %538 = dma.hbm_to_vmem [thread:$0]  %s531, 256, %s533, [#allocation4], 128, 128, 8
        $region16: #{tpu_custom_call.1} parent=11 // pred_fallthru
          _
      $region12: #{tpu_custom_call.1} parent=5 // pred_fallthru
        _
      %p539 = scmp.lt.s32.totalorder %s28, 2
      // Predicated region
      $region17: #{tpu_custom_call.1} parent=5 // pred_check
        %p540 = pneg %p539
      $region18: #{tpu_custom_call.1} parent=5 // pred_check_branch
        %542 = sbr.rel (%p540) target = $region20
      $region19: #{tpu_custom_call.1} parent=5 // pred_region
        // Predicated region
        $region21: #{tpu_custom_call.1} parent=19 // pred_check
          %p543 = pneg %p86
        $region22: #{tpu_custom_call.1} parent=19 // pred_check_branch
          %545 = sbr.rel (%p543) target = $region24
        $region23: #{tpu_custom_call.1} parent=19 // pred_region
          %p546 = scmp.lt.s32.totalorder %s36, 1
          %s547 = scalar_select %p546, %s36, 1
          %s548 = smul.addr %s547, 4
          %s549 = smul.addr %s548, 8
          %s550 = scalar_lea.vmem %s1, %s549
        $region24: #{tpu_custom_call.1} parent=19 // pred_fallthru
          _
        // Predicated region
        $region25: #{tpu_custom_call.1} parent=19 // pred_check
          %p551 = pneg %p112
        $region26: #{tpu_custom_call.1} parent=19 // pred_check_branch
          %553 = sbr.rel (%p551) target = $region28
        $region27: #{tpu_custom_call.1} parent=19 // pred_region
          %p554 = scmp.lt.s32.totalorder %s36, 1
          %s555 = scalar_select %p554, %s36, 1
          %s556 = scalar_lea.vmem %s2, %s555
        $region28: #{tpu_custom_call.1} parent=19 // pred_fallthru
          _
        // Predicated region
        $region29: #{tpu_custom_call.1} parent=19 // pred_check
          %p557 = pneg %p138
        $region30: #{tpu_custom_call.1} parent=19 // pred_check_branch
          %559 = sbr.rel (%p557) target = $region32
        $region31: #{tpu_custom_call.1} parent=19 // pred_region
          %p560 = scmp.lt.s32.totalorder %s36, 1
          %s561 = scalar_select %p560, %s36, 1
          %s562 = smul.addr %s561, 4
          %s563 = smul.addr %s562, 8
          %s564 = scalar_lea.vmem %s3, %s563
        $region32: #{tpu_custom_call.1} parent=19 // pred_fallthru
          _
        // Predicated region
        $region33: #{tpu_custom_call.1} parent=19 // pred_check
          %p565 = pneg %p164
        $region34: #{tpu_custom_call.1} parent=19 // pred_check_branch
          %567 = sbr.rel (%p565) target = $region36
        $region35: #{tpu_custom_call.1} parent=19 // pred_region
          %p568 = scmp.lt.s32.totalorder %s36, 1
          %s569 = scalar_select %p568, %s36, 1
          %s570 = scalar_lea.vmem %s4, %s569
        $region36: #{tpu_custom_call.1} parent=19 // pred_fallthru
          _
        // Predicated region
        $region37: #{tpu_custom_call.1} parent=19 // pred_check
          %p571 = pneg %p190
        $region38: #{tpu_custom_call.1} parent=19 // pred_check_branch
          %573 = sbr.rel (%p571) target = $region40
        $region39: #{tpu_custom_call.1} parent=19 // pred_region
          %p574 = scmp.lt.s32.totalorder %s36, 1
          %s575 = scalar_select %p574, %s36, 1
          %s576 = smul.addr %s575, 4
          %s577 = smul.addr %s576, 8
          %s578 = scalar_lea.vmem %s5, %s577
        $region40: #{tpu_custom_call.1} parent=19 // pred_fallthru
          _
        // Predicated region
        $region41: #{tpu_custom_call.1} parent=19 // pred_check
          %p579 = pneg %p216
        $region42: #{tpu_custom_call.1} parent=19 // pred_check_branch
          %581 = sbr.rel (%p579) target = $region44
        $region43: #{tpu_custom_call.1} parent=19 // pred_region
          %p582 = scmp.lt.s32.totalorder %s36, 1
          %s583 = scalar_select %p582, %s36, 1
          %s584 = scalar_lea.vmem %s6, %s583
        $region44: #{tpu_custom_call.1} parent=19 // pred_fallthru
          _
        // Predicated region
        $region45: #{tpu_custom_call.1} parent=19 // pred_check
          %p585 = pneg %p242
        $region46: #{tpu_custom_call.1} parent=19 // pred_check_branch
          %587 = sbr.rel (%p585) target = $region48
        $region47: #{tpu_custom_call.1} parent=19 // pred_region
          %s588 = sand.u32 %s28, 1
          %s589 = scalar_lea.sflag [#allocation7], %s588
          %s590 = sand.u32 %s232, 1
          %s591 = smul.addr %s590, 32
          %s592 = scalar_lea.vmem [#allocation6], %s591
          %s594 = ssub.s32 512, 512
          %595 = vsyncadd %s589, %s594
          %s596 = smul.addr %s36, 4
          %s597 = smul.addr %s596, 128
          %s598 = scalar_lea.hbm %s7, %s597
          %s599 = sshll.u32 %s592, 4
          %s600 = int_to_ptr.vmem [resolvable:$true] %s599
          %605 = dma.hbm_to_vmem [thread:$0]  %s598, 512, %s600, %s589, 128, 128, 8
        $region48: #{tpu_custom_call.1} parent=19 // pred_fallthru
          _
        // Predicated region
        $region49: #{tpu_custom_call.1} parent=19 // pred_check
          %p606 = pneg %p268
        $region50: #{tpu_custom_call.1} parent=19 // pred_check_branch
          %608 = sbr.rel (%p606) target = $region52
        $region51: #{tpu_custom_call.1} parent=19 // pred_region
          %p609 = scmp.lt.s32.totalorder %s36, 1
          %s610 = scalar_select %p609, %s36, 1
          %s611 = scalar_lea.vmem %s8, %s610
        $region52: #{tpu_custom_call.1} parent=19 // pred_fallthru
          _
        // Predicated region
        $region53: #{tpu_custom_call.1} parent=19 // pred_check
          %p612 = pneg %p294
        $region54: #{tpu_custom_call.1} parent=19 // pred_check_branch
          %614 = sbr.rel (%p612) target = $region56
        $region55: #{tpu_custom_call.1} parent=19 // pred_region
          %p615 = scmp.lt.s32.totalorder %s36, 1
          %s616 = scalar_select %p615, %s36, 1
          %s617 = scalar_lea.vmem %s9, %s616
        $region56: #{tpu_custom_call.1} parent=19 // pred_fallthru
          _
        // Predicated region
        $region57: #{tpu_custom_call.1} parent=19 // pred_check
          %p618 = pneg %p320
        $region58: #{tpu_custom_call.1} parent=19 // pred_check_branch
          %620 = sbr.rel (%p618) target = $region60
        $region59: #{tpu_custom_call.1} parent=19 // pred_region
          %p621 = scmp.lt.s32.totalorder %s36, 1
          %s622 = scalar_select %p621, %s36, 1
          %s623 = scalar_lea.vmem %s10, %s622
        $region60: #{tpu_custom_call.1} parent=19 // pred_fallthru
          _
        // Predicated region
        $region61: #{tpu_custom_call.1} parent=19 // pred_check
          %p624 = pneg %p346
        $region62: #{tpu_custom_call.1} parent=19 // pred_check_branch
          %626 = sbr.rel (%p624) target = $region64
        $region63: #{tpu_custom_call.1} parent=19 // pred_region
          %s627 = sand.u32 %s28, 1
          %s628 = scalar_lea.sflag [#allocation7], %s627
          %s629 = sand.u32 %s336, 1
          %s630 = smul.addr %s629, 32
          %s631 = scalar_lea.vmem [#allocation8], %s630
          %s633 = ssub.s32 512, 512
          %634 = vsyncadd %s628, %s633
          %s635 = smul.addr %s36, 4
          %s636 = smul.addr %s635, 128
          %s637 = scalar_lea.hbm %s11, %s636
          %s638 = sshll.u32 %s631, 4
          %s639 = int_to_ptr.vmem [resolvable:$true] %s638
          %644 = dma.hbm_to_vmem [thread:$0]  %s637, 512, %s639, %s628, 128, 128, 8
        $region64: #{tpu_custom_call.1} parent=19 // pred_fallthru
          _
        // Predicated region
        $region65: #{tpu_custom_call.1} parent=19 // pred_check
          %p645 = pneg %p372
        $region66: #{tpu_custom_call.1} parent=19 // pred_check_branch
          %647 = sbr.rel (%p645) target = $region68
        $region67: #{tpu_custom_call.1} parent=19 // pred_region
          %p648 = scmp.lt.s32.totalorder %s36, 1
          %s649 = scalar_select %p648, %s36, 1
          %s650 = scalar_lea.vmem %s12, %s649
        $region68: #{tpu_custom_call.1} parent=19 // pred_fallthru
          _
        // Predicated region
        $region69: #{tpu_custom_call.1} parent=19 // pred_check
          %p651 = pneg %p398
        $region70: #{tpu_custom_call.1} parent=19 // pred_check_branch
          %653 = sbr.rel (%p651) target = $region72
        $region71: #{tpu_custom_call.1} parent=19 // pred_region
          %p654 = scmp.lt.s32.totalorder %s36, 1
          %s655 = scalar_select %p654, %s36, 1
          %s656 = smul.addr %s655, 8
          %s657 = smul.addr %s656, 8
          %s658 = scalar_lea.vmem %s13, %s657
        $region72: #{tpu_custom_call.1} parent=19 // pred_fallthru
          _
        // Predicated region
        $region73: #{tpu_custom_call.1} parent=19 // pred_check
          %p659 = pneg %p424
        $region74: #{tpu_custom_call.1} parent=19 // pred_check_branch
          %661 = sbr.rel (%p659) target = $region76
        $region75: #{tpu_custom_call.1} parent=19 // pred_region
          %p662 = scmp.lt.s32.totalorder %s36, 1
          %s663 = scalar_select %p662, %s36, 1
          %s664 = scalar_lea.vmem %s14, %s663
        $region76: #{tpu_custom_call.1} parent=19 // pred_fallthru
          _
        // Predicated region
        $region77: #{tpu_custom_call.1} parent=19 // pred_check
          %p665 = pneg %p450
        $region78: #{tpu_custom_call.1} parent=19 // pred_check_branch
          %667 = sbr.rel (%p665) target = $region80
        $region79: #{tpu_custom_call.1} parent=19 // pred_region
          %p668 = scmp.lt.s32.totalorder %s36, 1
          %s669 = scalar_select %p668, %s36, 1
          %s670 = scalar_lea.vmem %s15, %s669
        $region80: #{tpu_custom_call.1} parent=19 // pred_fallthru
          _
        // Predicated region
        $region81: #{tpu_custom_call.1} parent=19 // pred_check
          %p671 = pneg %p476
        $region82: #{tpu_custom_call.1} parent=19 // pred_check_branch
          %673 = sbr.rel (%p671) target = $region84
        $region83: #{tpu_custom_call.1} parent=19 // pred_region
          %p674 = scmp.lt.s32.totalorder %s36, 1
          %s675 = scalar_select %p674, %s36, 1
          %s676 = scalar_lea.vmem %s16, %s675
        $region84: #{tpu_custom_call.1} parent=19 // pred_fallthru
          _
      $region20: #{tpu_custom_call.1} parent=5 // pred_fallthru
        _
      %p677 = scmp.le.s32.totalorder 1, %s28
      %p678 = scmp.lt.s32.totalorder %s28, 3
      %p679 = pnand %p677, %p678
      %p680 = pneg %p679
      // Predicated region
      $region85: #{tpu_custom_call.1} parent=5 // pred_check
        _
      $region86: #{tpu_custom_call.1} parent=5 // pred_check_branch
        %682 = sbr.rel (%p679) target = $region88
      $region87: #{tpu_custom_call.1} parent=5 // pred_region
        %s683 = ssub.s32 %s28, 1
        // Predicated region
        $region89: #{tpu_custom_call.1} parent=87 // pred_check
          %p684 = pneg %p66
        $region90: #{tpu_custom_call.1} parent=87 // pred_check_branch
          %686 = sbr.rel (%p684) target = $region92
        $region91: #{tpu_custom_call.1} parent=87 // pred_region
          %687 = dma.done [#allocation4], 256
        $region92: #{tpu_custom_call.1} parent=87 // pred_fallthru
          _
        %s688 = sand.u32 %s33, 1
        %s689 = scalar_lea.sflag [#allocation7], %s688
        %s690 = sand.u32 %s235, 1
        %s691 = smul.addr %s690, 32
        %s692 = scalar_lea.vmem [#allocation6], %s691
        // Predicated region
        $region93: #{tpu_custom_call.1} parent=87 // pred_check
          %p693 = pneg %p248
        $region94: #{tpu_custom_call.1} parent=87 // pred_check_branch
          %695 = sbr.rel (%p693) target = $region96
        $region95: #{tpu_custom_call.1} parent=87 // pred_region
          %696 = dma.done %s689, 512
        $region96: #{tpu_custom_call.1} parent=87 // pred_fallthru
          _
        %s697 = sand.u32 %s33, 1
        %s698 = scalar_lea.sflag [#allocation7], %s697
        %s699 = sand.u32 %s339, 1
        %s700 = smul.addr %s699, 32
        %s701 = scalar_lea.vmem [#allocation8], %s700
        // Predicated region
        $region97: #{tpu_custom_call.1} parent=87 // pred_check
          %p702 = pneg %p352
        $region98: #{tpu_custom_call.1} parent=87 // pred_check_branch
          %704 = sbr.rel (%p702) target = $region100
        $region99: #{tpu_custom_call.1} parent=87 // pred_region
          %705 = dma.done %s698, 512
        $region100: #{tpu_custom_call.1} parent=87 // pred_fallthru
          _
        %p706 = pneg %p66
        %p707 = pneg %p63
        %p708 = scmp.lt.s32.totalorder %s38, 1
        %s709 = scalar_select %p708, %s38, 1
        %s710 = smul.addr %s709, 4
        %s711 = smul.addr %s710, 8
        %s712 = scalar_lea.vmem %s1, %s711
        %p713 = pneg %p92
        %p714 = pneg %p89
        %p715 = scmp.lt.s32.totalorder %s38, 1
        %s716 = scalar_select %p715, %s38, 1
        %s717 = scalar_lea.vmem %s2, %s716
        %p718 = pneg %p118
        %p719 = pneg %p115
        %p720 = scmp.lt.s32.totalorder %s38, 1
        %s721 = scalar_select %p720, %s38, 1
        %s722 = smul.addr %s721, 4
        %s723 = smul.addr %s722, 8
        %s724 = scalar_lea.vmem %s3, %s723
        %p725 = pneg %p144
        %p726 = pneg %p141
        %p727 = scmp.lt.s32.totalorder %s38, 1
        %s728 = scalar_select %p727, %s38, 1
        %s729 = scalar_lea.vmem %s4, %s728
        %p730 = pneg %p170
        %p731 = pneg %p167
        %p732 = scmp.lt.s32.totalorder %s38, 1
        %s733 = scalar_select %p732, %s38, 1
        %s734 = smul.addr %s733, 4
        %s735 = smul.addr %s734, 8
        %s736 = scalar_lea.vmem %s5, %s735
        %p737 = pneg %p196
        %p738 = pneg %p193
        %p739 = scmp.lt.s32.totalorder %s38, 1
        %s740 = scalar_select %p739, %s38, 1
        %s741 = scalar_lea.vmem %s6, %s740
        %p742 = pneg %p222
        %p743 = pneg %p219
        %s744 = sand.u32 %s33, 1
        %s745 = scalar_lea.sflag [#allocation7], %s744
        %s746 = sand.u32 %s235, 1
        %s747 = smul.addr %s746, 32
        %s748 = scalar_lea.vmem [#allocation6], %s747
        %p749 = pneg %p248
        %p750 = pneg %p245
        %p751 = scmp.lt.s32.totalorder %s38, 1
        %s752 = scalar_select %p751, %s38, 1
        %s753 = scalar_lea.vmem %s8, %s752
        %p754 = pneg %p274
        %p755 = pneg %p271
        %p756 = scmp.lt.s32.totalorder %s38, 1
        %s757 = scalar_select %p756, %s38, 1
        %s758 = scalar_lea.vmem %s9, %s757
        %p759 = pneg %p300
        %p760 = pneg %p297
        %p761 = scmp.lt.s32.totalorder %s38, 1
        %s762 = scalar_select %p761, %s38, 1
        %s763 = scalar_lea.vmem %s10, %s762
        %p764 = pneg %p326
        %p765 = pneg %p323
        %s766 = sand.u32 %s33, 1
        %s767 = scalar_lea.sflag [#allocation7], %s766
        %s768 = sand.u32 %s339, 1
        %s769 = smul.addr %s768, 32
        %s770 = scalar_lea.vmem [#allocation8], %s769
        %p771 = pneg %p352
        %p772 = pneg %p349
        %p773 = scmp.lt.s32.totalorder %s38, 1
        %s774 = scalar_select %p773, %s38, 1
        %s775 = scalar_lea.vmem %s12, %s774
        %p776 = pneg %p378
        %p777 = pneg %p375
        %p778 = scmp.lt.s32.totalorder %s38, 1
        %s779 = scalar_select %p778, %s38, 1
        %s780 = smul.addr %s779, 8
        %s781 = smul.addr %s780, 8
        %s782 = scalar_lea.vmem %s13, %s781
        %p783 = pneg %p404
        %p784 = pneg %p401
        %p785 = scmp.lt.s32.totalorder %s38, 1
        %s786 = scalar_select %p785, %s38, 1
        %s787 = scalar_lea.vmem %s14, %s786
        %p788 = pneg %p430
        %p789 = pneg %p427
        %p790 = scmp.lt.s32.totalorder %s38, 1
        %s791 = scalar_select %p790, %s38, 1
        %s792 = scalar_lea.vmem %s15, %s791
        %p793 = pneg %p456
        %p794 = pneg %p453
        %p795 = scmp.lt.s32.totalorder %s38, 1
        %s796 = scalar_select %p795, %s38, 1
        %s797 = scalar_lea.vmem %s16, %s796
        %p798 = pneg %p482
        %p799 = pneg %p479
        %p800 = pneg %p508
        %p801 = pneg %p505
        %s802 = smul.u32 2, %s37
        %p803 = scmp.lt.s32.totalorder %s38, 1
        %s804 = scalar_select %p803, %s38, 1
        %s805 = smul.addr %s804, 4
        %s806 = smul.addr %s805, 8
        %s807 = scalar_lea.vmem %s1, %s806
        %p808 = scmp.lt.s32.totalorder %s38, 1
        %s809 = scalar_select %p808, %s38, 1
        %s810 = scalar_lea.vmem %s2, %s809
        %p811 = scmp.lt.s32.totalorder %s38, 1
        %s812 = scalar_select %p811, %s38, 1
        %s813 = smul.addr %s812, 4
        %s814 = smul.addr %s813, 8
        %s815 = scalar_lea.vmem %s3, %s814
        %p816 = scmp.lt.s32.totalorder %s38, 1
        %s817 = scalar_select %p816, %s38, 1
        %s818 = scalar_lea.vmem %s4, %s817
        %p819 = scmp.lt.s32.totalorder %s38, 1
        %s820 = scalar_select %p819, %s38, 1
        %s821 = smul.addr %s820, 4
        %s822 = smul.addr %s821, 8
        %s823 = scalar_lea.vmem %s5, %s822
        %p824 = scmp.lt.s32.totalorder %s38, 1
        %s825 = scalar_select %p824, %s38, 1
        %s826 = scalar_lea.vmem %s6, %s825
        %p827 = scmp.lt.s32.totalorder %s38, 1
        %s828 = scalar_select %p827, %s38, 1
        %s829 = scalar_lea.vmem %s8, %s828
        %p830 = scmp.lt.s32.totalorder %s38, 1
        %s831 = scalar_select %p830, %s38, 1
        %s832 = scalar_lea.vmem %s9, %s831
        %p833 = scmp.lt.s32.totalorder %s38, 1
        %s834 = scalar_select %p833, %s38, 1
        %s835 = scalar_lea.vmem %s10, %s834
        %p836 = scmp.lt.s32.totalorder %s38, 1
        %s837 = scalar_select %p836, %s38, 1
        %s838 = scalar_lea.vmem %s12, %s837
        %p839 = scmp.lt.s32.totalorder %s38, 1
        %s840 = scalar_select %p839, %s38, 1
        %s841 = smul.addr %s840, 8
        %s842 = smul.addr %s841, 8
        %s843 = scalar_lea.vmem %s13, %s842
        %p844 = scmp.lt.s32.totalorder %s38, 1
        %s845 = scalar_select %p844, %s38, 1
        %s846 = scalar_lea.vmem %s14, %s845
        %p847 = scmp.lt.s32.totalorder %s38, 1
        %s848 = scalar_select %p847, %s38, 1
        %s849 = scalar_lea.vmem %s15, %s848
        %p850 = scmp.lt.s32.totalorder %s38, 1
        %s851 = scalar_select %p850, %s38, 1
        %s852 = scalar_lea.vmem %s16, %s851
        %p853 = scmp.eq.s32.totalorder %s38, 0
        // Predicated region
        $region101: #{tpu_custom_call.1} parent=87 // pred_check
          %p854 = pneg %p853
        $region102: #{tpu_custom_call.1} parent=87 // pred_check_branch
          %856 = sbr.rel (%p854) target = $region104
        $region103: #{tpu_custom_call.1} parent=87 // pred_region
          %v857 = vld [vmem:[#allocation3] sm:$0xff]
          %v858 = vld [vmem:[#allocation3 + $0x8] sm:$0xff]
          %vm859 = vcmask 261120
          %860 = vst.msk [vmem:[#allocation2] sm:$0xff] %vm859, %v857
          %861 = vst.msk [vmem:[#allocation2 + $0x8] sm:$0xff] %vm859, %v858
        $region104: #{tpu_custom_call.1} parent=87 // pred_fallthru
          _
        %v862 = vld [vmem:[#allocation2] sm:$0xff]
        %v863 = vld [vmem:[#allocation2 + $0x8] sm:$0xff]
        %v864 = vld [vmem:[%s807] sm:$0xff]
        %v865 = vld [vmem:[%s807 + $0x8] sm:$0xff]
        %v866 = vld [vmem:[%s807 + $0x10] sm:$0xff]
        %v867 = vld [vmem:[%s807 + $0x18] sm:$0xff]
        %v868 = vld [vmem:[%s810] sm:$0x1]
        %v870 = vlaneseq
        %v871 = vshrl.u32 %v870, 7
        %v872 = vsub.s32 0, %v871
        %v873 = vrot.slane %v868, %v872
        %vm875 = vcmask 261120
        %v877 = vsel %vm875, %v862, 0
        %v880 = vsel %vm875, %v863, 0
        %882 = vmatprep.subr.mxu0 0.0
        %883 = vmatpush1.msra.mxu0 0.0
        %884 = vmatprep.subr.mxu0 0.0
        %885 = vmatpush1.msra.mxu0 0.0
        %886 = vmatprep.subr.mxu0 0.0
        %887 = vmatpush1.msra.mxu0 0.0
        %888 = vmatprep.subr.mxu0 0.0
        %889 = vmatpush1.msra.mxu0 0.0
        %890 = vmatprep.subr.mxu0 0.0
        %891 = vmatpush1.msra.mxu0 0.0
        %892 = vmatprep.subr.mxu0 0.0
        %893 = vmatpush1.msra.mxu0 0.0
        %894 = vmatprep.subr.mxu0 0.0
        %895 = vmatpush1.msra.mxu0 0.0
        %896 = vmatprep.subr.mxu0 0.0
        %897 = vmatpush1.msra.mxu0 0.0
        %898 = vmatprep.subr.mxu0 0.0
        %899 = vmatpush1.msra.mxu0 0.0
        %900 = vmatprep.subr.mxu0 0.0
        %901 = vmatpush1.msra.mxu0 0.0
        %902 = vmatprep.subr.mxu0 0.0
        %903 = vmatpush1.msra.mxu0 0.0
        %904 = vmatprep.subr.mxu0 0.0
        %905 = vmatpush1.msra.mxu0 0.0
        %906 = vmatprep.subr.mxu0 0.0
        %907 = vmatpush1.msra.mxu0 %v867
        %908 = vmatprep.subr.mxu0 0.0
        %909 = vmatpush1.msra.mxu0 %v866
        %910 = vmatprep.subr.mxu0 0.0
        %911 = vmatpush1.msra.mxu0 %v865
        %912 = vmatprep.subr.mxu0 0.0
        %913 = vmatpush1.msra.mxu0 %v864
        %914 = vmatprep.subr.mxu0 0.0
        %915 = vmatpush2.msra.mxu0 0.0
        %916 = vmatprep.subr.mxu0 0.0
        %917 = vmatpush2.msra.mxu0 0.0
        %918 = vmatprep.subr.mxu0 0.0
        %919 = vmatpush2.msra.mxu0 0.0
        %920 = vmatprep.subr.mxu0 0.0
        %921 = vmatpush2.msra.mxu0 0.0
        %922 = vmatprep.subr.mxu0 0.0
        %923 = vmatpush2.msra.mxu0 0.0
        %924 = vmatprep.subr.mxu0 0.0
        %925 = vmatpush2.msra.mxu0 0.0
        %926 = vmatprep.subr.mxu0 0.0
        %927 = vmatpush2.msra.mxu0 0.0
        %928 = vmatprep.subr.mxu0 0.0
        %929 = vmatpush2.msra.mxu0 0.0
        %930 = vmatprep.subr.mxu0 0.0
        %931 = vmatpush2.msra.mxu0 0.0
        %932 = vmatprep.subr.mxu0 0.0
        %933 = vmatpush2.msra.mxu0 0.0
        %934 = vmatprep.subr.mxu0 0.0
        %935 = vmatpush2.msra.mxu0 0.0
        %936 = vmatprep.subr.mxu0 0.0
        %937 = vmatpush2.msra.mxu0 0.0
        %938 = vmatprep.subr.mxu0 0.0
        %939 = vmatpush2.msra.mxu0 0.0
        %940 = vmatprep.subr.mxu0 0.0
        %941 = vmatpush2.msra.mxu0 0.0
        %942 = vmatprep.subr.mxu0 0.0
        %943 = vmatpush2.msra.mxu0 0.0
        %944 = vmatprep.subr.mxu0 0.0
        %945 = vmatpush2.msra.mxu0 0.0
        %946 = vmatprep.mubr.f32.mxu0 0.0
        %947 = vmatmul.mubr.f32.gmra.mxu0 %v877
        %v948 = vpop.f32.mrf.mxu0
        %v949 = vadd.f32 %v873, %v948
        %v950 = vpop.f32.mrf.mxu0
        %951 = vmatprep.mubr.f32.mxu0 0.0
        %952 = vmatmul.mubr.f32.gmra.mxu0 %v880
        %v953 = vpop.f32.mrf.mxu0
        %v954 = vadd.f32 %v873, %v953
        %v955 = vpop.f32.mrf.mxu0
        %956 = vdwg.mxu0
        %v957 = vld [vmem:[%s815] sm:$0xff]
        %v958 = vld [vmem:[%s815 + $0x8] sm:$0xff]
        %v959 = vld [vmem:[%s815 + $0x10] sm:$0xff]
        %v960 = vld [vmem:[%s815 + $0x18] sm:$0xff]
        %v961 = vld [vmem:[%s818] sm:$0x1]
        %v963 = vlaneseq
        %v964 = vshrl.u32 %v963, 7
        %v965 = vsub.s32 0, %v964
        %v966 = vrot.slane %v961, %v965
        %968 = vmatprep.subr.mxu0 0.0
        %969 = vmatpush1.msra.mxu0 0.0
        %970 = vmatprep.subr.mxu0 0.0
        %971 = vmatpush1.msra.mxu0 0.0
        %972 = vmatprep.subr.mxu0 0.0
        %973 = vmatpush1.msra.mxu0 0.0
        %974 = vmatprep.subr.mxu0 0.0
        %975 = vmatpush1.msra.mxu0 0.0
        %976 = vmatprep.subr.mxu0 0.0
        %977 = vmatpush1.msra.mxu0 0.0
        %978 = vmatprep.subr.mxu0 0.0
        %979 = vmatpush1.msra.mxu0 0.0
        %980 = vmatprep.subr.mxu0 0.0
        %981 = vmatpush1.msra.mxu0 0.0
        %982 = vmatprep.subr.mxu0 0.0
        %983 = vmatpush1.msra.mxu0 0.0
        %984 = vmatprep.subr.mxu0 0.0
        %985 = vmatpush1.msra.mxu0 0.0
        %986 = vmatprep.subr.mxu0 0.0
        %987 = vmatpush1.msra.mxu0 0.0
        %988 = vmatprep.subr.mxu0 0.0
        %989 = vmatpush1.msra.mxu0 0.0
        %990 = vmatprep.subr.mxu0 0.0
        %991 = vmatpush1.msra.mxu0 0.0
        %992 = vmatprep.subr.mxu0 0.0
        %993 = vmatpush1.msra.mxu0 %v960
        %994 = vmatprep.subr.mxu0 0.0
        %995 = vmatpush1.msra.mxu0 %v959
        %996 = vmatprep.subr.mxu0 0.0
        %997 = vmatpush1.msra.mxu0 %v958
        %998 = vmatprep.subr.mxu0 0.0
        %999 = vmatpush1.msra.mxu0 %v957
        %1000 = vmatprep.subr.mxu0 0.0
        %1001 = vmatpush2.msra.mxu0 0.0
        %1002 = vmatprep.subr.mxu0 0.0
        %1003 = vmatpush2.msra.mxu0 0.0
        %1004 = vmatprep.subr.mxu0 0.0
        %1005 = vmatpush2.msra.mxu0 0.0
        %1006 = vmatprep.subr.mxu0 0.0
        %1007 = vmatpush2.msra.mxu0 0.0
        %1008 = vmatprep.subr.mxu0 0.0
        %1009 = vmatpush2.msra.mxu0 0.0
        %1010 = vmatprep.subr.mxu0 0.0
        %1011 = vmatpush2.msra.mxu0 0.0
        %1012 = vmatprep.subr.mxu0 0.0
        %1013 = vmatpush2.msra.mxu0 0.0
        %1014 = vmatprep.subr.mxu0 0.0
        %1015 = vmatpush2.msra.mxu0 0.0
        %1016 = vmatprep.subr.mxu0 0.0
        %1017 = vmatpush2.msra.mxu0 0.0
        %1018 = vmatprep.subr.mxu0 0.0
        %1019 = vmatpush2.msra.mxu0 0.0
        %1020 = vmatprep.subr.mxu0 0.0
        %1021 = vmatpush2.msra.mxu0 0.0
        %1022 = vmatprep.subr.mxu0 0.0
        %1023 = vmatpush2.msra.mxu0 0.0
        %1024 = vmatprep.subr.mxu0 0.0
        %1025 = vmatpush2.msra.mxu0 0.0
        %1026 = vmatprep.subr.mxu0 0.0
        %1027 = vmatpush2.msra.mxu0 0.0
        %1028 = vmatprep.subr.mxu0 0.0
        %1029 = vmatpush2.msra.mxu0 0.0
        %1030 = vmatprep.subr.mxu0 0.0
        %1031 = vmatpush2.msra.mxu0 0.0
        %1032 = vmatprep.mubr.f32.mxu0 0.0
        %1033 = vmatmul.mubr.f32.gmra.mxu0 %v877
        %v1034 = vpop.f32.mrf.mxu0
        %v1035 = vadd.f32 %v966, %v1034
        %v1036 = vpop.f32.mrf.mxu0
        %1037 = vmatprep.mubr.f32.mxu0 0.0
        %1038 = vmatmul.mubr.f32.gmra.mxu0 %v880
        %v1039 = vpop.f32.mrf.mxu0
        %v1040 = vadd.f32 %v966, %v1039
        %v1041 = vpop.f32.mrf.mxu0
        %1042 = vdwg.mxu0
        %v1043 = vld [vmem:[%s823] sm:$0xff]
        %v1044 = vld [vmem:[%s823 + $0x8] sm:$0xff]
        %v1045 = vld [vmem:[%s823 + $0x10] sm:$0xff]
        %v1046 = vld [vmem:[%s823 + $0x18] sm:$0xff]
        %v1047 = vld [vmem:[%s826] sm:$0x1]
        %v1049 = vlaneseq
        %v1050 = vshrl.u32 %v1049, 7
        %v1051 = vsub.s32 0, %v1050
        %v1052 = vrot.slane %v1047, %v1051
        %1054 = vmatprep.subr.mxu0 0.0
        %1055 = vmatpush1.msra.mxu0 0.0
        %1056 = vmatprep.subr.mxu0 0.0
        %1057 = vmatpush1.msra.mxu0 0.0
        %1058 = vmatprep.subr.mxu0 0.0
        %1059 = vmatpush1.msra.mxu0 0.0
        %1060 = vmatprep.subr.mxu0 0.0
        %1061 = vmatpush1.msra.mxu0 0.0
        %1062 = vmatprep.subr.mxu0 0.0
        %1063 = vmatpush1.msra.mxu0 0.0
        %1064 = vmatprep.subr.mxu0 0.0
        %1065 = vmatpush1.msra.mxu0 0.0
        %1066 = vmatprep.subr.mxu0 0.0
        %1067 = vmatpush1.msra.mxu0 0.0
        %1068 = vmatprep.subr.mxu0 0.0
        %1069 = vmatpush1.msra.mxu0 0.0
        %1070 = vmatprep.subr.mxu0 0.0
        %1071 = vmatpush1.msra.mxu0 0.0
        %1072 = vmatprep.subr.mxu0 0.0
        %1073 = vmatpush1.msra.mxu0 0.0
        %1074 = vmatprep.subr.mxu0 0.0
        %1075 = vmatpush1.msra.mxu0 0.0
        %1076 = vmatprep.subr.mxu0 0.0
        %1077 = vmatpush1.msra.mxu0 0.0
        %1078 = vmatprep.subr.mxu0 0.0
        %1079 = vmatpush1.msra.mxu0 %v1046
        %1080 = vmatprep.subr.mxu0 0.0
        %1081 = vmatpush1.msra.mxu0 %v1045
        %1082 = vmatprep.subr.mxu0 0.0
        %1083 = vmatpush1.msra.mxu0 %v1044
        %1084 = vmatprep.subr.mxu0 0.0
        %1085 = vmatpush1.msra.mxu0 %v1043
        %1086 = vmatprep.subr.mxu0 0.0
        %1087 = vmatpush2.msra.mxu0 0.0
        %1088 = vmatprep.subr.mxu0 0.0
        %1089 = vmatpush2.msra.mxu0 0.0
        %1090 = vmatprep.subr.mxu0 0.0
        %1091 = vmatpush2.msra.mxu0 0.0
        %1092 = vmatprep.subr.mxu0 0.0
        %1093 = vmatpush2.msra.mxu0 0.0
        %1094 = vmatprep.subr.mxu0 0.0
        %1095 = vmatpush2.msra.mxu0 0.0
        %1096 = vmatprep.subr.mxu0 0.0
        %1097 = vmatpush2.msra.mxu0 0.0
        %1098 = vmatprep.subr.mxu0 0.0
        %1099 = vmatpush2.msra.mxu0 0.0
        %1100 = vmatprep.subr.mxu0 0.0
        %1101 = vmatpush2.msra.mxu0 0.0
        %1102 = vmatprep.subr.mxu0 0.0
        %1103 = vmatpush2.msra.mxu0 0.0
        %1104 = vmatprep.subr.mxu0 0.0
        %1105 = vmatpush2.msra.mxu0 0.0
        %1106 = vmatprep.subr.mxu0 0.0
        %1107 = vmatpush2.msra.mxu0 0.0
        %1108 = vmatprep.subr.mxu0 0.0
        %1109 = vmatpush2.msra.mxu0 0.0
        %1110 = vmatprep.subr.mxu0 0.0
        %1111 = vmatpush2.msra.mxu0 0.0
        %1112 = vmatprep.subr.mxu0 0.0
        %1113 = vmatpush2.msra.mxu0 0.0
        %1114 = vmatprep.subr.mxu0 0.0
        %1115 = vmatpush2.msra.mxu0 0.0
        %1116 = vmatprep.subr.mxu0 0.0
        %1117 = vmatpush2.msra.mxu0 0.0
        %1118 = vmatprep.mubr.f32.mxu0 0.0
        %1119 = vmatmul.mubr.f32.gmra.mxu0 %v877
        %v1120 = vpop.f32.mrf.mxu0
        %v1121 = vadd.f32 %v1052, %v1120
        %v1122 = vpop.f32.mrf.mxu0
        %1123 = vmatprep.mubr.f32.mxu0 0.0
        %1124 = vmatmul.mubr.f32.gmra.mxu0 %v880
        %v1125 = vpop.f32.mrf.mxu0
        %v1126 = vadd.f32 %v1052, %v1125
        %v1127 = vpop.f32.mrf.mxu0
        %1128 = vdwg.mxu0
        %vm1129 = vcmask 64512
        %v1131 = vsel %vm1129, %v949, 0
        %v1134 = vsel %vm1129, %v1035, 0
        %1136 = vmatprep.subr.mxu0 0.0
        %1137 = vmatpush1.xpose.msra.mxu0 0.0
        %1138 = vmatprep.subr.mxu0 0.0
        %1139 = vmatpush1.xpose.msra.mxu0 0.0
        %1140 = vmatprep.subr.mxu0 0.0
        %1141 = vmatpush1.xpose.msra.mxu0 0.0
        %1142 = vmatprep.subr.mxu0 0.0
        %1143 = vmatpush1.xpose.msra.mxu0 0.0
        %1144 = vmatprep.subr.mxu0 0.0
        %1145 = vmatpush1.xpose.msra.mxu0 0.0
        %1146 = vmatprep.subr.mxu0 0.0
        %1147 = vmatpush1.xpose.msra.mxu0 0.0
        %1148 = vmatprep.subr.mxu0 0.0
        %1149 = vmatpush1.xpose.msra.mxu0 0.0
        %1150 = vmatprep.subr.mxu0 0.0
        %1151 = vmatpush1.xpose.msra.mxu0 0.0
        %1152 = vmatprep.subr.mxu0 0.0
        %1153 = vmatpush1.xpose.msra.mxu0 0.0
        %1154 = vmatprep.subr.mxu0 0.0
        %1155 = vmatpush1.xpose.msra.mxu0 0.0
        %1156 = vmatprep.subr.mxu0 0.0
        %1157 = vmatpush1.xpose.msra.mxu0 0.0
        %1158 = vmatprep.subr.mxu0 0.0
        %1159 = vmatpush1.xpose.msra.mxu0 0.0
        %1160 = vmatprep.subr.mxu0 0.0
        %1161 = vmatpush1.xpose.msra.mxu0 0.0
        %1162 = vmatprep.subr.mxu0 0.0
        %1163 = vmatpush1.xpose.msra.mxu0 0.0
        %1164 = vmatprep.subr.mxu0 0.0
        %1165 = vmatpush1.xpose.msra.mxu0 0.0
        %1166 = vmatprep.subr.mxu0 0.0
        %1167 = vmatpush1.xpose.msra.mxu0 %v1134
        %1168 = vmatprep.subr.mxu0 0.0
        %1169 = vmatpush2.xpose.msra.mxu0 0.0
        %1170 = vmatprep.subr.mxu0 0.0
        %1171 = vmatpush2.xpose.msra.mxu0 0.0
        %1172 = vmatprep.subr.mxu0 0.0
        %1173 = vmatpush2.xpose.msra.mxu0 0.0
        %1174 = vmatprep.subr.mxu0 0.0
        %1175 = vmatpush2.xpose.msra.mxu0 0.0
        %1176 = vmatprep.subr.mxu0 0.0
        %1177 = vmatpush2.xpose.msra.mxu0 0.0
        %1178 = vmatprep.subr.mxu0 0.0
        %1179 = vmatpush2.xpose.msra.mxu0 0.0
        %1180 = vmatprep.subr.mxu0 0.0
        %1181 = vmatpush2.xpose.msra.mxu0 0.0
        %1182 = vmatprep.subr.mxu0 0.0
        %1183 = vmatpush2.xpose.msra.mxu0 0.0
        %1184 = vmatprep.subr.mxu0 0.0
        %1185 = vmatpush2.xpose.msra.mxu0 0.0
        %1186 = vmatprep.subr.mxu0 0.0
        %1187 = vmatpush2.xpose.msra.mxu0 0.0
        %1188 = vmatprep.subr.mxu0 0.0
        %1189 = vmatpush2.xpose.msra.mxu0 0.0
        %1190 = vmatprep.subr.mxu0 0.0
        %1191 = vmatpush2.xpose.msra.mxu0 0.0
        %1192 = vmatprep.subr.mxu0 0.0
        %1193 = vmatpush2.xpose.msra.mxu0 0.0
        %1194 = vmatprep.subr.mxu0 0.0
        %1195 = vmatpush2.xpose.msra.mxu0 0.0
        %1196 = vmatprep.subr.mxu0 0.0
        %1197 = vmatpush2.xpose.msra.mxu0 0.0
        %1198 = vmatprep.subr.mxu0 0.0
        %1199 = vmatpush2.xpose.msra.mxu0 0.0
        %1200 = vmatprep.mubr.f32.mxu0 0.0
        %1201 = vmatmul.mubr.f32.gmra.mxu0 %v1131
        %v1202 = vpop.f32.mrf.mxu0
        %v1203 = vadd.f32 0.0, %v1202
        %v1204 = vpop.f32.mrf.mxu0
        %1205 = vdwg.mxu0
        %v1207 = vsel %vm1129, %v954, 0
        %v1210 = vsel %vm1129, %v1040, 0
        %1212 = vmatprep.subr.mxu0 0.0
        %1213 = vmatpush1.xpose.msra.mxu0 0.0
        %1214 = vmatprep.subr.mxu0 0.0
        %1215 = vmatpush1.xpose.msra.mxu0 0.0
        %1216 = vmatprep.subr.mxu0 0.0
        %1217 = vmatpush1.xpose.msra.mxu0 0.0
        %1218 = vmatprep.subr.mxu0 0.0
        %1219 = vmatpush1.xpose.msra.mxu0 0.0
        %1220 = vmatprep.subr.mxu0 0.0
        %1221 = vmatpush1.xpose.msra.mxu0 0.0
        %1222 = vmatprep.subr.mxu0 0.0
        %1223 = vmatpush1.xpose.msra.mxu0 0.0
        %1224 = vmatprep.subr.mxu0 0.0
        %1225 = vmatpush1.xpose.msra.mxu0 0.0
        %1226 = vmatprep.subr.mxu0 0.0
        %1227 = vmatpush1.xpose.msra.mxu0 0.0
        %1228 = vmatprep.subr.mxu0 0.0
        %1229 = vmatpush1.xpose.msra.mxu0 0.0
        %1230 = vmatprep.subr.mxu0 0.0
        %1231 = vmatpush1.xpose.msra.mxu0 0.0
        %1232 = vmatprep.subr.mxu0 0.0
        %1233 = vmatpush1.xpose.msra.mxu0 0.0
        %1234 = vmatprep.subr.mxu0 0.0
        %1235 = vmatpush1.xpose.msra.mxu0 0.0
        %1236 = vmatprep.subr.mxu0 0.0
        %1237 = vmatpush1.xpose.msra.mxu0 0.0
        %1238 = vmatprep.subr.mxu0 0.0
        %1239 = vmatpush1.xpose.msra.mxu0 0.0
        %1240 = vmatprep.subr.mxu0 0.0
        %1241 = vmatpush1.xpose.msra.mxu0 0.0
        %1242 = vmatprep.subr.mxu0 0.0
        %1243 = vmatpush1.xpose.msra.mxu0 %v1210
        %1244 = vmatprep.subr.mxu0 0.0
        %1245 = vmatpush2.xpose.msra.mxu0 0.0
        %1246 = vmatprep.subr.mxu0 0.0
        %1247 = vmatpush2.xpose.msra.mxu0 0.0
        %1248 = vmatprep.subr.mxu0 0.0
        %1249 = vmatpush2.xpose.msra.mxu0 0.0
        %1250 = vmatprep.subr.mxu0 0.0
        %1251 = vmatpush2.xpose.msra.mxu0 0.0
        %1252 = vmatprep.subr.mxu0 0.0
        %1253 = vmatpush2.xpose.msra.mxu0 0.0
        %1254 = vmatprep.subr.mxu0 0.0
        %1255 = vmatpush2.xpose.msra.mxu0 0.0
        %1256 = vmatprep.subr.mxu0 0.0
        %1257 = vmatpush2.xpose.msra.mxu0 0.0
        %1258 = vmatprep.subr.mxu0 0.0
        %1259 = vmatpush2.xpose.msra.mxu0 0.0
        %1260 = vmatprep.subr.mxu0 0.0
        %1261 = vmatpush2.xpose.msra.mxu0 0.0
        %1262 = vmatprep.subr.mxu0 0.0
        %1263 = vmatpush2.xpose.msra.mxu0 0.0
        %1264 = vmatprep.subr.mxu0 0.0
        %1265 = vmatpush2.xpose.msra.mxu0 0.0
        %1266 = vmatprep.subr.mxu0 0.0
        %1267 = vmatpush2.xpose.msra.mxu0 0.0
        %1268 = vmatprep.subr.mxu0 0.0
        %1269 = vmatpush2.xpose.msra.mxu0 0.0
        %1270 = vmatprep.subr.mxu0 0.0
        %1271 = vmatpush2.xpose.msra.mxu0 0.0
        %1272 = vmatprep.subr.mxu0 0.0
        %1273 = vmatpush2.xpose.msra.mxu0 0.0
        %1274 = vmatprep.subr.mxu0 0.0
        %1275 = vmatpush2.xpose.msra.mxu0 0.0
        %1276 = vmatprep.mubr.f32.mxu0 0.0
        %1277 = vmatmul.mubr.f32.gmra.mxu0 %v1207
        %v1278 = vpop.f32.mrf.mxu0
        %v1279 = vadd.f32 0.0, %v1278
        %v1280 = vpop.f32.mrf.mxu0
        %1281 = vdwg.mxu0
        %v1282 = vsel %vm1129, %v1203, -inf
        %1283 = vmax.xlane.f32.xlu0 %v1282
        %v1284 = vpop.xlane.xlu0 %1283
        %v1285 = vsel %vm1129, %v1279, -inf
        %1286 = vmax.xlane.f32.xlu0 %v1285
        %v1287 = vpop.xlane.xlu0 %1286
        %v1288 = vsub.f32 %v1203, %v1284
        %v1289 = vsub.f32 %v1279, %v1287
        %v1290 = vmul.f32 %v1288, 1.442695
        %v1291 = vpow.pop %v1290
        %v1292 = vmul.f32 %v1289, 1.442695
        %v1293 = vpow.pop %v1292
        %v1294 = vsel %vm1129, %v1291, 0.0
        %1295 = vadd.xlane.f32.xlu0 %v1294
        %v1296 = vpop.xlane.xlu0 %1295
        %v1297 = vsel %vm1129, %v1293, 0.0
        %1298 = vadd.xlane.f32.xlu0 %v1297
        %v1299 = vpop.xlane.xlu0 %1298
        %v1300 = vrcp.pop %v1296
        %v1301 = vrcp.pop %v1299
        %v1302 = vmul.f32 %v1291, %v1300
        %v1303 = vmul.f32 %v1293, %v1301
        %v1305 = vsel %vm1129, %v1302, 0
        %1307 = vmatprep.subr.mxu0 0.0
        %1308 = vmatpush1.msra.mxu0 0.0
        %1309 = vmatprep.subr.mxu0 0.0
        %1310 = vmatpush1.msra.mxu0 0.0
        %1311 = vmatprep.subr.mxu0 0.0
        %1312 = vmatpush1.msra.mxu0 0.0
        %1313 = vmatprep.subr.mxu0 0.0
        %1314 = vmatpush1.msra.mxu0 0.0
        %1315 = vmatprep.subr.mxu0 0.0
        %1316 = vmatpush1.msra.mxu0 0.0
        %1317 = vmatprep.subr.mxu0 0.0
        %1318 = vmatpush1.msra.mxu0 0.0
        %1319 = vmatprep.subr.mxu0 0.0
        %1320 = vmatpush1.msra.mxu0 0.0
        %1321 = vmatprep.subr.mxu0 0.0
        %1322 = vmatpush1.msra.mxu0 0.0
        %1323 = vmatprep.subr.mxu0 0.0
        %1324 = vmatpush1.msra.mxu0 0.0
        %1325 = vmatprep.subr.mxu0 0.0
        %1326 = vmatpush1.msra.mxu0 0.0
        %1327 = vmatprep.subr.mxu0 0.0
        %1328 = vmatpush1.msra.mxu0 0.0
        %1329 = vmatprep.subr.mxu0 0.0
        %1330 = vmatpush1.msra.mxu0 0.0
        %1331 = vmatprep.subr.mxu0 0.0
        %1332 = vmatpush1.msra.mxu0 0.0
        %1333 = vmatprep.subr.mxu0 0.0
        %1334 = vmatpush1.msra.mxu0 0.0
        %1335 = vmatprep.subr.mxu0 0.0
        %1336 = vmatpush1.msra.mxu0 0.0
        %1337 = vmatprep.subr.mxu0 0.0
        %1338 = vmatpush1.msra.mxu0 %v1121
        %1339 = vmatprep.subr.mxu0 0.0
        %1340 = vmatpush2.msra.mxu0 0.0
        %1341 = vmatprep.subr.mxu0 0.0
        %1342 = vmatpush2.msra.mxu0 0.0
        %1343 = vmatprep.subr.mxu0 0.0
        %1344 = vmatpush2.msra.mxu0 0.0
        %1345 = vmatprep.subr.mxu0 0.0
        %1346 = vmatpush2.msra.mxu0 0.0
        %1347 = vmatprep.subr.mxu0 0.0
        %1348 = vmatpush2.msra.mxu0 0.0
        %1349 = vmatprep.subr.mxu0 0.0
        %1350 = vmatpush2.msra.mxu0 0.0
        %1351 = vmatprep.subr.mxu0 0.0
        %1352 = vmatpush2.msra.mxu0 0.0
        %1353 = vmatprep.subr.mxu0 0.0
        %1354 = vmatpush2.msra.mxu0 0.0
        %1355 = vmatprep.subr.mxu0 0.0
        %1356 = vmatpush2.msra.mxu0 0.0
        %1357 = vmatprep.subr.mxu0 0.0
        %1358 = vmatpush2.msra.mxu0 0.0
        %1359 = vmatprep.subr.mxu0 0.0
        %1360 = vmatpush2.msra.mxu0 0.0
        %1361 = vmatprep.subr.mxu0 0.0
        %1362 = vmatpush2.msra.mxu0 0.0
        %1363 = vmatprep.subr.mxu0 0.0
        %1364 = vmatpush2.msra.mxu0 0.0
        %1365 = vmatprep.subr.mxu0 0.0
        %1366 = vmatpush2.msra.mxu0 0.0
        %1367 = vmatprep.subr.mxu0 0.0
        %1368 = vmatpush2.msra.mxu0 0.0
        %1369 = vmatprep.subr.mxu0 0.0
        %1370 = vmatpush2.msra.mxu0 0.0
        %1371 = vmatprep.mubr.f32.mxu0 0.0
        %1372 = vmatmul.mubr.f32.gmra.mxu0 %v1305
        %v1373 = vpop.f32.mrf.mxu0
        %v1374 = vadd.f32 0.0, %v1373
        %v1375 = vpop.f32.mrf.mxu0
        %1376 = vdwg.mxu0
        %v1378 = vsel %vm1129, %v1303, 0
        %1380 = vmatprep.subr.mxu0 0.0
        %1381 = vmatpush1.msra.mxu0 0.0
        %1382 = vmatprep.subr.mxu0 0.0
        %1383 = vmatpush1.msra.mxu0 0.0
        %1384 = vmatprep.subr.mxu0 0.0
        %1385 = vmatpush1.msra.mxu0 0.0
        %1386 = vmatprep.subr.mxu0 0.0
        %1387 = vmatpush1.msra.mxu0 0.0
        %1388 = vmatprep.subr.mxu0 0.0
        %1389 = vmatpush1.msra.mxu0 0.0
        %1390 = vmatprep.subr.mxu0 0.0
        %1391 = vmatpush1.msra.mxu0 0.0
        %1392 = vmatprep.subr.mxu0 0.0
        %1393 = vmatpush1.msra.mxu0 0.0
        %1394 = vmatprep.subr.mxu0 0.0
        %1395 = vmatpush1.msra.mxu0 0.0
        %1396 = vmatprep.subr.mxu0 0.0
        %1397 = vmatpush1.msra.mxu0 0.0
        %1398 = vmatprep.subr.mxu0 0.0
        %1399 = vmatpush1.msra.mxu0 0.0
        %1400 = vmatprep.subr.mxu0 0.0
        %1401 = vmatpush1.msra.mxu0 0.0
        %1402 = vmatprep.subr.mxu0 0.0
        %1403 = vmatpush1.msra.mxu0 0.0
        %1404 = vmatprep.subr.mxu0 0.0
        %1405 = vmatpush1.msra.mxu0 0.0
        %1406 = vmatprep.subr.mxu0 0.0
        %1407 = vmatpush1.msra.mxu0 0.0
        %1408 = vmatprep.subr.mxu0 0.0
        %1409 = vmatpush1.msra.mxu0 0.0
        %1410 = vmatprep.subr.mxu0 0.0
        %1411 = vmatpush1.msra.mxu0 %v1126
        %1412 = vmatprep.subr.mxu0 0.0
        %1413 = vmatpush2.msra.mxu0 0.0
        %1414 = vmatprep.subr.mxu0 0.0
        %1415 = vmatpush2.msra.mxu0 0.0
        %1416 = vmatprep.subr.mxu0 0.0
        %1417 = vmatpush2.msra.mxu0 0.0
        %1418 = vmatprep.subr.mxu0 0.0
        %1419 = vmatpush2.msra.mxu0 0.0
        %1420 = vmatprep.subr.mxu0 0.0
        %1421 = vmatpush2.msra.mxu0 0.0
        %1422 = vmatprep.subr.mxu0 0.0
        %1423 = vmatpush2.msra.mxu0 0.0
        %1424 = vmatprep.subr.mxu0 0.0
        %1425 = vmatpush2.msra.mxu0 0.0
        %1426 = vmatprep.subr.mxu0 0.0
        %1427 = vmatpush2.msra.mxu0 0.0
        %1428 = vmatprep.subr.mxu0 0.0
        %1429 = vmatpush2.msra.mxu0 0.0
        %1430 = vmatprep.subr.mxu0 0.0
        %1431 = vmatpush2.msra.mxu0 0.0
        %1432 = vmatprep.subr.mxu0 0.0
        %1433 = vmatpush2.msra.mxu0 0.0
        %1434 = vmatprep.subr.mxu0 0.0
        %1435 = vmatpush2.msra.mxu0 0.0
        %1436 = vmatprep.subr.mxu0 0.0
        %1437 = vmatpush2.msra.mxu0 0.0
        %1438 = vmatprep.subr.mxu0 0.0
        %1439 = vmatpush2.msra.mxu0 0.0
        %1440 = vmatprep.subr.mxu0 0.0
        %1441 = vmatpush2.msra.mxu0 0.0
        %1442 = vmatprep.subr.mxu0 0.0
        %1443 = vmatpush2.msra.mxu0 0.0
        %1444 = vmatprep.mubr.f32.mxu0 0.0
        %1445 = vmatmul.mubr.f32.gmra.mxu0 %v1378
        %v1446 = vpop.f32.mrf.mxu0
        %v1447 = vadd.f32 0.0, %v1446
        %v1448 = vpop.f32.mrf.mxu0
        %1449 = vdwg.mxu0
        %1450 = vrot.lane.b32.xlu0 %v949, 120
        %v1451 = vpop.permute.xlu0 %1450
        %1452 = vrot.lane.b32.xlu0 %v1035, 120
        %v1453 = vpop.permute.xlu0 %1452
        %v1454 = vsel %vm1129, %v1451, 0
        %v1456 = vsel %vm1129, %v1453, 0
        %1458 = vmatprep.subr.mxu0 0.0
        %1459 = vmatpush1.xpose.msra.mxu0 0.0
        %1460 = vmatprep.subr.mxu0 0.0
        %1461 = vmatpush1.xpose.msra.mxu0 0.0
        %1462 = vmatprep.subr.mxu0 0.0
        %1463 = vmatpush1.xpose.msra.mxu0 0.0
        %1464 = vmatprep.subr.mxu0 0.0
        %1465 = vmatpush1.xpose.msra.mxu0 0.0
        %1466 = vmatprep.subr.mxu0 0.0
        %1467 = vmatpush1.xpose.msra.mxu0 0.0
        %1468 = vmatprep.subr.mxu0 0.0
        %1469 = vmatpush1.xpose.msra.mxu0 0.0
        %1470 = vmatprep.subr.mxu0 0.0
        %1471 = vmatpush1.xpose.msra.mxu0 0.0
        %1472 = vmatprep.subr.mxu0 0.0
        %1473 = vmatpush1.xpose.msra.mxu0 0.0
        %1474 = vmatprep.subr.mxu0 0.0
        %1475 = vmatpush1.xpose.msra.mxu0 0.0
        %1476 = vmatprep.subr.mxu0 0.0
        %1477 = vmatpush1.xpose.msra.mxu0 0.0
        %1478 = vmatprep.subr.mxu0 0.0
        %1479 = vmatpush1.xpose.msra.mxu0 0.0
        %1480 = vmatprep.subr.mxu0 0.0
        %1481 = vmatpush1.xpose.msra.mxu0 0.0
        %1482 = vmatprep.subr.mxu0 0.0
        %1483 = vmatpush1.xpose.msra.mxu0 0.0
        %1484 = vmatprep.subr.mxu0 0.0
        %1485 = vmatpush1.xpose.msra.mxu0 0.0
        %1486 = vmatprep.subr.mxu0 0.0
        %1487 = vmatpush1.xpose.msra.mxu0 0.0
        %1488 = vmatprep.subr.mxu0 0.0
        %1489 = vmatpush1.xpose.msra.mxu0 %v1456
        %1490 = vmatprep.subr.mxu0 0.0
        %1491 = vmatpush2.xpose.msra.mxu0 0.0
        %1492 = vmatprep.subr.mxu0 0.0
        %1493 = vmatpush2.xpose.msra.mxu0 0.0
        %1494 = vmatprep.subr.mxu0 0.0
        %1495 = vmatpush2.xpose.msra.mxu0 0.0
        %1496 = vmatprep.subr.mxu0 0.0
        %1497 = vmatpush2.xpose.msra.mxu0 0.0
        %1498 = vmatprep.subr.mxu0 0.0
        %1499 = vmatpush2.xpose.msra.mxu0 0.0
        %1500 = vmatprep.subr.mxu0 0.0
        %1501 = vmatpush2.xpose.msra.mxu0 0.0
        %1502 = vmatprep.subr.mxu0 0.0
        %1503 = vmatpush2.xpose.msra.mxu0 0.0
        %1504 = vmatprep.subr.mxu0 0.0
        %1505 = vmatpush2.xpose.msra.mxu0 0.0
        %1506 = vmatprep.subr.mxu0 0.0
        %1507 = vmatpush2.xpose.msra.mxu0 0.0
        %1508 = vmatprep.subr.mxu0 0.0
        %1509 = vmatpush2.xpose.msra.mxu0 0.0
        %1510 = vmatprep.subr.mxu0 0.0
        %1511 = vmatpush2.xpose.msra.mxu0 0.0
        %1512 = vmatprep.subr.mxu0 0.0
        %1513 = vmatpush2.xpose.msra.mxu0 0.0
        %1514 = vmatprep.subr.mxu0 0.0
        %1515 = vmatpush2.xpose.msra.mxu0 0.0
        %1516 = vmatprep.subr.mxu0 0.0
        %1517 = vmatpush2.xpose.msra.mxu0 0.0
        %1518 = vmatprep.subr.mxu0 0.0
        %1519 = vmatpush2.xpose.msra.mxu0 0.0
        %1520 = vmatprep.subr.mxu0 0.0
        %1521 = vmatpush2.xpose.msra.mxu0 0.0
        %1522 = vmatprep.mubr.f32.mxu0 0.0
        %1523 = vmatmul.mubr.f32.gmra.mxu0 %v1454
        %v1524 = vpop.f32.mrf.mxu0
        %v1525 = vadd.f32 0.0, %v1524
        %v1526 = vpop.f32.mrf.mxu0
        %1527 = vdwg.mxu0
        %1528 = vrot.lane.b32.xlu0 %v954, 120
        %v1529 = vpop.permute.xlu0 %1528
        %1530 = vrot.lane.b32.xlu0 %v1040, 120
        %v1531 = vpop.permute.xlu0 %1530
        %v1532 = vsel %vm1129, %v1529, 0
        %v1534 = vsel %vm1129, %v1531, 0
        %1536 = vmatprep.subr.mxu0 0.0
        %1537 = vmatpush1.xpose.msra.mxu0 0.0
        %1538 = vmatprep.subr.mxu0 0.0
        %1539 = vmatpush1.xpose.msra.mxu0 0.0
        %1540 = vmatprep.subr.mxu0 0.0
        %1541 = vmatpush1.xpose.msra.mxu0 0.0
        %1542 = vmatprep.subr.mxu0 0.0
        %1543 = vmatpush1.xpose.msra.mxu0 0.0
        %1544 = vmatprep.subr.mxu0 0.0
        %1545 = vmatpush1.xpose.msra.mxu0 0.0
        %1546 = vmatprep.subr.mxu0 0.0
        %1547 = vmatpush1.xpose.msra.mxu0 0.0
        %1548 = vmatprep.subr.mxu0 0.0
        %1549 = vmatpush1.xpose.msra.mxu0 0.0
        %1550 = vmatprep.subr.mxu0 0.0
        %1551 = vmatpush1.xpose.msra.mxu0 0.0
        %1552 = vmatprep.subr.mxu0 0.0
        %1553 = vmatpush1.xpose.msra.mxu0 0.0
        %1554 = vmatprep.subr.mxu0 0.0
        %1555 = vmatpush1.xpose.msra.mxu0 0.0
        %1556 = vmatprep.subr.mxu0 0.0
        %1557 = vmatpush1.xpose.msra.mxu0 0.0
        %1558 = vmatprep.subr.mxu0 0.0
        %1559 = vmatpush1.xpose.msra.mxu0 0.0
        %1560 = vmatprep.subr.mxu0 0.0
        %1561 = vmatpush1.xpose.msra.mxu0 0.0
        %1562 = vmatprep.subr.mxu0 0.0
        %1563 = vmatpush1.xpose.msra.mxu0 0.0
        %1564 = vmatprep.subr.mxu0 0.0
        %1565 = vmatpush1.xpose.msra.mxu0 0.0
        %1566 = vmatprep.subr.mxu0 0.0
        %1567 = vmatpush1.xpose.msra.mxu0 %v1534
        %1568 = vmatprep.subr.mxu0 0.0
        %1569 = vmatpush2.xpose.msra.mxu0 0.0
        %1570 = vmatprep.subr.mxu0 0.0
        %1571 = vmatpush2.xpose.msra.mxu0 0.0
        %1572 = vmatprep.subr.mxu0 0.0
        %1573 = vmatpush2.xpose.msra.mxu0 0.0
        %1574 = vmatprep.subr.mxu0 0.0
        %1575 = vmatpush2.xpose.msra.mxu0 0.0
        %1576 = vmatprep.subr.mxu0 0.0
        %1577 = vmatpush2.xpose.msra.mxu0 0.0
        %1578 = vmatprep.subr.mxu0 0.0
        %1579 = vmatpush2.xpose.msra.mxu0 0.0
        %1580 = vmatprep.subr.mxu0 0.0
        %1581 = vmatpush2.xpose.msra.mxu0 0.0
        %1582 = vmatprep.subr.mxu0 0.0
        %1583 = vmatpush2.xpose.msra.mxu0 0.0
        %1584 = vmatprep.subr.mxu0 0.0
        %1585 = vmatpush2.xpose.msra.mxu0 0.0
        %1586 = vmatprep.subr.mxu0 0.0
        %1587 = vmatpush2.xpose.msra.mxu0 0.0
        %1588 = vmatprep.subr.mxu0 0.0
        %1589 = vmatpush2.xpose.msra.mxu0 0.0
        %1590 = vmatprep.subr.mxu0 0.0
        %1591 = vmatpush2.xpose.msra.mxu0 0.0
        %1592 = vmatprep.subr.mxu0 0.0
        %1593 = vmatpush2.xpose.msra.mxu0 0.0
        %1594 = vmatprep.subr.mxu0 0.0
        %1595 = vmatpush2.xpose.msra.mxu0 0.0
        %1596 = vmatprep.subr.mxu0 0.0
        %1597 = vmatpush2.xpose.msra.mxu0 0.0
        %1598 = vmatprep.subr.mxu0 0.0
        %1599 = vmatpush2.xpose.msra.mxu0 0.0
        %1600 = vmatprep.mubr.f32.mxu0 0.0
        %1601 = vmatmul.mubr.f32.gmra.mxu0 %v1532
        %v1602 = vpop.f32.mrf.mxu0
        %v1603 = vadd.f32 0.0, %v1602
        %v1604 = vpop.f32.mrf.mxu0
        %1605 = vdwg.mxu0
        %v1606 = vsel %vm1129, %v1525, -inf
        %1607 = vmax.xlane.f32.xlu0 %v1606
        %v1608 = vpop.xlane.xlu0 %1607
        %v1609 = vsel %vm1129, %v1603, -inf
        %1610 = vmax.xlane.f32.xlu0 %v1609
        %v1611 = vpop.xlane.xlu0 %1610
        %v1612 = vsub.f32 %v1525, %v1608
        %v1613 = vsub.f32 %v1603, %v1611
        %v1614 = vmul.f32 %v1612, 1.442695
        %v1615 = vpow.pop %v1614
        %v1616 = vmul.f32 %v1613, 1.442695
        %v1617 = vpow.pop %v1616
        %v1618 = vsel %vm1129, %v1615, 0.0
        %1619 = vadd.xlane.f32.xlu0 %v1618
        %v1620 = vpop.xlane.xlu0 %1619
        %v1621 = vsel %vm1129, %v1617, 0.0
        %1622 = vadd.xlane.f32.xlu0 %v1621
        %v1623 = vpop.xlane.xlu0 %1622
        %v1624 = vrcp.pop %v1620
        %v1625 = vrcp.pop %v1623
        %v1626 = vmul.f32 %v1615, %v1624
        %v1627 = vmul.f32 %v1617, %v1625
        %1629 = vrot.lane.b32.xlu0 %v1121, 120
        %v1630 = vpop.permute.xlu0 %1629
        %v1633 = vsel %vm1129, %v1626, 0
        %1635 = vmatprep.subr.mxu0 0.0
        %1636 = vmatpush1.msra.mxu0 0.0
        %1637 = vmatprep.subr.mxu0 0.0
        %1638 = vmatpush1.msra.mxu0 0.0
        %1639 = vmatprep.subr.mxu0 0.0
        %1640 = vmatpush1.msra.mxu0 0.0
        %1641 = vmatprep.subr.mxu0 0.0
        %1642 = vmatpush1.msra.mxu0 0.0
        %1643 = vmatprep.subr.mxu0 0.0
        %1644 = vmatpush1.msra.mxu0 0.0
        %1645 = vmatprep.subr.mxu0 0.0
        %1646 = vmatpush1.msra.mxu0 0.0
        %1647 = vmatprep.subr.mxu0 0.0
        %1648 = vmatpush1.msra.mxu0 0.0
        %1649 = vmatprep.subr.mxu0 0.0
        %1650 = vmatpush1.msra.mxu0 0.0
        %1651 = vmatprep.subr.mxu0 0.0
        %1652 = vmatpush1.msra.mxu0 0.0
        %1653 = vmatprep.subr.mxu0 0.0
        %1654 = vmatpush1.msra.mxu0 0.0
        %1655 = vmatprep.subr.mxu0 0.0
        %1656 = vmatpush1.msra.mxu0 0.0
        %1657 = vmatprep.subr.mxu0 0.0
        %1658 = vmatpush1.msra.mxu0 0.0
        %1659 = vmatprep.subr.mxu0 0.0
        %1660 = vmatpush1.msra.mxu0 0.0
        %1661 = vmatprep.subr.mxu0 0.0
        %1662 = vmatpush1.msra.mxu0 0.0
        %1663 = vmatprep.subr.mxu0 0.0
        %1664 = vmatpush1.msra.mxu0 0.0
        %1665 = vmatprep.subr.mxu0 0.0
        %1666 = vmatpush1.msra.mxu0 %v1630
        %1667 = vmatprep.subr.mxu0 0.0
        %1668 = vmatpush2.msra.mxu0 0.0
        %1669 = vmatprep.subr.mxu0 0.0
        %1670 = vmatpush2.msra.mxu0 0.0
        %1671 = vmatprep.subr.mxu0 0.0
        %1672 = vmatpush2.msra.mxu0 0.0
        %1673 = vmatprep.subr.mxu0 0.0
        %1674 = vmatpush2.msra.mxu0 0.0
        %1675 = vmatprep.subr.mxu0 0.0
        %1676 = vmatpush2.msra.mxu0 0.0
        %1677 = vmatprep.subr.mxu0 0.0
        %1678 = vmatpush2.msra.mxu0 0.0
        %1679 = vmatprep.subr.mxu0 0.0
        %1680 = vmatpush2.msra.mxu0 0.0
        %1681 = vmatprep.subr.mxu0 0.0
        %1682 = vmatpush2.msra.mxu0 0.0
        %1683 = vmatprep.subr.mxu0 0.0
        %1684 = vmatpush2.msra.mxu0 0.0
        %1685 = vmatprep.subr.mxu0 0.0
        %1686 = vmatpush2.msra.mxu0 0.0
        %1687 = vmatprep.subr.mxu0 0.0
        %1688 = vmatpush2.msra.mxu0 0.0
        %1689 = vmatprep.subr.mxu0 0.0
        %1690 = vmatpush2.msra.mxu0 0.0
        %1691 = vmatprep.subr.mxu0 0.0
        %1692 = vmatpush2.msra.mxu0 0.0
        %1693 = vmatprep.subr.mxu0 0.0
        %1694 = vmatpush2.msra.mxu0 0.0
        %1695 = vmatprep.subr.mxu0 0.0
        %1696 = vmatpush2.msra.mxu0 0.0
        %1697 = vmatprep.subr.mxu0 0.0
        %1698 = vmatpush2.msra.mxu0 0.0
        %1699 = vmatprep.mubr.f32.mxu0 0.0
        %1700 = vmatmul.mubr.f32.gmra.mxu0 %v1633
        %v1701 = vpop.f32.mrf.mxu0
        %v1702 = vadd.f32 0.0, %v1701
        %v1703 = vpop.f32.mrf.mxu0
        %1704 = vdwg.mxu0
        %1706 = vrot.lane.b32.xlu0 %v1126, 120
        %v1707 = vpop.permute.xlu0 %1706
        %v1710 = vsel %vm1129, %v1627, 0
        %1712 = vmatprep.subr.mxu0 0.0
        %1713 = vmatpush1.msra.mxu0 0.0
        %1714 = vmatprep.subr.mxu0 0.0
        %1715 = vmatpush1.msra.mxu0 0.0
        %1716 = vmatprep.subr.mxu0 0.0
        %1717 = vmatpush1.msra.mxu0 0.0
        %1718 = vmatprep.subr.mxu0 0.0
        %1719 = vmatpush1.msra.mxu0 0.0
        %1720 = vmatprep.subr.mxu0 0.0
        %1721 = vmatpush1.msra.mxu0 0.0
        %1722 = vmatprep.subr.mxu0 0.0
        %1723 = vmatpush1.msra.mxu0 0.0
        %1724 = vmatprep.subr.mxu0 0.0
        %1725 = vmatpush1.msra.mxu0 0.0
        %1726 = vmatprep.subr.mxu0 0.0
        %1727 = vmatpush1.msra.mxu0 0.0
        %1728 = vmatprep.subr.mxu0 0.0
        %1729 = vmatpush1.msra.mxu0 0.0
        %1730 = vmatprep.subr.mxu0 0.0
        %1731 = vmatpush1.msra.mxu0 0.0
        %1732 = vmatprep.subr.mxu0 0.0
        %1733 = vmatpush1.msra.mxu0 0.0
        %1734 = vmatprep.subr.mxu0 0.0
        %1735 = vmatpush1.msra.mxu0 0.0
        %1736 = vmatprep.subr.mxu0 0.0
        %1737 = vmatpush1.msra.mxu0 0.0
        %1738 = vmatprep.subr.mxu0 0.0
        %1739 = vmatpush1.msra.mxu0 0.0
        %1740 = vmatprep.subr.mxu0 0.0
        %1741 = vmatpush1.msra.mxu0 0.0
        %1742 = vmatprep.subr.mxu0 0.0
        %1743 = vmatpush1.msra.mxu0 %v1707
        %1744 = vmatprep.subr.mxu0 0.0
        %1745 = vmatpush2.msra.mxu0 0.0
        %1746 = vmatprep.subr.mxu0 0.0
        %1747 = vmatpush2.msra.mxu0 0.0
        %1748 = vmatprep.subr.mxu0 0.0
        %1749 = vmatpush2.msra.mxu0 0.0
        %1750 = vmatprep.subr.mxu0 0.0
        %1751 = vmatpush2.msra.mxu0 0.0
        %1752 = vmatprep.subr.mxu0 0.0
        %1753 = vmatpush2.msra.mxu0 0.0
        %1754 = vmatprep.subr.mxu0 0.0
        %1755 = vmatpush2.msra.mxu0 0.0
        %1756 = vmatprep.subr.mxu0 0.0
        %1757 = vmatpush2.msra.mxu0 0.0
        %1758 = vmatprep.subr.mxu0 0.0
        %1759 = vmatpush2.msra.mxu0 0.0
        %1760 = vmatprep.subr.mxu0 0.0
        %1761 = vmatpush2.msra.mxu0 0.0
        %1762 = vmatprep.subr.mxu0 0.0
        %1763 = vmatpush2.msra.mxu0 0.0
        %1764 = vmatprep.subr.mxu0 0.0
        %1765 = vmatpush2.msra.mxu0 0.0
        %1766 = vmatprep.subr.mxu0 0.0
        %1767 = vmatpush2.msra.mxu0 0.0
        %1768 = vmatprep.subr.mxu0 0.0
        %1769 = vmatpush2.msra.mxu0 0.0
        %1770 = vmatprep.subr.mxu0 0.0
        %1771 = vmatpush2.msra.mxu0 0.0
        %1772 = vmatprep.subr.mxu0 0.0
        %1773 = vmatpush2.msra.mxu0 0.0
        %1774 = vmatprep.subr.mxu0 0.0
        %1775 = vmatpush2.msra.mxu0 0.0
        %1776 = vmatprep.mubr.f32.mxu0 0.0
        %1777 = vmatmul.mubr.f32.gmra.mxu0 %v1710
        %v1778 = vpop.f32.mrf.mxu0
        %v1779 = vadd.f32 0.0, %v1778
        %v1780 = vpop.f32.mrf.mxu0
        %1781 = vdwg.mxu0
        %1782 = vrot.lane.b32.xlu0 %v949, 112
        %v1783 = vpop.permute.xlu0 %1782
        %1784 = vrot.lane.b32.xlu0 %v1035, 112
        %v1785 = vpop.permute.xlu0 %1784
        %v1786 = vsel %vm1129, %v1783, 0
        %v1788 = vsel %vm1129, %v1785, 0
        %1790 = vmatprep.subr.mxu0 0.0
        %1791 = vmatpush1.xpose.msra.mxu0 0.0
        %1792 = vmatprep.subr.mxu0 0.0
        %1793 = vmatpush1.xpose.msra.mxu0 0.0
        %1794 = vmatprep.subr.mxu0 0.0
        %1795 = vmatpush1.xpose.msra.mxu0 0.0
        %1796 = vmatprep.subr.mxu0 0.0
        %1797 = vmatpush1.xpose.msra.mxu0 0.0
        %1798 = vmatprep.subr.mxu0 0.0
        %1799 = vmatpush1.xpose.msra.mxu0 0.0
        %1800 = vmatprep.subr.mxu0 0.0
        %1801 = vmatpush1.xpose.msra.mxu0 0.0
        %1802 = vmatprep.subr.mxu0 0.0
        %1803 = vmatpush1.xpose.msra.mxu0 0.0
        %1804 = vmatprep.subr.mxu0 0.0
        %1805 = vmatpush1.xpose.msra.mxu0 0.0
        %1806 = vmatprep.subr.mxu0 0.0
        %1807 = vmatpush1.xpose.msra.mxu0 0.0
        %1808 = vmatprep.subr.mxu0 0.0
        %1809 = vmatpush1.xpose.msra.mxu0 0.0
        %1810 = vmatprep.subr.mxu0 0.0
        %1811 = vmatpush1.xpose.msra.mxu0 0.0
        %1812 = vmatprep.subr.mxu0 0.0
        %1813 = vmatpush1.xpose.msra.mxu0 0.0
        %1814 = vmatprep.subr.mxu0 0.0
        %1815 = vmatpush1.xpose.msra.mxu0 0.0
        %1816 = vmatprep.subr.mxu0 0.0
        %1817 = vmatpush1.xpose.msra.mxu0 0.0
        %1818 = vmatprep.subr.mxu0 0.0
        %1819 = vmatpush1.xpose.msra.mxu0 0.0
        %1820 = vmatprep.subr.mxu0 0.0
        %1821 = vmatpush1.xpose.msra.mxu0 %v1788
        %1822 = vmatprep.subr.mxu0 0.0
        %1823 = vmatpush2.xpose.msra.mxu0 0.0
        %1824 = vmatprep.subr.mxu0 0.0
        %1825 = vmatpush2.xpose.msra.mxu0 0.0
        %1826 = vmatprep.subr.mxu0 0.0
        %1827 = vmatpush2.xpose.msra.mxu0 0.0
        %1828 = vmatprep.subr.mxu0 0.0
        %1829 = vmatpush2.xpose.msra.mxu0 0.0
        %1830 = vmatprep.subr.mxu0 0.0
        %1831 = vmatpush2.xpose.msra.mxu0 0.0
        %1832 = vmatprep.subr.mxu0 0.0
        %1833 = vmatpush2.xpose.msra.mxu0 0.0
        %1834 = vmatprep.subr.mxu0 0.0
        %1835 = vmatpush2.xpose.msra.mxu0 0.0
        %1836 = vmatprep.subr.mxu0 0.0
        %1837 = vmatpush2.xpose.msra.mxu0 0.0
        %1838 = vmatprep.subr.mxu0 0.0
        %1839 = vmatpush2.xpose.msra.mxu0 0.0
        %1840 = vmatprep.subr.mxu0 0.0
        %1841 = vmatpush2.xpose.msra.mxu0 0.0
        %1842 = vmatprep.subr.mxu0 0.0
        %1843 = vmatpush2.xpose.msra.mxu0 0.0
        %1844 = vmatprep.subr.mxu0 0.0
        %1845 = vmatpush2.xpose.msra.mxu0 0.0
        %1846 = vmatprep.subr.mxu0 0.0
        %1847 = vmatpush2.xpose.msra.mxu0 0.0
        %1848 = vmatprep.subr.mxu0 0.0
        %1849 = vmatpush2.xpose.msra.mxu0 0.0
        %1850 = vmatprep.subr.mxu0 0.0
        %1851 = vmatpush2.xpose.msra.mxu0 0.0
        %1852 = vmatprep.subr.mxu0 0.0
        %1853 = vmatpush2.xpose.msra.mxu0 0.0
        %1854 = vmatprep.mubr.f32.mxu0 0.0
        %1855 = vmatmul.mubr.f32.gmra.mxu0 %v1786
        %v1856 = vpop.f32.mrf.mxu0
        %v1857 = vadd.f32 0.0, %v1856
        %v1858 = vpop.f32.mrf.mxu0
        %1859 = vdwg.mxu0
        %1860 = vrot.lane.b32.xlu0 %v954, 112
        %v1861 = vpop.permute.xlu0 %1860
        %1862 = vrot.lane.b32.xlu0 %v1040, 112
        %v1863 = vpop.permute.xlu0 %1862
        %v1864 = vsel %vm1129, %v1861, 0
        %v1866 = vsel %vm1129, %v1863, 0
        %1868 = vmatprep.subr.mxu0 0.0
        %1869 = vmatpush1.xpose.msra.mxu0 0.0
        %1870 = vmatprep.subr.mxu0 0.0
        %1871 = vmatpush1.xpose.msra.mxu0 0.0
        %1872 = vmatprep.subr.mxu0 0.0
        %1873 = vmatpush1.xpose.msra.mxu0 0.0
        %1874 = vmatprep.subr.mxu0 0.0
        %1875 = vmatpush1.xpose.msra.mxu0 0.0
        %1876 = vmatprep.subr.mxu0 0.0
        %1877 = vmatpush1.xpose.msra.mxu0 0.0
        %1878 = vmatprep.subr.mxu0 0.0
        %1879 = vmatpush1.xpose.msra.mxu0 0.0
        %1880 = vmatprep.subr.mxu0 0.0
        %1881 = vmatpush1.xpose.msra.mxu0 0.0
        %1882 = vmatprep.subr.mxu0 0.0
        %1883 = vmatpush1.xpose.msra.mxu0 0.0
        %1884 = vmatprep.subr.mxu0 0.0
        %1885 = vmatpush1.xpose.msra.mxu0 0.0
        %1886 = vmatprep.subr.mxu0 0.0
        %1887 = vmatpush1.xpose.msra.mxu0 0.0
        %1888 = vmatprep.subr.mxu0 0.0
        %1889 = vmatpush1.xpose.msra.mxu0 0.0
        %1890 = vmatprep.subr.mxu0 0.0
        %1891 = vmatpush1.xpose.msra.mxu0 0.0
        %1892 = vmatprep.subr.mxu0 0.0
        %1893 = vmatpush1.xpose.msra.mxu0 0.0
        %1894 = vmatprep.subr.mxu0 0.0
        %1895 = vmatpush1.xpose.msra.mxu0 0.0
        %1896 = vmatprep.subr.mxu0 0.0
        %1897 = vmatpush1.xpose.msra.mxu0 0.0
        %1898 = vmatprep.subr.mxu0 0.0
        %1899 = vmatpush1.xpose.msra.mxu0 %v1866
        %1900 = vmatprep.subr.mxu0 0.0
        %1901 = vmatpush2.xpose.msra.mxu0 0.0
        %1902 = vmatprep.subr.mxu0 0.0
        %1903 = vmatpush2.xpose.msra.mxu0 0.0
        %1904 = vmatprep.subr.mxu0 0.0
        %1905 = vmatpush2.xpose.msra.mxu0 0.0
        %1906 = vmatprep.subr.mxu0 0.0
        %1907 = vmatpush2.xpose.msra.mxu0 0.0
        %1908 = vmatprep.subr.mxu0 0.0
        %1909 = vmatpush2.xpose.msra.mxu0 0.0
        %1910 = vmatprep.subr.mxu0 0.0
        %1911 = vmatpush2.xpose.msra.mxu0 0.0
        %1912 = vmatprep.subr.mxu0 0.0
        %1913 = vmatpush2.xpose.msra.mxu0 0.0
        %1914 = vmatprep.subr.mxu0 0.0
        %1915 = vmatpush2.xpose.msra.mxu0 0.0
        %1916 = vmatprep.subr.mxu0 0.0
        %1917 = vmatpush2.xpose.msra.mxu0 0.0
        %1918 = vmatprep.subr.mxu0 0.0
        %1919 = vmatpush2.xpose.msra.mxu0 0.0
        %1920 = vmatprep.subr.mxu0 0.0
        %1921 = vmatpush2.xpose.msra.mxu0 0.0
        %1922 = vmatprep.subr.mxu0 0.0
        %1923 = vmatpush2.xpose.msra.mxu0 0.0
        %1924 = vmatprep.subr.mxu0 0.0
        %1925 = vmatpush2.xpose.msra.mxu0 0.0
        %1926 = vmatprep.subr.mxu0 0.0
        %1927 = vmatpush2.xpose.msra.mxu0 0.0
        %1928 = vmatprep.subr.mxu0 0.0
        %1929 = vmatpush2.xpose.msra.mxu0 0.0
        %1930 = vmatprep.subr.mxu0 0.0
        %1931 = vmatpush2.xpose.msra.mxu0 0.0
        %1932 = vmatprep.mubr.f32.mxu0 0.0
        %1933 = vmatmul.mubr.f32.gmra.mxu0 %v1864
        %v1934 = vpop.f32.mrf.mxu0
        %v1935 = vadd.f32 0.0, %v1934
        %v1936 = vpop.f32.mrf.mxu0
        %1937 = vdwg.mxu0
        %v1938 = vsel %vm1129, %v1857, -inf
        %1939 = vmax.xlane.f32.xlu0 %v1938
        %v1940 = vpop.xlane.xlu0 %1939
        %v1941 = vsel %vm1129, %v1935, -inf
        %1942 = vmax.xlane.f32.xlu0 %v1941
        %v1943 = vpop.xlane.xlu0 %1942
        %v1944 = vsub.f32 %v1857, %v1940
        %v1945 = vsub.f32 %v1935, %v1943
        %v1946 = vmul.f32 %v1944, 1.442695
        %v1947 = vpow.pop %v1946
        %v1948 = vmul.f32 %v1945, 1.442695
        %v1949 = vpow.pop %v1948
        %v1950 = vsel %vm1129, %v1947, 0.0
        %1951 = vadd.xlane.f32.xlu0 %v1950
        %v1952 = vpop.xlane.xlu0 %1951
        %v1953 = vsel %vm1129, %v1949, 0.0
        %1954 = vadd.xlane.f32.xlu0 %v1953
        %v1955 = vpop.xlane.xlu0 %1954
        %v1956 = vrcp.pop %v1952
        %v1957 = vrcp.pop %v1955
        %v1958 = vmul.f32 %v1947, %v1956
        %v1959 = vmul.f32 %v1949, %v1957
        %1960 = vrot.lane.b32.xlu0 %v1121, 112
        %v1961 = vpop.permute.xlu0 %1960
        %v1964 = vsel %vm1129, %v1958, 0
        %1966 = vmatprep.subr.mxu0 0.0
        %1967 = vmatpush1.msra.mxu0 0.0
        %1968 = vmatprep.subr.mxu0 0.0
        %1969 = vmatpush1.msra.mxu0 0.0
        %1970 = vmatprep.subr.mxu0 0.0
        %1971 = vmatpush1.msra.mxu0 0.0
        %1972 = vmatprep.subr.mxu0 0.0
        %1973 = vmatpush1.msra.mxu0 0.0
        %1974 = vmatprep.subr.mxu0 0.0
        %1975 = vmatpush1.msra.mxu0 0.0
        %1976 = vmatprep.subr.mxu0 0.0
        %1977 = vmatpush1.msra.mxu0 0.0
        %1978 = vmatprep.subr.mxu0 0.0
        %1979 = vmatpush1.msra.mxu0 0.0
        %1980 = vmatprep.subr.mxu0 0.0
        %1981 = vmatpush1.msra.mxu0 0.0
        %1982 = vmatprep.subr.mxu0 0.0
        %1983 = vmatpush1.msra.mxu0 0.0
        %1984 = vmatprep.subr.mxu0 0.0
        %1985 = vmatpush1.msra.mxu0 0.0
        %1986 = vmatprep.subr.mxu0 0.0
        %1987 = vmatpush1.msra.mxu0 0.0
        %1988 = vmatprep.subr.mxu0 0.0
        %1989 = vmatpush1.msra.mxu0 0.0
        %1990 = vmatprep.subr.mxu0 0.0
        %1991 = vmatpush1.msra.mxu0 0.0
        %1992 = vmatprep.subr.mxu0 0.0
        %1993 = vmatpush1.msra.mxu0 0.0
        %1994 = vmatprep.subr.mxu0 0.0
        %1995 = vmatpush1.msra.mxu0 0.0
        %1996 = vmatprep.subr.mxu0 0.0
        %1997 = vmatpush1.msra.mxu0 %v1961
        %1998 = vmatprep.subr.mxu0 0.0
        %1999 = vmatpush2.msra.mxu0 0.0
        %2000 = vmatprep.subr.mxu0 0.0
        %2001 = vmatpush2.msra.mxu0 0.0
        %2002 = vmatprep.subr.mxu0 0.0
        %2003 = vmatpush2.msra.mxu0 0.0
        %2004 = vmatprep.subr.mxu0 0.0
        %2005 = vmatpush2.msra.mxu0 0.0
        %2006 = vmatprep.subr.mxu0 0.0
        %2007 = vmatpush2.msra.mxu0 0.0
        %2008 = vmatprep.subr.mxu0 0.0
        %2009 = vmatpush2.msra.mxu0 0.0
        %2010 = vmatprep.subr.mxu0 0.0
        %2011 = vmatpush2.msra.mxu0 0.0
        %2012 = vmatprep.subr.mxu0 0.0
        %2013 = vmatpush2.msra.mxu0 0.0
        %2014 = vmatprep.subr.mxu0 0.0
        %2015 = vmatpush2.msra.mxu0 0.0
        %2016 = vmatprep.subr.mxu0 0.0
        %2017 = vmatpush2.msra.mxu0 0.0
        %2018 = vmatprep.subr.mxu0 0.0
        %2019 = vmatpush2.msra.mxu0 0.0
        %2020 = vmatprep.subr.mxu0 0.0
        %2021 = vmatpush2.msra.mxu0 0.0
        %2022 = vmatprep.subr.mxu0 0.0
        %2023 = vmatpush2.msra.mxu0 0.0
        %2024 = vmatprep.subr.mxu0 0.0
        %2025 = vmatpush2.msra.mxu0 0.0
        %2026 = vmatprep.subr.mxu0 0.0
        %2027 = vmatpush2.msra.mxu0 0.0
        %2028 = vmatprep.subr.mxu0 0.0
        %2029 = vmatpush2.msra.mxu0 0.0
        %2030 = vmatprep.mubr.f32.mxu0 0.0
        %2031 = vmatmul.mubr.f32.gmra.mxu0 %v1964
        %v2032 = vpop.f32.mrf.mxu0
        %v2033 = vadd.f32 0.0, %v2032
        %v2034 = vpop.f32.mrf.mxu0
        %2035 = vdwg.mxu0
        %2036 = vrot.lane.b32.xlu0 %v1126, 112
        %v2037 = vpop.permute.xlu0 %2036
        %v2040 = vsel %vm1129, %v1959, 0
        %2042 = vmatprep.subr.mxu0 0.0
        %2043 = vmatpush1.msra.mxu0 0.0
        %2044 = vmatprep.subr.mxu0 0.0
        %2045 = vmatpush1.msra.mxu0 0.0
        %2046 = vmatprep.subr.mxu0 0.0
        %2047 = vmatpush1.msra.mxu0 0.0
        %2048 = vmatprep.subr.mxu0 0.0
        %2049 = vmatpush1.msra.mxu0 0.0
        %2050 = vmatprep.subr.mxu0 0.0
        %2051 = vmatpush1.msra.mxu0 0.0
        %2052 = vmatprep.subr.mxu0 0.0
        %2053 = vmatpush1.msra.mxu0 0.0
        %2054 = vmatprep.subr.mxu0 0.0
        %2055 = vmatpush1.msra.mxu0 0.0
        %2056 = vmatprep.subr.mxu0 0.0
        %2057 = vmatpush1.msra.mxu0 0.0
        %2058 = vmatprep.subr.mxu0 0.0
        %2059 = vmatpush1.msra.mxu0 0.0
        %2060 = vmatprep.subr.mxu0 0.0
        %2061 = vmatpush1.msra.mxu0 0.0
        %2062 = vmatprep.subr.mxu0 0.0
        %2063 = vmatpush1.msra.mxu0 0.0
        %2064 = vmatprep.subr.mxu0 0.0
        %2065 = vmatpush1.msra.mxu0 0.0
        %2066 = vmatprep.subr.mxu0 0.0
        %2067 = vmatpush1.msra.mxu0 0.0
        %2068 = vmatprep.subr.mxu0 0.0
        %2069 = vmatpush1.msra.mxu0 0.0
        %2070 = vmatprep.subr.mxu0 0.0
        %2071 = vmatpush1.msra.mxu0 0.0
        %2072 = vmatprep.subr.mxu0 0.0
        %2073 = vmatpush1.msra.mxu0 %v2037
        %2074 = vmatprep.subr.mxu0 0.0
        %2075 = vmatpush2.msra.mxu0 0.0
        %2076 = vmatprep.subr.mxu0 0.0
        %2077 = vmatpush2.msra.mxu0 0.0
        %2078 = vmatprep.subr.mxu0 0.0
        %2079 = vmatpush2.msra.mxu0 0.0
        %2080 = vmatprep.subr.mxu0 0.0
        %2081 = vmatpush2.msra.mxu0 0.0
        %2082 = vmatprep.subr.mxu0 0.0
        %2083 = vmatpush2.msra.mxu0 0.0
        %2084 = vmatprep.subr.mxu0 0.0
        %2085 = vmatpush2.msra.mxu0 0.0
        %2086 = vmatprep.subr.mxu0 0.0
        %2087 = vmatpush2.msra.mxu0 0.0
        %2088 = vmatprep.subr.mxu0 0.0
        %2089 = vmatpush2.msra.mxu0 0.0
        %2090 = vmatprep.subr.mxu0 0.0
        %2091 = vmatpush2.msra.mxu0 0.0
        %2092 = vmatprep.subr.mxu0 0.0
        %2093 = vmatpush2.msra.mxu0 0.0
        %2094 = vmatprep.subr.mxu0 0.0
        %2095 = vmatpush2.msra.mxu0 0.0
        %2096 = vmatprep.subr.mxu0 0.0
        %2097 = vmatpush2.msra.mxu0 0.0
        %2098 = vmatprep.subr.mxu0 0.0
        %2099 = vmatpush2.msra.mxu0 0.0
        %2100 = vmatprep.subr.mxu0 0.0
        %2101 = vmatpush2.msra.mxu0 0.0
        %2102 = vmatprep.subr.mxu0 0.0
        %2103 = vmatpush2.msra.mxu0 0.0
        %2104 = vmatprep.subr.mxu0 0.0
        %2105 = vmatpush2.msra.mxu0 0.0
        %2106 = vmatprep.mubr.f32.mxu0 0.0
        %2107 = vmatmul.mubr.f32.gmra.mxu0 %v2040
        %v2108 = vpop.f32.mrf.mxu0
        %v2109 = vadd.f32 0.0, %v2108
        %v2110 = vpop.f32.mrf.mxu0
        %2111 = vdwg.mxu0
        %2112 = vrot.lane.b32.xlu0 %v949, 104
        %v2113 = vpop.permute.xlu0 %2112
        %2114 = vrot.lane.b32.xlu0 %v1035, 104
        %v2115 = vpop.permute.xlu0 %2114
        %v2116 = vsel %vm1129, %v2113, 0
        %v2118 = vsel %vm1129, %v2115, 0
        %2120 = vmatprep.subr.mxu0 0.0
        %2121 = vmatpush1.xpose.msra.mxu0 0.0
        %2122 = vmatprep.subr.mxu0 0.0
        %2123 = vmatpush1.xpose.msra.mxu0 0.0
        %2124 = vmatprep.subr.mxu0 0.0
        %2125 = vmatpush1.xpose.msra.mxu0 0.0
        %2126 = vmatprep.subr.mxu0 0.0
        %2127 = vmatpush1.xpose.msra.mxu0 0.0
        %2128 = vmatprep.subr.mxu0 0.0
        %2129 = vmatpush1.xpose.msra.mxu0 0.0
        %2130 = vmatprep.subr.mxu0 0.0
        %2131 = vmatpush1.xpose.msra.mxu0 0.0
        %2132 = vmatprep.subr.mxu0 0.0
        %2133 = vmatpush1.xpose.msra.mxu0 0.0
        %2134 = vmatprep.subr.mxu0 0.0
        %2135 = vmatpush1.xpose.msra.mxu0 0.0
        %2136 = vmatprep.subr.mxu0 0.0
        %2137 = vmatpush1.xpose.msra.mxu0 0.0
        %2138 = vmatprep.subr.mxu0 0.0
        %2139 = vmatpush1.xpose.msra.mxu0 0.0
        %2140 = vmatprep.subr.mxu0 0.0
        %2141 = vmatpush1.xpose.msra.mxu0 0.0
        %2142 = vmatprep.subr.mxu0 0.0
        %2143 = vmatpush1.xpose.msra.mxu0 0.0
        %2144 = vmatprep.subr.mxu0 0.0
        %2145 = vmatpush1.xpose.msra.mxu0 0.0
        %2146 = vmatprep.subr.mxu0 0.0
        %2147 = vmatpush1.xpose.msra.mxu0 0.0
        %2148 = vmatprep.subr.mxu0 0.0
        %2149 = vmatpush1.xpose.msra.mxu0 0.0
        %2150 = vmatprep.subr.mxu0 0.0
        %2151 = vmatpush1.xpose.msra.mxu0 %v2118
        %2152 = vmatprep.subr.mxu0 0.0
        %2153 = vmatpush2.xpose.msra.mxu0 0.0
        %2154 = vmatprep.subr.mxu0 0.0
        %2155 = vmatpush2.xpose.msra.mxu0 0.0
        %2156 = vmatprep.subr.mxu0 0.0
        %2157 = vmatpush2.xpose.msra.mxu0 0.0
        %2158 = vmatprep.subr.mxu0 0.0
        %2159 = vmatpush2.xpose.msra.mxu0 0.0
        %2160 = vmatprep.subr.mxu0 0.0
        %2161 = vmatpush2.xpose.msra.mxu0 0.0
        %2162 = vmatprep.subr.mxu0 0.0
        %2163 = vmatpush2.xpose.msra.mxu0 0.0
        %2164 = vmatprep.subr.mxu0 0.0
        %2165 = vmatpush2.xpose.msra.mxu0 0.0
        %2166 = vmatprep.subr.mxu0 0.0
        %2167 = vmatpush2.xpose.msra.mxu0 0.0
        %2168 = vmatprep.subr.mxu0 0.0
        %2169 = vmatpush2.xpose.msra.mxu0 0.0
        %2170 = vmatprep.subr.mxu0 0.0
        %2171 = vmatpush2.xpose.msra.mxu0 0.0
        %2172 = vmatprep.subr.mxu0 0.0
        %2173 = vmatpush2.xpose.msra.mxu0 0.0
        %2174 = vmatprep.subr.mxu0 0.0
        %2175 = vmatpush2.xpose.msra.mxu0 0.0
        %2176 = vmatprep.subr.mxu0 0.0
        %2177 = vmatpush2.xpose.msra.mxu0 0.0
        %2178 = vmatprep.subr.mxu0 0.0
        %2179 = vmatpush2.xpose.msra.mxu0 0.0
        %2180 = vmatprep.subr.mxu0 0.0
        %2181 = vmatpush2.xpose.msra.mxu0 0.0
        %2182 = vmatprep.subr.mxu0 0.0
        %2183 = vmatpush2.xpose.msra.mxu0 0.0
        %2184 = vmatprep.mubr.f32.mxu0 0.0
        %2185 = vmatmul.mubr.f32.gmra.mxu0 %v2116
        %v2186 = vpop.f32.mrf.mxu0
        %v2187 = vadd.f32 0.0, %v2186
        %v2188 = vpop.f32.mrf.mxu0
        %2189 = vdwg.mxu0
        %2190 = vrot.lane.b32.xlu0 %v954, 104
        %v2191 = vpop.permute.xlu0 %2190
        %2192 = vrot.lane.b32.xlu0 %v1040, 104
        %v2193 = vpop.permute.xlu0 %2192
        %v2194 = vsel %vm1129, %v2191, 0
        %v2196 = vsel %vm1129, %v2193, 0
        %2198 = vmatprep.subr.mxu0 0.0
        %2199 = vmatpush1.xpose.msra.mxu0 0.0
        %2200 = vmatprep.subr.mxu0 0.0
        %2201 = vmatpush1.xpose.msra.mxu0 0.0
        %2202 = vmatprep.subr.mxu0 0.0
        %2203 = vmatpush1.xpose.msra.mxu0 0.0
        %2204 = vmatprep.subr.mxu0 0.0
        %2205 = vmatpush1.xpose.msra.mxu0 0.0
        %2206 = vmatprep.subr.mxu0 0.0
        %2207 = vmatpush1.xpose.msra.mxu0 0.0
        %2208 = vmatprep.subr.mxu0 0.0
        %2209 = vmatpush1.xpose.msra.mxu0 0.0
        %2210 = vmatprep.subr.mxu0 0.0
        %2211 = vmatpush1.xpose.msra.mxu0 0.0
        %2212 = vmatprep.subr.mxu0 0.0
        %2213 = vmatpush1.xpose.msra.mxu0 0.0
        %2214 = vmatprep.subr.mxu0 0.0
        %2215 = vmatpush1.xpose.msra.mxu0 0.0
        %2216 = vmatprep.subr.mxu0 0.0
        %2217 = vmatpush1.xpose.msra.mxu0 0.0
        %2218 = vmatprep.subr.mxu0 0.0
        %2219 = vmatpush1.xpose.msra.mxu0 0.0
        %2220 = vmatprep.subr.mxu0 0.0
        %2221 = vmatpush1.xpose.msra.mxu0 0.0
        %2222 = vmatprep.subr.mxu0 0.0
        %2223 = vmatpush1.xpose.msra.mxu0 0.0
        %2224 = vmatprep.subr.mxu0 0.0
        %2225 = vmatpush1.xpose.msra.mxu0 0.0
        %2226 = vmatprep.subr.mxu0 0.0
        %2227 = vmatpush1.xpose.msra.mxu0 0.0
        %2228 = vmatprep.subr.mxu0 0.0
        %2229 = vmatpush1.xpose.msra.mxu0 %v2196
        %2230 = vmatprep.subr.mxu0 0.0
        %2231 = vmatpush2.xpose.msra.mxu0 0.0
        %2232 = vmatprep.subr.mxu0 0.0
        %2233 = vmatpush2.xpose.msra.mxu0 0.0
        %2234 = vmatprep.subr.mxu0 0.0
        %2235 = vmatpush2.xpose.msra.mxu0 0.0
        %2236 = vmatprep.subr.mxu0 0.0
        %2237 = vmatpush2.xpose.msra.mxu0 0.0
        %2238 = vmatprep.subr.mxu0 0.0
        %2239 = vmatpush2.xpose.msra.mxu0 0.0
        %2240 = vmatprep.subr.mxu0 0.0
        %2241 = vmatpush2.xpose.msra.mxu0 0.0
        %2242 = vmatprep.subr.mxu0 0.0
        %2243 = vmatpush2.xpose.msra.mxu0 0.0
        %2244 = vmatprep.subr.mxu0 0.0
        %2245 = vmatpush2.xpose.msra.mxu0 0.0
        %2246 = vmatprep.subr.mxu0 0.0
        %2247 = vmatpush2.xpose.msra.mxu0 0.0
        %2248 = vmatprep.subr.mxu0 0.0
        %2249 = vmatpush2.xpose.msra.mxu0 0.0
        %2250 = vmatprep.subr.mxu0 0.0
        %2251 = vmatpush2.xpose.msra.mxu0 0.0
        %2252 = vmatprep.subr.mxu0 0.0
        %2253 = vmatpush2.xpose.msra.mxu0 0.0
        %2254 = vmatprep.subr.mxu0 0.0
        %2255 = vmatpush2.xpose.msra.mxu0 0.0
        %2256 = vmatprep.subr.mxu0 0.0
        %2257 = vmatpush2.xpose.msra.mxu0 0.0
        %2258 = vmatprep.subr.mxu0 0.0
        %2259 = vmatpush2.xpose.msra.mxu0 0.0
        %2260 = vmatprep.subr.mxu0 0.0
        %2261 = vmatpush2.xpose.msra.mxu0 0.0
        %2262 = vmatprep.mubr.f32.mxu0 0.0
        %2263 = vmatmul.mubr.f32.gmra.mxu0 %v2194
        %v2264 = vpop.f32.mrf.mxu0
        %v2265 = vadd.f32 0.0, %v2264
        %v2266 = vpop.f32.mrf.mxu0
        %2267 = vdwg.mxu0
        %v2268 = vsel %vm1129, %v2187, -inf
        %2269 = vmax.xlane.f32.xlu0 %v2268
        %v2270 = vpop.xlane.xlu0 %2269
        %v2271 = vsel %vm1129, %v2265, -inf
        %2272 = vmax.xlane.f32.xlu0 %v2271
        %v2273 = vpop.xlane.xlu0 %2272
        %v2274 = vsub.f32 %v2187, %v2270
        %v2275 = vsub.f32 %v2265, %v2273
        %v2276 = vmul.f32 %v2274, 1.442695
        %v2277 = vpow.pop %v2276
        %v2278 = vmul.f32 %v2275, 1.442695
        %v2279 = vpow.pop %v2278
        %v2280 = vsel %vm1129, %v2277, 0.0
        %2281 = vadd.xlane.f32.xlu0 %v2280
        %v2282 = vpop.xlane.xlu0 %2281
        %v2283 = vsel %vm1129, %v2279, 0.0
        %2284 = vadd.xlane.f32.xlu0 %v2283
        %v2285 = vpop.xlane.xlu0 %2284
        %v2286 = vrcp.pop %v2282
        %v2287 = vrcp.pop %v2285
        %v2288 = vmul.f32 %v2277, %v2286
        %v2289 = vmul.f32 %v2279, %v2287
        %2290 = vrot.lane.b32.xlu0 %v1121, 104
        %v2291 = vpop.permute.xlu0 %2290
        %v2294 = vsel %vm1129, %v2288, 0
        %2296 = vmatprep.subr.mxu0 0.0
        %2297 = vmatpush1.msra.mxu0 0.0
        %2298 = vmatprep.subr.mxu0 0.0
        %2299 = vmatpush1.msra.mxu0 0.0
        %2300 = vmatprep.subr.mxu0 0.0
        %2301 = vmatpush1.msra.mxu0 0.0
        %2302 = vmatprep.subr.mxu0 0.0
        %2303 = vmatpush1.msra.mxu0 0.0
        %2304 = vmatprep.subr.mxu0 0.0
        %2305 = vmatpush1.msra.mxu0 0.0
        %2306 = vmatprep.subr.mxu0 0.0
        %2307 = vmatpush1.msra.mxu0 0.0
        %2308 = vmatprep.subr.mxu0 0.0
        %2309 = vmatpush1.msra.mxu0 0.0
        %2310 = vmatprep.subr.mxu0 0.0
        %2311 = vmatpush1.msra.mxu0 0.0
        %2312 = vmatprep.subr.mxu0 0.0
        %2313 = vmatpush1.msra.mxu0 0.0
        %2314 = vmatprep.subr.mxu0 0.0
        %2315 = vmatpush1.msra.mxu0 0.0
        %2316 = vmatprep.subr.mxu0 0.0
        %2317 = vmatpush1.msra.mxu0 0.0
        %2318 = vmatprep.subr.mxu0 0.0
        %2319 = vmatpush1.msra.mxu0 0.0
        %2320 = vmatprep.subr.mxu0 0.0
        %2321 = vmatpush1.msra.mxu0 0.0
        %2322 = vmatprep.subr.mxu0 0.0
        %2323 = vmatpush1.msra.mxu0 0.0
        %2324 = vmatprep.subr.mxu0 0.0
        %2325 = vmatpush1.msra.mxu0 0.0
        %2326 = vmatprep.subr.mxu0 0.0
        %2327 = vmatpush1.msra.mxu0 %v2291
        %2328 = vmatprep.subr.mxu0 0.0
        %2329 = vmatpush2.msra.mxu0 0.0
        %2330 = vmatprep.subr.mxu0 0.0
        %2331 = vmatpush2.msra.mxu0 0.0
        %2332 = vmatprep.subr.mxu0 0.0
        %2333 = vmatpush2.msra.mxu0 0.0
        %2334 = vmatprep.subr.mxu0 0.0
        %2335 = vmatpush2.msra.mxu0 0.0
        %2336 = vmatprep.subr.mxu0 0.0
        %2337 = vmatpush2.msra.mxu0 0.0
        %2338 = vmatprep.subr.mxu0 0.0
        %2339 = vmatpush2.msra.mxu0 0.0
        %2340 = vmatprep.subr.mxu0 0.0
        %2341 = vmatpush2.msra.mxu0 0.0
        %2342 = vmatprep.subr.mxu0 0.0
        %2343 = vmatpush2.msra.mxu0 0.0
        %2344 = vmatprep.subr.mxu0 0.0
        %2345 = vmatpush2.msra.mxu0 0.0
        %2346 = vmatprep.subr.mxu0 0.0
        %2347 = vmatpush2.msra.mxu0 0.0
        %2348 = vmatprep.subr.mxu0 0.0
        %2349 = vmatpush2.msra.mxu0 0.0
        %2350 = vmatprep.subr.mxu0 0.0
        %2351 = vmatpush2.msra.mxu0 0.0
        %2352 = vmatprep.subr.mxu0 0.0
        %2353 = vmatpush2.msra.mxu0 0.0
        %2354 = vmatprep.subr.mxu0 0.0
        %2355 = vmatpush2.msra.mxu0 0.0
        %2356 = vmatprep.subr.mxu0 0.0
        %2357 = vmatpush2.msra.mxu0 0.0
        %2358 = vmatprep.subr.mxu0 0.0
        %2359 = vmatpush2.msra.mxu0 0.0
        %2360 = vmatprep.mubr.f32.mxu0 0.0
        %2361 = vmatmul.mubr.f32.gmra.mxu0 %v2294
        %v2362 = vpop.f32.mrf.mxu0
        %v2363 = vadd.f32 0.0, %v2362
        %v2364 = vpop.f32.mrf.mxu0
        %2365 = vdwg.mxu0
        %2366 = vrot.lane.b32.xlu0 %v1126, 104
        %v2367 = vpop.permute.xlu0 %2366
        %v2370 = vsel %vm1129, %v2289, 0
        %2372 = vmatprep.subr.mxu0 0.0
        %2373 = vmatpush1.msra.mxu0 0.0
        %2374 = vmatprep.subr.mxu0 0.0
        %2375 = vmatpush1.msra.mxu0 0.0
        %2376 = vmatprep.subr.mxu0 0.0
        %2377 = vmatpush1.msra.mxu0 0.0
        %2378 = vmatprep.subr.mxu0 0.0
        %2379 = vmatpush1.msra.mxu0 0.0
        %2380 = vmatprep.subr.mxu0 0.0
        %2381 = vmatpush1.msra.mxu0 0.0
        %2382 = vmatprep.subr.mxu0 0.0
        %2383 = vmatpush1.msra.mxu0 0.0
        %2384 = vmatprep.subr.mxu0 0.0
        %2385 = vmatpush1.msra.mxu0 0.0
        %2386 = vmatprep.subr.mxu0 0.0
        %2387 = vmatpush1.msra.mxu0 0.0
        %2388 = vmatprep.subr.mxu0 0.0
        %2389 = vmatpush1.msra.mxu0 0.0
        %2390 = vmatprep.subr.mxu0 0.0
        %2391 = vmatpush1.msra.mxu0 0.0
        %2392 = vmatprep.subr.mxu0 0.0
        %2393 = vmatpush1.msra.mxu0 0.0
        %2394 = vmatprep.subr.mxu0 0.0
        %2395 = vmatpush1.msra.mxu0 0.0
        %2396 = vmatprep.subr.mxu0 0.0
        %2397 = vmatpush1.msra.mxu0 0.0
        %2398 = vmatprep.subr.mxu0 0.0
        %2399 = vmatpush1.msra.mxu0 0.0
        %2400 = vmatprep.subr.mxu0 0.0
        %2401 = vmatpush1.msra.mxu0 0.0
        %2402 = vmatprep.subr.mxu0 0.0
        %2403 = vmatpush1.msra.mxu0 %v2367
        %2404 = vmatprep.subr.mxu0 0.0
        %2405 = vmatpush2.msra.mxu0 0.0
        %2406 = vmatprep.subr.mxu0 0.0
        %2407 = vmatpush2.msra.mxu0 0.0
        %2408 = vmatprep.subr.mxu0 0.0
        %2409 = vmatpush2.msra.mxu0 0.0
        %2410 = vmatprep.subr.mxu0 0.0
        %2411 = vmatpush2.msra.mxu0 0.0
        %2412 = vmatprep.subr.mxu0 0.0
        %2413 = vmatpush2.msra.mxu0 0.0
        %2414 = vmatprep.subr.mxu0 0.0
        %2415 = vmatpush2.msra.mxu0 0.0
        %2416 = vmatprep.subr.mxu0 0.0
        %2417 = vmatpush2.msra.mxu0 0.0
        %2418 = vmatprep.subr.mxu0 0.0
        %2419 = vmatpush2.msra.mxu0 0.0
        %2420 = vmatprep.subr.mxu0 0.0
        %2421 = vmatpush2.msra.mxu0 0.0
        %2422 = vmatprep.subr.mxu0 0.0
        %2423 = vmatpush2.msra.mxu0 0.0
        %2424 = vmatprep.subr.mxu0 0.0
        %2425 = vmatpush2.msra.mxu0 0.0
        %2426 = vmatprep.subr.mxu0 0.0
        %2427 = vmatpush2.msra.mxu0 0.0
        %2428 = vmatprep.subr.mxu0 0.0
        %2429 = vmatpush2.msra.mxu0 0.0
        %2430 = vmatprep.subr.mxu0 0.0
        %2431 = vmatpush2.msra.mxu0 0.0
        %2432 = vmatprep.subr.mxu0 0.0
        %2433 = vmatpush2.msra.mxu0 0.0
        %2434 = vmatprep.subr.mxu0 0.0
        %2435 = vmatpush2.msra.mxu0 0.0
        %2436 = vmatprep.mubr.f32.mxu0 0.0
        %2437 = vmatmul.mubr.f32.gmra.mxu0 %v2370
        %v2438 = vpop.f32.mrf.mxu0
        %v2439 = vadd.f32 0.0, %v2438
        %v2440 = vpop.f32.mrf.mxu0
        %2441 = vdwg.mxu0
        %2444 = vrot.lane.b32.xlu0 %v1702, 8
        %v2445 = vpop.permute.xlu0 %2444
        %2446 = vrot.lane.b32.xlu0 %v1779, 8
        %v2447 = vpop.permute.xlu0 %2446
        %2452 = vrot.lane.b32.xlu0 %v2033, 16
        %v2453 = vpop.permute.xlu0 %2452
        %2454 = vrot.lane.b32.xlu0 %v2109, 16
        %v2455 = vpop.permute.xlu0 %2454
        %2460 = vrot.lane.b32.xlu0 %v2363, 24
        %v2461 = vpop.permute.xlu0 %2460
        %2462 = vrot.lane.b32.xlu0 %v2439, 24
        %v2463 = vpop.permute.xlu0 %2462
        %v2466 = vsel %vm1129, %v1374, %v2445
        %v2467 = vsel %vm1129, %v1447, %v2447
        %vm2468 = vcmask 130048
        %v2469 = vsel %vm2468, %v2466, %v2453
        %v2470 = vsel %vm2468, %v2467, %v2455
        %vm2471 = vcmask 195584
        %v2472 = vsel %vm2471, %v2469, %v2461
        %v2473 = vsel %vm2471, %v2470, %v2463
        %v2474 = vld [vmem:[%s692] sm:$0xff]
        %v2475 = vld [vmem:[%s692 + $0x8] sm:$0xff]
        %v2476 = vld [vmem:[%s692 + $0x10] sm:$0xff]
        %v2477 = vld [vmem:[%s692 + $0x18] sm:$0xff]
        %v2479 = vsel %vm875, %v2472, 0
        %v2482 = vsel %vm875, %v2473, 0
        %2484 = vmatprep.subr.mxu0 0.0
        %2485 = vmatpush1.msra.mxu0 0.0
        %2486 = vmatprep.subr.mxu0 0.0
        %2487 = vmatpush1.msra.mxu0 0.0
        %2488 = vmatprep.subr.mxu0 0.0
        %2489 = vmatpush1.msra.mxu0 0.0
        %2490 = vmatprep.subr.mxu0 0.0
        %2491 = vmatpush1.msra.mxu0 0.0
        %2492 = vmatprep.subr.mxu0 0.0
        %2493 = vmatpush1.msra.mxu0 0.0
        %2494 = vmatprep.subr.mxu0 0.0
        %2495 = vmatpush1.msra.mxu0 0.0
        %2496 = vmatprep.subr.mxu0 0.0
        %2497 = vmatpush1.msra.mxu0 0.0
        %2498 = vmatprep.subr.mxu0 0.0
        %2499 = vmatpush1.msra.mxu0 0.0
        %2500 = vmatprep.subr.mxu0 0.0
        %2501 = vmatpush1.msra.mxu0 0.0
        %2502 = vmatprep.subr.mxu0 0.0
        %2503 = vmatpush1.msra.mxu0 0.0
        %2504 = vmatprep.subr.mxu0 0.0
        %2505 = vmatpush1.msra.mxu0 0.0
        %2506 = vmatprep.subr.mxu0 0.0
        %2507 = vmatpush1.msra.mxu0 0.0
        %2508 = vmatprep.subr.mxu0 0.0
        %2509 = vmatpush1.msra.mxu0 %v2477
        %2510 = vmatprep.subr.mxu0 0.0
        %2511 = vmatpush1.msra.mxu0 %v2476
        %2512 = vmatprep.subr.mxu0 0.0
        %2513 = vmatpush1.msra.mxu0 %v2475
        %2514 = vmatprep.subr.mxu0 0.0
        %2515 = vmatpush1.msra.mxu0 %v2474
        %2516 = vmatprep.subr.mxu0 0.0
        %2517 = vmatpush2.msra.mxu0 0.0
        %2518 = vmatprep.subr.mxu0 0.0
        %2519 = vmatpush2.msra.mxu0 0.0
        %2520 = vmatprep.subr.mxu0 0.0
        %2521 = vmatpush2.msra.mxu0 0.0
        %2522 = vmatprep.subr.mxu0 0.0
        %2523 = vmatpush2.msra.mxu0 0.0
        %2524 = vmatprep.subr.mxu0 0.0
        %2525 = vmatpush2.msra.mxu0 0.0
        %2526 = vmatprep.subr.mxu0 0.0
        %2527 = vmatpush2.msra.mxu0 0.0
        %2528 = vmatprep.subr.mxu0 0.0
        %2529 = vmatpush2.msra.mxu0 0.0
        %2530 = vmatprep.subr.mxu0 0.0
        %2531 = vmatpush2.msra.mxu0 0.0
        %2532 = vmatprep.subr.mxu0 0.0
        %2533 = vmatpush2.msra.mxu0 0.0
        %2534 = vmatprep.subr.mxu0 0.0
        %2535 = vmatpush2.msra.mxu0 0.0
        %2536 = vmatprep.subr.mxu0 0.0
        %2537 = vmatpush2.msra.mxu0 0.0
        %2538 = vmatprep.subr.mxu0 0.0
        %2539 = vmatpush2.msra.mxu0 0.0
        %2540 = vmatprep.subr.mxu0 0.0
        %2541 = vmatpush2.msra.mxu0 0.0
        %2542 = vmatprep.subr.mxu0 0.0
        %2543 = vmatpush2.msra.mxu0 0.0
        %2544 = vmatprep.subr.mxu0 0.0
        %2545 = vmatpush2.msra.mxu0 0.0
        %2546 = vmatprep.subr.mxu0 0.0
        %2547 = vmatpush2.msra.mxu0 0.0
        %2548 = vmatprep.mubr.f32.mxu0 0.0
        %2549 = vmatmul.mubr.f32.gmra.mxu0 %v2479
        %v2550 = vpop.f32.mrf.mxu0
        %v2551 = vadd.f32 0.0, %v2550
        %v2552 = vpop.f32.mrf.mxu0
        %2553 = vmatprep.mubr.f32.mxu0 0.0
        %2554 = vmatmul.mubr.f32.gmra.mxu0 %v2482
        %v2555 = vpop.f32.mrf.mxu0
        %v2556 = vadd.f32 0.0, %v2555
        %v2557 = vpop.f32.mrf.mxu0
        %2558 = vdwg.mxu0
        %v2559 = vld [vmem:[%s829] sm:$0x1]
        %v2561 = vlaneseq
        %v2562 = vshrl.u32 %v2561, 7
        %v2563 = vsub.s32 0, %v2562
        %v2564 = vrot.slane %v2559, %v2563
        %v2566 = vadd.f32 %v2551, %v2564
        %v2567 = vadd.f32 %v2556, %v2564
        %v2568 = vadd.f32 %v2566, %v862
        %v2569 = vadd.f32 %v2567, %v863
        %v2570 = vsel %vm875, %v2568, 0.0
        %2571 = vadd.xlane.f32.xlu0 %v2570
        %v2572 = vpop.xlane.xlu0 %2571
        %v2573 = vsel %vm875, %v2569, 0.0
        %2574 = vadd.xlane.f32.xlu0 %v2573
        %v2575 = vpop.xlane.xlu0 %2574
        %v2576 = vrcp.pop 32.0
        %v2577 = vmul.f32 %v2572, %v2576
        %v2578 = vmul.f32 %v2575, %v2576
        %v2579 = vsub.f32 %v2568, %v2577
        %v2580 = vsub.f32 %v2569, %v2578
        %v2581 = vmul.f32 %v2579, %v2579
        %v2582 = vmul.f32 %v2580, %v2580
        %v2583 = vsel %vm875, %v2581, 0.0
        %2584 = vadd.xlane.f32.xlu0 %v2583
        %v2585 = vpop.xlane.xlu0 %2584
        %v2586 = vsel %vm875, %v2582, 0.0
        %2587 = vadd.xlane.f32.xlu0 %v2586
        %v2588 = vpop.xlane.xlu0 %2587
        %v2589 = vmul.f32 %v2585, %v2576
        %v2590 = vmul.f32 %v2588, %v2576
        %v2591 = vadd.f32 %v2589, 1e-05
        %v2592 = vadd.f32 %v2590, 1e-05
        %v2593 = vrsqrt.pop %v2591
        %v2594 = vrsqrt.pop %v2592
        %v2595 = vmul.f32 %v2579, %v2593
        %v2596 = vmul.f32 %v2580, %v2594
        %v2597 = vld [vmem:[%s832] sm:$0x1]
        %v2599 = vlaneseq
        %v2600 = vshrl.u32 %v2599, 7
        %v2601 = vsub.s32 0, %v2600
        %v2602 = vrot.slane %v2597, %v2601
        %v2604 = vmul.f32 %v2595, %v2602
        %v2605 = vmul.f32 %v2596, %v2602
        %v2606 = vld [vmem:[%s835] sm:$0x1]
        %v2608 = vlaneseq
        %v2609 = vshrl.u32 %v2608, 7
        %v2610 = vsub.s32 0, %v2609
        %v2611 = vrot.slane %v2606, %v2610
        %v2613 = vadd.f32 %v2604, %v2611
        %v2614 = vadd.f32 %v2605, %v2611
        %v2615 = vld [vmem:[%s701] sm:$0xff]
        %v2616 = vld [vmem:[%s701 + $0x8] sm:$0xff]
        %v2617 = vld [vmem:[%s701 + $0x10] sm:$0xff]
        %v2618 = vld [vmem:[%s701 + $0x18] sm:$0xff]
        %v2619 = vld [vmem:[%s838] sm:$0x1]
        %v2621 = vlaneseq
        %v2622 = vshrl.u32 %v2621, 7
        %v2623 = vsub.s32 0, %v2622
        %v2624 = vrot.slane %v2619, %v2623
        %v2627 = vsel %vm875, %v2613, 0
        %v2630 = vsel %vm875, %v2614, 0
        %2632 = vmatprep.subr.mxu0 0.0
        %2633 = vmatpush1.msra.mxu0 0.0
        %2634 = vmatprep.subr.mxu0 0.0
        %2635 = vmatpush1.msra.mxu0 0.0
        %2636 = vmatprep.subr.mxu0 0.0
        %2637 = vmatpush1.msra.mxu0 0.0
        %2638 = vmatprep.subr.mxu0 0.0
        %2639 = vmatpush1.msra.mxu0 0.0
        %2640 = vmatprep.subr.mxu0 0.0
        %2641 = vmatpush1.msra.mxu0 0.0
        %2642 = vmatprep.subr.mxu0 0.0
        %2643 = vmatpush1.msra.mxu0 0.0
        %2644 = vmatprep.subr.mxu0 0.0
        %2645 = vmatpush1.msra.mxu0 0.0
        %2646 = vmatprep.subr.mxu0 0.0
        %2647 = vmatpush1.msra.mxu0 0.0
        %2648 = vmatprep.subr.mxu0 0.0
        %2649 = vmatpush1.msra.mxu0 0.0
        %2650 = vmatprep.subr.mxu0 0.0
        %2651 = vmatpush1.msra.mxu0 0.0
        %2652 = vmatprep.subr.mxu0 0.0
        %2653 = vmatpush1.msra.mxu0 0.0
        %2654 = vmatprep.subr.mxu0 0.0
        %2655 = vmatpush1.msra.mxu0 0.0
        %2656 = vmatprep.subr.mxu0 0.0
        %2657 = vmatpush1.msra.mxu0 %v2618
        %2658 = vmatprep.subr.mxu0 0.0
        %2659 = vmatpush1.msra.mxu0 %v2617
        %2660 = vmatprep.subr.mxu0 0.0
        %2661 = vmatpush1.msra.mxu0 %v2616
        %2662 = vmatprep.subr.mxu0 0.0
        %2663 = vmatpush1.msra.mxu0 %v2615
        %2664 = vmatprep.subr.mxu0 0.0
        %2665 = vmatpush2.msra.mxu0 0.0
        %2666 = vmatprep.subr.mxu0 0.0
        %2667 = vmatpush2.msra.mxu0 0.0
        %2668 = vmatprep.subr.mxu0 0.0
        %2669 = vmatpush2.msra.mxu0 0.0
        %2670 = vmatprep.subr.mxu0 0.0
        %2671 = vmatpush2.msra.mxu0 0.0
        %2672 = vmatprep.subr.mxu0 0.0
        %2673 = vmatpush2.msra.mxu0 0.0
        %2674 = vmatprep.subr.mxu0 0.0
        %2675 = vmatpush2.msra.mxu0 0.0
        %2676 = vmatprep.subr.mxu0 0.0
        %2677 = vmatpush2.msra.mxu0 0.0
        %2678 = vmatprep.subr.mxu0 0.0
        %2679 = vmatpush2.msra.mxu0 0.0
        %2680 = vmatprep.subr.mxu0 0.0
        %2681 = vmatpush2.msra.mxu0 0.0
        %2682 = vmatprep.subr.mxu0 0.0
        %2683 = vmatpush2.msra.mxu0 0.0
        %2684 = vmatprep.subr.mxu0 0.0
        %2685 = vmatpush2.msra.mxu0 0.0
        %2686 = vmatprep.subr.mxu0 0.0
        %2687 = vmatpush2.msra.mxu0 0.0
        %2688 = vmatprep.subr.mxu0 0.0
        %2689 = vmatpush2.msra.mxu0 0.0
        %2690 = vmatprep.subr.mxu0 0.0
        %2691 = vmatpush2.msra.mxu0 0.0
        %2692 = vmatprep.subr.mxu0 0.0
        %2693 = vmatpush2.msra.mxu0 0.0
        %2694 = vmatprep.subr.mxu0 0.0
        %2695 = vmatpush2.msra.mxu0 0.0
        %2696 = vmatprep.mubr.f32.mxu0 0.0
        %2697 = vmatmul.mubr.f32.gmra.mxu0 %v2627
        %v2698 = vpop.f32.mrf.mxu0
        %v2699 = vadd.f32 %v2624, %v2698
        %v2700 = vpop.f32.mrf.mxu0
        %2701 = vmatprep.mubr.f32.mxu0 0.0
        %2702 = vmatmul.mubr.f32.gmra.mxu0 %v2630
        %v2703 = vpop.f32.mrf.mxu0
        %v2704 = vadd.f32 %v2624, %v2703
        %v2705 = vpop.f32.mrf.mxu0
        %2706 = vdwg.mxu0
        %v2707 = vmax.f32 %v2699, 0.0
        %v2708 = vmax.f32 %v2704, 0.0
        %v2709 = vld [vmem:[%s843] sm:$0xff]
        %v2710 = vld [vmem:[%s843 + $0x8] sm:$0xff]
        %v2711 = vld [vmem:[%s843 + $0x10] sm:$0xff]
        %v2712 = vld [vmem:[%s843 + $0x18] sm:$0xff]
        %v2713 = vld [vmem:[%s843 + $0x20] sm:$0xff]
        %v2714 = vld [vmem:[%s843 + $0x28] sm:$0xff]
        %v2715 = vld [vmem:[%s843 + $0x30] sm:$0xff]
        %v2716 = vld [vmem:[%s843 + $0x38] sm:$0xff]
        %v2717 = vld [vmem:[%s846] sm:$0x1]
        %v2719 = vlaneseq
        %v2720 = vshrl.u32 %v2719, 7
        %v2721 = vsub.s32 0, %v2720
        %v2722 = vrot.slane %v2717, %v2721
        %vm2724 = vcmask 523264
        %v2726 = vsel %vm2724, %v2707, 0
        %v2729 = vsel %vm2724, %v2708, 0
        %2731 = vmatprep.subr.mxu0 0.0
        %2732 = vmatpush1.msra.mxu0 0.0
        %2733 = vmatprep.subr.mxu0 0.0
        %2734 = vmatpush1.msra.mxu0 0.0
        %2735 = vmatprep.subr.mxu0 0.0
        %2736 = vmatpush1.msra.mxu0 0.0
        %2737 = vmatprep.subr.mxu0 0.0
        %2738 = vmatpush1.msra.mxu0 0.0
        %2739 = vmatprep.subr.mxu0 0.0
        %2740 = vmatpush1.msra.mxu0 0.0
        %2741 = vmatprep.subr.mxu0 0.0
        %2742 = vmatpush1.msra.mxu0 0.0
        %2743 = vmatprep.subr.mxu0 0.0
        %2744 = vmatpush1.msra.mxu0 0.0
        %2745 = vmatprep.subr.mxu0 0.0
        %2746 = vmatpush1.msra.mxu0 0.0
        %2747 = vmatprep.subr.mxu0 0.0
        %2748 = vmatpush1.msra.mxu0 %v2716
        %2749 = vmatprep.subr.mxu0 0.0
        %2750 = vmatpush1.msra.mxu0 %v2715
        %2751 = vmatprep.subr.mxu0 0.0
        %2752 = vmatpush1.msra.mxu0 %v2714
        %2753 = vmatprep.subr.mxu0 0.0
        %2754 = vmatpush1.msra.mxu0 %v2713
        %2755 = vmatprep.subr.mxu0 0.0
        %2756 = vmatpush1.msra.mxu0 %v2712
        %2757 = vmatprep.subr.mxu0 0.0
        %2758 = vmatpush1.msra.mxu0 %v2711
        %2759 = vmatprep.subr.mxu0 0.0
        %2760 = vmatpush1.msra.mxu0 %v2710
        %2761 = vmatprep.subr.mxu0 0.0
        %2762 = vmatpush1.msra.mxu0 %v2709
        %2763 = vmatprep.subr.mxu0 0.0
        %2764 = vmatpush2.msra.mxu0 0.0
        %2765 = vmatprep.subr.mxu0 0.0
        %2766 = vmatpush2.msra.mxu0 0.0
        %2767 = vmatprep.subr.mxu0 0.0
        %2768 = vmatpush2.msra.mxu0 0.0
        %2769 = vmatprep.subr.mxu0 0.0
        %2770 = vmatpush2.msra.mxu0 0.0
        %2771 = vmatprep.subr.mxu0 0.0
        %2772 = vmatpush2.msra.mxu0 0.0
        %2773 = vmatprep.subr.mxu0 0.0
        %2774 = vmatpush2.msra.mxu0 0.0
        %2775 = vmatprep.subr.mxu0 0.0
        %2776 = vmatpush2.msra.mxu0 0.0
        %2777 = vmatprep.subr.mxu0 0.0
        %2778 = vmatpush2.msra.mxu0 0.0
        %2779 = vmatprep.subr.mxu0 0.0
        %2780 = vmatpush2.msra.mxu0 0.0
        %2781 = vmatprep.subr.mxu0 0.0
        %2782 = vmatpush2.msra.mxu0 0.0
        %2783 = vmatprep.subr.mxu0 0.0
        %2784 = vmatpush2.msra.mxu0 0.0
        %2785 = vmatprep.subr.mxu0 0.0
        %2786 = vmatpush2.msra.mxu0 0.0
        %2787 = vmatprep.subr.mxu0 0.0
        %2788 = vmatpush2.msra.mxu0 0.0
        %2789 = vmatprep.subr.mxu0 0.0
        %2790 = vmatpush2.msra.mxu0 0.0
        %2791 = vmatprep.subr.mxu0 0.0
        %2792 = vmatpush2.msra.mxu0 0.0
        %2793 = vmatprep.subr.mxu0 0.0
        %2794 = vmatpush2.msra.mxu0 0.0
        %2795 = vmatprep.mubr.f32.mxu0 0.0
        %2796 = vmatmul.mubr.f32.gmra.mxu0 %v2726
        %v2797 = vpop.f32.mrf.mxu0
        %v2798 = vadd.f32 %v2722, %v2797
        %v2799 = vpop.f32.mrf.mxu0
        %2800 = vmatprep.mubr.f32.mxu0 0.0
        %2801 = vmatmul.mubr.f32.gmra.mxu0 %v2729
        %v2802 = vpop.f32.mrf.mxu0
        %v2803 = vadd.f32 %v2722, %v2802
        %v2804 = vpop.f32.mrf.mxu0
        %2805 = vdwg.mxu0
        %v2806 = vadd.f32 %v2798, %v2613
        %v2807 = vadd.f32 %v2803, %v2614
        %v2808 = vsel %vm875, %v2806, 0.0
        %2809 = vadd.xlane.f32.xlu0 %v2808
        %v2810 = vpop.xlane.xlu0 %2809
        %v2811 = vsel %vm875, %v2807, 0.0
        %2812 = vadd.xlane.f32.xlu0 %v2811
        %v2813 = vpop.xlane.xlu0 %2812
        %v2814 = vmul.f32 %v2810, %v2576
        %v2815 = vmul.f32 %v2813, %v2576
        %v2816 = vsub.f32 %v2806, %v2814
        %v2817 = vsub.f32 %v2807, %v2815
        %v2818 = vmul.f32 %v2816, %v2816
        %v2819 = vmul.f32 %v2817, %v2817
        %v2820 = vsel %vm875, %v2818, 0.0
        %2821 = vadd.xlane.f32.xlu0 %v2820
        %v2822 = vpop.xlane.xlu0 %2821
        %v2823 = vsel %vm875, %v2819, 0.0
        %2824 = vadd.xlane.f32.xlu0 %v2823
        %v2825 = vpop.xlane.xlu0 %2824
        %v2826 = vmul.f32 %v2822, %v2576
        %v2827 = vmul.f32 %v2825, %v2576
        %v2828 = vadd.f32 %v2826, 1e-05
        %v2829 = vadd.f32 %v2827, 1e-05
        %v2830 = vrsqrt.pop %v2828
        %v2831 = vrsqrt.pop %v2829
        %v2832 = vmul.f32 %v2816, %v2830
        %v2833 = vmul.f32 %v2817, %v2831
        %v2834 = vld [vmem:[%s849] sm:$0x1]
        %v2836 = vlaneseq
        %v2837 = vshrl.u32 %v2836, 7
        %v2838 = vsub.s32 0, %v2837
        %v2839 = vrot.slane %v2834, %v2838
        %v2841 = vmul.f32 %v2832, %v2839
        %v2842 = vmul.f32 %v2833, %v2839
        %v2843 = vld [vmem:[%s852] sm:$0x1]
        %v2845 = vlaneseq
        %v2846 = vshrl.u32 %v2845, 7
        %v2847 = vsub.s32 0, %v2846
        %v2848 = vrot.slane %v2843, %v2847
        %v2850 = vadd.f32 %v2841, %v2848
        %v2851 = vadd.f32 %v2842, %v2848
        %2852 = vst.msk [vmem:[#allocation2] sm:$0xff] %vm875, %v2850
        %2853 = vst.msk [vmem:[#allocation2 + $0x8] sm:$0xff] %vm875, %v2851
        %p2854 = scmp.eq.s32.totalorder %s38, 1
        // Predicated region
        $region105: #{tpu_custom_call.1} parent=87 // pred_check
          %p2855 = pneg %p2854
        $region106: #{tpu_custom_call.1} parent=87 // pred_check_branch
          %2857 = sbr.rel (%p2855) target = $region108
        $region107: #{tpu_custom_call.1} parent=87 // pred_region
          %v2858 = vsel %vm875, %v2850, 0.0
          %v2859 = vrot.slane %v2858, 4
          %v2860 = vadd.f32 %v2858, %v2859
          %v2861 = vrot.slane %v2860, 2
          %v2862 = vadd.f32 %v2860, %v2861
          %v2863 = vrot.slane %v2862, 1
          %v2864 = vadd.f32 %v2862, %v2863
          %v2865 = vsel %vm875, %v2851, 0.0
          %v2866 = vrot.slane %v2865, 4
          %v2867 = vadd.f32 %v2865, %v2866
          %v2868 = vrot.slane %v2867, 2
          %v2869 = vadd.f32 %v2867, %v2868
          %v2870 = vrot.slane %v2869, 1
          %v2871 = vadd.f32 %v2869, %v2870
          %v2872 = vrcp.pop 8.0
          %v2873 = vmul.f32 %v2864, %v2872
          %v2874 = vmul.f32 %v2871, %v2872
          %vm2877 = vcmask 1041409
          %v2878 = vsel %vm2877, %v2874, %v2873
          %vm2880 = vcmask 254976
          %2881 = vst.msk [vmem:[#allocation9] sm:$0x3] %vm2880, %v2878
        $region108: #{tpu_custom_call.1} parent=87 // pred_fallthru
          _
        // Predicated region
        $region109: #{tpu_custom_call.1} parent=87 // pred_check
          %p2882 = pneg %p505
        $region110: #{tpu_custom_call.1} parent=87 // pred_check_branch
          %2884 = sbr.rel (%p2882) target = $region112
        $region111: #{tpu_custom_call.1} parent=87 // pred_region
          %s2886 = ssub.s32 32, 32
          %2887 = vsyncadd [#allocation5], %s2886
          %s2888 = smul.addr %s37, 32
          %s2889 = scalar_lea.hbm %s17, %s2888
          %s2891 = sshll.u32 [#allocation9], 4
          %s2892 = int_to_ptr.vmem [resolvable:$true] %s2891
          %2894 = dma.vmem_to_hbm [thread:$0]  %s2892, 32, %s2889, [#allocation5]
        $region112: #{tpu_custom_call.1} parent=87 // pred_fallthru
          _
        // Predicated region
        $region113: #{tpu_custom_call.1} parent=87 // pred_check
          %p2895 = pneg %p505
        $region114: #{tpu_custom_call.1} parent=87 // pred_check_branch
          %2897 = sbr.rel (%p2895) target = $region116
        $region115: #{tpu_custom_call.1} parent=87 // pred_region
          %2898 = dma.done [#allocation5], 32
        $region116: #{tpu_custom_call.1} parent=87 // pred_fallthru
          _
      $region88: #{tpu_custom_call.1} parent=5 // pred_fallthru
        _
      %p2899 = scmp.le.s32.totalorder 2, %s28
      // Predicated region
      $region117: #{tpu_custom_call.1} parent=5 // pred_check
        %p2900 = pneg %p2899
      $region118: #{tpu_custom_call.1} parent=5 // pred_check_branch
        %2902 = sbr.rel (%p2900) target = $region120
      $region119: #{tpu_custom_call.1} parent=5 // pred_region
        %s2903 = ssub.s32 %s28, 2
      $region120: #{tpu_custom_call.1} parent=5 // pred_fallthru
        _
    $region6: #{tpu_custom_call.1} parent=1 // loop_footer
      %s32 = sadd.s32 1, %s28
    $region7: #{tpu_custom_call.1} parent=1 // loop_footer_branch
      %27 = sbr.rel target = $region3
    $region8: #{tpu_custom_call.1} parent=1 // loop_exit
      _
    %2904 = vsyncpa [#allocation4], 1
    %s2905 = scalar_lea.sflag [#allocation4], 1
    %2906 = vsyncpa %s2905, 1
    %2907 = vsyncpa [#allocation7], 1
    %s2908 = scalar_lea.sflag [#allocation7], 1
    %2909 = vsyncpa %s2908, 1
    %2910 = vsyncpa [#allocation5], 1
    %s2911 = scalar_lea.sflag [#allocation5], 1
    %2912 = vsyncpa %s2911, 1

</llo_original>
